<compile_context>
chip_gen: v5e
topology: v5e:2x2
jax: 0.10.0
libtpu: 0.0.40
codegen_flags: <defaults>
</compile_context>

<pallas_src>
import functools

import jax
import jax.numpy as jnp
from jax.experimental import pallas as pl
from jax.experimental.pallas import tpu as pltpu

# Module constants from the PyTorch spec.
RDC_TEXT_DIM = 1000
H_DIM = 4086
Y_DIM = 150

_LANE = 128


def _round_up(x, m):
    return (x + m - 1) // m * m


def _netd2_kernel(x_ref, w1_ref, b1_ref, w2_ref, b2_ref, out_ref):
    # x_ref  : (bm, in_p) f32        activation tile (resident across k)
    # w1_ref : (in_p, h_tile) bf16   streamed slice of the shared-layer weight
    # b1_ref : (1, h_tile) f32
    # w2_ref : (h_tile, out_w) bf16  streamed slice of fused [gan|aux] weight
    # b2_ref : (1, out_w) f32
    # out_ref: (bm, out_w) f32       lane-dense fused output, used as the
    #                                accumulator (same block for every k)
    k = pl.program_id(1)

    @pl.when(k == 0)
    def _():
        out_ref[...] = jnp.zeros_like(out_ref)

    # Shared layer slice: bf16 x bf16 MXU with f32 accumulation.
    h = jnp.dot(x_ref[...].astype(w1_ref.dtype), w1_ref[...],
                preferred_element_type=jnp.float32)
    # Bias + ReLU in f32 on the VPU.
    h = jnp.maximum(h + b1_ref[...], 0.0)

    # Fused heads: accumulate (bm, h_tile) @ (h_tile, out_w) into the output.
    out_ref[...] += jnp.dot(h.astype(w2_ref.dtype), w2_ref[...],
                            preferred_element_type=jnp.float32)

    @pl.when(k == pl.num_programs(1) - 1)
    def _():
        out_ref[...] += b2_ref[...]


def init_params(key, in_dim=RDC_TEXT_DIM, hidden=H_DIM, y_dim=Y_DIM,
                dtype=jnp.float32):
    """PyTorch-style init (uniform +-1/sqrt(fan_in)); weights stored (in, out)."""
    ks = jax.random.split(key, 6)
    bound1 = 1.0 / (in_dim ** 0.5)
    bound2 = 1.0 / (hidden ** 0.5)
    return dict(
        w1=jax.random.uniform(ks[0], (in_dim, hidden), dtype, -bound1, bound1),
        b1=jax.random.uniform(ks[1], (hidden,), dtype, -bound1, bound1),
        w_gan=jax.random.uniform(ks[2], (hidden, 1), dtype, -bound2, bound2),
        b_gan=jax.random.uniform(ks[3], (1,), dtype, -bound2, bound2),
        w_aux=jax.random.uniform(ks[4], (hidden, y_dim), dtype, -bound2, bound2),
        b_aux=jax.random.uniform(ks[5], (y_dim,), dtype, -bound2, bound2),
    )


def prepare_kernel_params(params, h_tile=1024, weight_dtype=jnp.bfloat16):
    """One-time layout prep:
       * pad in_dim 1000 -> 1024 (aligned vregs / MXU K feed),
       * pad hidden to a multiple of h_tile,
       * fuse the gan/aux heads into a single lane-dense (hidden_p, 256) matrix,
       * store the big weights in `weight_dtype` (bf16 by default); biases f32.
    All padding is zeros, so the math is unchanged (modulo the bf16 cast)."""
    w1, b1 = params["w1"], params["b1"]
    w_gan, b_gan = params["w_gan"], params["b_gan"]
    w_aux, b_aux = params["w_aux"], params["b_aux"]
    in_dim, hidden = w1.shape
    y_dim = w_aux.shape[1]

    in_p = _round_up(in_dim, _LANE)
    hidden_p = _round_up(hidden, h_tile)
    out_w = _round_up(1 + y_dim, _LANE)

    w1_p = jnp.zeros((in_p, hidden_p), weight_dtype)
    w1_p = w1_p.at[:in_dim, :hidden].set(w1.astype(weight_dtype))
    b1_p = jnp.zeros((1, hidden_p), jnp.float32).at[0, :hidden].set(
        b1.astype(jnp.float32))

    w2 = jnp.concatenate([w_gan, w_aux], axis=1)          # (hidden, 1 + y_dim)
    b2 = jnp.concatenate([b_gan, b_aux], axis=0)          # (1 + y_dim,)
    w2_p = jnp.zeros((hidden_p, out_w), weight_dtype)
    w2_p = w2_p.at[:hidden, :1 + y_dim].set(w2.astype(weight_dtype))
    b2_p = jnp.zeros((1, out_w), jnp.float32).at[0, :1 + y_dim].set(
        b2.astype(jnp.float32))

    return dict(w1=w1_p, b1=b1_p, w2=w2_p, b2=b2_p)


def netd2_forward(rdc_text, kparams, *, y_dim=Y_DIM, h_tile=1024, bm_max=512):
    """Pallas implementation of _netD2.forward(rdc_text) -> (gan, aux)."""
    w1, b1, w2, b2 = kparams["w1"], kparams["b1"], kparams["w2"], kparams["b2"]
    B, in_dim = rdc_text.shape
    in_p = w1.shape[0]
    hidden_p = w1.shape[1]
    out_w = w2.shape[1]
    assert hidden_p % h_tile == 0, "h_tile must divide the padded hidden dim"

    # Batch tiling: pick a tile so awkward batch sizes pad minimally and large
    # batches keep nb (and hence weight re-streaming) small.
    nb_guess = max(1, pl.cdiv(B, bm_max))
    bm = _round_up(pl.cdiv(B, nb_guess), 8)
    nb = pl.cdiv(B, bm)
    b_pad = nb * bm

    # Zero-pad the activation tile to (b_pad, in_p); padded rows/cols contribute
    # exactly zero and are sliced off below.
    x = rdc_text.astype(jnp.float32)
    if b_pad != B or in_p != in_dim:
        x = jnp.pad(x, ((0, b_pad - B), (0, in_p - in_dim)))

    nk = hidden_p // h_tile

    flops = 2 * b_pad * (in_p * hidden_p + hidden_p * out_w)
    bytes_accessed = (
        b_pad * in_p * x.dtype.itemsize
        + nb * (w1.size * w1.dtype.itemsize + b1.size * b1.dtype.itemsize
                + w2.size * w2.dtype.itemsize + b2.size * b2.dtype.itemsize)
        + b_pad * out_w * 4
    )

    out = pl.pallas_call(
        _netd2_kernel,
        out_shape=jax.ShapeDtypeStruct((b_pad, out_w), jnp.float32),
        grid_spec=pltpu.PrefetchScalarGridSpec(
            num_scalar_prefetch=0,
            grid=(nb, nk),
            in_specs=[
                pl.BlockSpec((bm, in_p), lambda i, k: (i, 0)),        # activations
                pl.BlockSpec((in_p, h_tile), lambda i, k: (0, k)),    # W1 slice
                pl.BlockSpec((1, h_tile), lambda i, k: (0, k)),       # b1 slice
                pl.BlockSpec((h_tile, out_w), lambda i, k: (k, 0)),   # fused head W
                pl.BlockSpec((1, out_w), lambda i, k: (0, 0)),        # fused head b
            ],
            out_specs=pl.BlockSpec((bm, out_w), lambda i, k: (i, 0)),
        ),
        compiler_params=pltpu.CompilerParams(
            dimension_semantics=("parallel", "arbitrary"),
        ),
        cost_estimate=pl.CostEstimate(
            flops=flops, transcendentals=0, bytes_accessed=bytes_accessed
        ),
    )(x, w1, b1, w2, b2)

    gan = out[:B, :1].astype(rdc_text.dtype)
    aux = out[:B, 1:1 + y_dim].astype(rdc_text.dtype)
    return gan, aux


def reference_forward(rdc_text, params):
    h = jnp.maximum(rdc_text @ params["w1"] + params["b1"], 0.0)
    gan = h @ params["w_gan"] + params["b_gan"]
    aux = h @ params["w_aux"] + params["b_aux"]
    return gan, aux


if __name__ == "__main__":
    # Small batch, real module dims (1000 -> 4086 -> {1, 150}).
    B = 4
    key = jax.random.PRNGKey(0)
    k_x, k_p = jax.random.split(key)
    rdc_text = jax.random.normal(k_x, (B, RDC_TEXT_DIM), jnp.float32)

    params = init_params(k_p)
    kparams = prepare_kernel_params(params, h_tile=1024)

    run = jax.jit(functools.partial(netd2_forward, y_dim=Y_DIM, h_tile=1024))
    gan, aux = run(rdc_text, kparams)
    jax.block_until_ready((gan, aux))

    # f32 reference; the kernel stores weights in bf16 (deliberate numerics
    # change per the perf review), so tolerances are loosened slightly.
    gan_ref, aux_ref = reference_forward(rdc_text, params)
    assert gan.shape == (B, 1) and aux.shape == (B, Y_DIM)
    assert jnp.allclose(gan, gan_ref, atol=2e-2, rtol=2e-2), "gan head mismatch"
    assert jnp.allclose(aux, aux_ref, atol=2e-2, rtol=2e-2), "aux head mismatch"

    print("KERNEL_OK")
</pallas_src>

<mosaic_0001>
module attributes {stable_mosaic.version = 11 : i64} {
  func.func @_netd2_kernel(%arg0: i32, %arg1: i32, %arg2: memref<8x1024xf32, #tpu.memory_space<vmem>>, %arg3: memref<1024x1024xbf16, #tpu.memory_space<vmem>>, %arg4: memref<1x1024xf32, #tpu.memory_space<vmem>>, %arg5: memref<1024x256xbf16, #tpu.memory_space<vmem>>, %arg6: memref<1x256xf32, #tpu.memory_space<vmem>>, %arg7: memref<8x256xf32, #tpu.memory_space<vmem>>) attributes {dimension_semantics = [#tpu.dimension_semantics<parallel>, #tpu.dimension_semantics<arbitrary>], iteration_bounds = array<i64: 1, 4>, scalar_prefetch = 0 : i64, scratch_operands = 0 : i64, tpu.core_type = #tpu.core_type<tc>, window_params = [{transform_indices = @transform_0, window_bounds = array<i64: 8, 1024>}, {transform_indices = @transform_1, window_bounds = array<i64: 1024, 1024>}, {transform_indices = @transform_2, window_bounds = array<i64: 1, 1024>}, {transform_indices = @transform_3, window_bounds = array<i64: 1024, 256>}, {pipeline_mode = #tpu.pipeline_mode<synchronous>, transform_indices = @transform_4, window_bounds = array<i64: 1, 256>}, {transform_indices = @transform_5, window_bounds = array<i64: 8, 256>}]} {
    %c0_i32 = arith.constant 0 : i32
    %0 = arith.cmpi eq, %arg1, %c0_i32 : i32
    %1 = arith.extui %0 : i1 to i32
    %c0_i32_0 = arith.constant 0 : i32
    %2 = arith.cmpi ne, %1, %c0_i32_0 : i32
    scf.if %2 {
      %cst_15 = arith.constant 0.000000e+00 : f32
      %21 = vector.broadcast %cst_15 : f32 to vector<8x256xf32>
      %c0_16 = arith.constant 0 : index
      %c0_17 = arith.constant 0 : index
      %22 = vector.load %arg7[%c0_16, %c0_17] : memref<8x256xf32, #tpu.memory_space<vmem>>, vector<8x256xf32>
      tpu.vector_store %arg7[%c0_16, %c0_17], %21 {strides = array<i32>} : memref<8x256xf32, #tpu.memory_space<vmem>>, vector<8x256xf32>,
    } else {
    }
    %c0 = arith.constant 0 : index
    %c0_1 = arith.constant 0 : index
    %3 = vector.load %arg2[%c0, %c0_1] : memref<8x1024xf32, #tpu.memory_space<vmem>>, vector<8x1024xf32>
    %4 = arith.truncf %3 : vector<8x1024xf32> to vector<8x1024xbf16>
    %c0_2 = arith.constant 0 : index
    %c0_3 = arith.constant 0 : index
    %5 = vector.load %arg3[%c0_2, %c0_3] : memref<1024x1024xbf16, #tpu.memory_space<vmem>>, vector<1024x1024xbf16>
    %cst = arith.constant dense<0.000000e+00> : vector<8x1024xf32>
    %6 = tpu.matmul %4, %5, %cst {dimension_numbers = #tpu.dot_dimension_numbers<[1], [0], [0], [1], [0, 0, 1, 1], [], []>} : vector<8x1024xbf16>, vector<1024x1024xbf16>, vector<8x1024xf32> -> vector<8x1024xf32>
    %c0_4 = arith.constant 0 : index
    %c0_5 = arith.constant 0 : index
    %7 = vector.load %arg4[%c0_4, %c0_5] : memref<1x1024xf32, #tpu.memory_space<vmem>>, vector<1x1024xf32>
    %8 = vector.broadcast %7 : vector<1x1024xf32> to vector<8x1024xf32>
    %9 = arith.addf %6, %8 : vector<8x1024xf32>
    %cst_6 = arith.constant 0.000000e+00 : f32
    %10 = vector.broadcast %cst_6 : f32 to vector<8x1024xf32>
    %11 = arith.maximumf %9, %10 : vector<8x1024xf32>
    %c0_7 = arith.constant 0 : index
    %c0_8 = arith.constant 0 : index
    %12 = vector.load %arg7[%c0_7, %c0_8] : memref<8x256xf32, #tpu.memory_space<vmem>>, vector<8x256xf32>
    %13 = arith.truncf %11 : vector<8x1024xf32> to vector<8x1024xbf16>
    %c0_9 = arith.constant 0 : index
    %c0_10 = arith.constant 0 : index
    %14 = vector.load %arg5[%c0_9, %c0_10] : memref<1024x256xbf16, #tpu.memory_space<vmem>>, vector<1024x256xbf16>
    %cst_11 = arith.constant dense<0.000000e+00> : vector<8x256xf32>
    %15 = tpu.matmul %13, %14, %cst_11 {dimension_numbers = #tpu.dot_dimension_numbers<[1], [0], [0], [1], [0, 0, 1, 1], [], []>} : vector<8x1024xbf16>, vector<1024x256xbf16>, vector<8x256xf32> -> vector<8x256xf32>
    %16 = arith.addf %12, %15 : vector<8x256xf32>
    %c0_12 = arith.constant 0 : index
    %c0_13 = arith.constant 0 : index
    %17 = vector.load %arg7[%c0_12, %c0_13] : memref<8x256xf32, #tpu.memory_space<vmem>>, vector<8x256xf32>
    tpu.vector_store %arg7[%c0_12, %c0_13], %16 {strides = array<i32>} : memref<8x256xf32, #tpu.memory_space<vmem>>, vector<8x256xf32>,
    %c3_i32 = arith.constant 3 : i32
    %18 = arith.cmpi eq, %arg1, %c3_i32 : i32
    %19 = arith.extui %18 : i1 to i32
    %c0_i32_14 = arith.constant 0 : i32
    %20 = arith.cmpi ne, %19, %c0_i32_14 : i32
    scf.if %20 {
      %c0_15 = arith.constant 0 : index
      %c0_16 = arith.constant 0 : index
      %21 = vector.load %arg7[%c0_15, %c0_16] : memref<8x256xf32, #tpu.memory_space<vmem>>, vector<8x256xf32>
      %c0_17 = arith.constant 0 : index
      %c0_18 = arith.constant 0 : index
      %22 = vector.load %arg6[%c0_17, %c0_18] : memref<1x256xf32, #tpu.memory_space<vmem>>, vector<1x256xf32>
      %23 = vector.broadcast %22 : vector<1x256xf32> to vector<8x256xf32>
      %24 = arith.addf %21, %23 : vector<8x256xf32>
      %c0_19 = arith.constant 0 : index
      %c0_20 = arith.constant 0 : index
      %25 = vector.load %arg7[%c0_19, %c0_20] : memref<8x256xf32, #tpu.memory_space<vmem>>, vector<8x256xf32>
      tpu.vector_store %arg7[%c0_19, %c0_20], %24 {strides = array<i32>} : memref<8x256xf32, #tpu.memory_space<vmem>>, vector<8x256xf32>,
    } else {
    }
    return
  }
  func.func @transform_0(%arg0: i32, %arg1: i32) -> (i32, i32) {
    %c0_i32 = arith.constant 0 : i32
    %c0_i32_0 = arith.constant 0 : i32
    return %arg0, %c0_i32 : i32, i32
  }
  func.func @transform_1(%arg0: i32, %arg1: i32) -> (i32, i32) {
    %c0_i32 = arith.constant 0 : i32
    %c0_i32_0 = arith.constant 0 : i32
    return %c0_i32, %arg1 : i32, i32
  }
  func.func @transform_2(%arg0: i32, %arg1: i32) -> (i32, i32) {
    %c0_i32 = arith.constant 0 : i32
    %c0_i32_0 = arith.constant 0 : i32
    return %c0_i32, %arg1 : i32, i32
  }
  func.func @transform_3(%arg0: i32, %arg1: i32) -> (i32, i32) {
    %c0_i32 = arith.constant 0 : i32
    %c0_i32_0 = arith.constant 0 : i32
    return %arg1, %c0_i32 : i32, i32
  }
  func.func @transform_4(%arg0: i32, %arg1: i32) -> (i32, i32) {
    %c0_i32 = arith.constant 0 : i32
    %c0_i32_0 = arith.constant 0 : i32
    %c0_i32_1 = arith.constant 0 : i32
    return %c0_i32, %c0_i32_0 : i32, i32
  }
  func.func @transform_5(%arg0: i32, %arg1: i32) -> (i32, i32) {
    %c0_i32 = arith.constant 0 : i32
    %c0_i32_0 = arith.constant 0 : i32
    return %arg0, %c0_i32 : i32, i32
  }
}

</mosaic_0001>

<llo_original>
// kernel: netd2_forward.1
$region0: #{netd2_forward.1}
  #allocation0 [shape = 'u32[]', space=smem, size = 0x4, offset = 0x4, fixed_abs, tag = 'smem constant byte address 0x4 - core index']
  #allocation1 [shape = 'u32[72,128]{1,0:T(1,128)}', space=vmem, size = 0x9000, scoped, tag = 'internal scratch']
  %s0 = inlined_call_operand.vmem [shape: f32[8,1024], index: 0, kind: input, shape index: {}]
  %s1 = inlined_call_operand.hbm [shape: bf16[1024,4096], index: 1, kind: input, shape index: {}]
  %s2 = inlined_call_operand.hbm [shape: f32[1,4096], index: 2, kind: input, shape index: {}]
  %s3 = inlined_call_operand.hbm [shape: bf16[4096,256], index: 3, kind: input, shape index: {}]
  %s4 = inlined_call_operand.hbm [shape: f32[1,256], index: 4, kind: input, shape index: {}]
  %s5 = inlined_call_operand.vmem [shape: f32[8,256], index: 5, kind: output, shape index: {}]
  %s6 = sld [smem:[#allocation0]]
  $region77: #{netd2_forward.1} parent=0
    _
  %s8 = ssub.s32 1, %s6
  %s9 = scalar_select 0, %s8, %s6
  $region1: #{netd2_forward.1} parent=0
    #allocation2 [shape = 'u8[4194304]{0}', space=vmem, size = 0x400000, scoped, tag = 'input window, operand 1']
    #allocation3 [shape = 's32[2]{0}', space=sflag, size = 0x8, scoped, tag = 'scoped memory for netd2_forward.1']
    #allocation4 [shape = 'u8[8192]{0}', space=vmem, size = 0x2000, scoped, tag = 'input window, operand 2']
    #allocation5 [shape = 's32[2]{0}', space=sflag, size = 0x8, scoped, tag = 'scoped memory for netd2_forward.1']
    #allocation6 [shape = 'u8[1048576]{0}', space=vmem, size = 0x100000, scoped, tag = 'input window, operand 3']
    #allocation7 [shape = 'u8[1024]{0}', space=vmem, size = 0x400, scoped, tag = 'input window, operand 4, single buffered']
    #allocation8 [shape = 's32[1]{0}', space=sflag, size = 0x4, scoped, tag = 'scoped memory for netd2_forward.1']
    %10 = vsyncpa [#allocation3], 0
    %s11 = scalar_lea.sflag [#allocation3], 1
    %12 = vsyncpa %s11, 0
    %13 = vsyncpa [#allocation5], 0
    %s14 = scalar_lea.sflag [#allocation5], 1
    %15 = vsyncpa %s14, 0
    %16 = vsyncpa [#allocation8], 0
    loop: start=0, step=1, limit=6
    $region2: #{netd2_forward.1} parent=1 // loop_pre_header
      _
    $region3: #{netd2_forward.1} parent=1 // loop_header
      %s18 = sphi 0, %s22
      %p19 = scmp.ge.s32.totalorder %s18, 6
      %s25 = sphi 0, %s37
      %s26 = sphi 0, %s33
      %s27 = sphi 0, %s25
      %s28 = sphi 0, %s26
      %s29 = sphi 0, %s27
      %s30 = sphi 0, %s28
      %s40 = sphi 0, %s42
      %s43 = sphi 0, %s40
      %s44 = sphi 0, %s43
      %s60 = sphi 0, %s44
      %s66 = sphi 0, %s68
      %s69 = sphi 0, %s66
      %s70 = sphi 0, %s69
      %s86 = sphi 0, %s70
      %s92 = sphi 0, %s94
      %s95 = sphi 0, %s92
      %s96 = sphi 0, %s95
      %s112 = sphi 0, %s96
      %s118 = sphi 0, %s120
      %s121 = sphi 0, %s118
      %s122 = sphi 0, %s121
      %s138 = sphi 0, %s122
      %s142 = sphi 0, %s142
      %s144 = sphi 0, %s142
      %s145 = sphi 0, %s144
      %s159 = sphi 0, %s145
      %s165 = sphi 0, %s167
      %s168 = sphi 0, %s165
      %s169 = sphi 0, %s168
      %s185 = sphi 0, %s169
    $region4: #{netd2_forward.1} parent=1 // loop_header_branch
      %21 = sbr.rel (%p19) target = $region8
    $region5: #{netd2_forward.1} parent=1 // loop_body
      %s23 = ssub.s32 %s18, 1
      %s24 = ssub.s32 %s18, 2
      %s31 = sadd.s32 1, %s26
      %p32 = scmp.ge.s32.totalorder %s31, 4
      %s33 = scalar_select %p32, 0, %s31
      %s34 = sadd.s32 1, %s25
      %s35 = scalar_select %p32, %s34, %s25
      %p36 = scmp.ge.s32.totalorder %s35, 1
      %s37 = scalar_select %p36, 0, %s35
      %s38 = ssub.s32 %s25, %s37
      %p39 = scmp.eq.s32.totalorder %s38, 0
      %s41 = sadd.s32 %s40, 1
      %s42 = scalar_select %p39, %s40, %s41
      %p45 = pneg %p39
      %p46 = scmp.eq.s32.totalorder %s18, 3
      %p47 = por %p45, %p46
      %p48 = scmp.ne.s32.totalorder %s40, %s43
      %p49 = scmp.eq.s32.totalorder %s18, 0
      %p50 = por %p48, %p49
      %p51 = scmp.ne.s32.totalorder %s40, %s43
      %p52 = scmp.eq.s32.totalorder %s23, 3
      %p53 = por %p51, %p52
      %p54 = scmp.ne.s32.totalorder %s43, %s44
      %p55 = scmp.eq.s32.totalorder %s23, 0
      %p56 = por %p54, %p55
      %p57 = scmp.ne.s32.totalorder %s43, %s44
      %p58 = scmp.eq.s32.totalorder %s24, 3
      %p59 = por %p57, %p58
      %p61 = scmp.ne.s32.totalorder %s44, %s60
      %p62 = scmp.eq.s32.totalorder %s24, 0
      %p63 = por %p61, %p62
      %s64 = ssub.s32 %s26, %s33
      %p65 = scmp.eq.s32.totalorder %s64, 0
      %s67 = sadd.s32 %s66, 1
      %s68 = scalar_select %p65, %s66, %s67
      %p71 = pneg %p65
      %p72 = scmp.eq.s32.totalorder %s18, 3
      %p73 = por %p71, %p72
      %p74 = scmp.ne.s32.totalorder %s66, %s69
      %p75 = scmp.eq.s32.totalorder %s18, 0
      %p76 = por %p74, %p75
      %p77 = scmp.ne.s32.totalorder %s66, %s69
      %p78 = scmp.eq.s32.totalorder %s23, 3
      %p79 = por %p77, %p78
      %p80 = scmp.ne.s32.totalorder %s69, %s70
      %p81 = scmp.eq.s32.totalorder %s23, 0
      %p82 = por %p80, %p81
      %p83 = scmp.ne.s32.totalorder %s69, %s70
      %p84 = scmp.eq.s32.totalorder %s24, 3
      %p85 = por %p83, %p84
      %p87 = scmp.ne.s32.totalorder %s70, %s86
      %p88 = scmp.eq.s32.totalorder %s24, 0
      %p89 = por %p87, %p88
      %s90 = ssub.s32 %s26, %s33
      %p91 = scmp.eq.s32.totalorder %s90, 0
      %s93 = sadd.s32 %s92, 1
      %s94 = scalar_select %p91, %s92, %s93
      %p97 = pneg %p91
      %p98 = scmp.eq.s32.totalorder %s18, 3
      %p99 = por %p97, %p98
      %p100 = scmp.ne.s32.totalorder %s92, %s95
      %p101 = scmp.eq.s32.totalorder %s18, 0
      %p102 = por %p100, %p101
      %p103 = scmp.ne.s32.totalorder %s92, %s95
      %p104 = scmp.eq.s32.totalorder %s23, 3
      %p105 = por %p103, %p104
      %p106 = scmp.ne.s32.totalorder %s95, %s96
      %p107 = scmp.eq.s32.totalorder %s23, 0
      %p108 = por %p106, %p107
      %p109 = scmp.ne.s32.totalorder %s95, %s96
      %p110 = scmp.eq.s32.totalorder %s24, 3
      %p111 = por %p109, %p110
      %p113 = scmp.ne.s32.totalorder %s96, %s112
      %p114 = scmp.eq.s32.totalorder %s24, 0
      %p115 = por %p113, %p114
      %s116 = ssub.s32 %s26, %s33
      %p117 = scmp.eq.s32.totalorder %s116, 0
      %s119 = sadd.s32 %s118, 1
      %s120 = scalar_select %p117, %s118, %s119
      %p123 = pneg %p117
      %p124 = scmp.eq.s32.totalorder %s18, 3
      %p125 = por %p123, %p124
      %p126 = scmp.ne.s32.totalorder %s118, %s121
      %p127 = scmp.eq.s32.totalorder %s18, 0
      %p128 = por %p126, %p127
      %p129 = scmp.ne.s32.totalorder %s118, %s121
      %p130 = scmp.eq.s32.totalorder %s23, 3
      %p131 = por %p129, %p130
      %p132 = scmp.ne.s32.totalorder %s121, %s122
      %p133 = scmp.eq.s32.totalorder %s23, 0
      %p134 = por %p132, %p133
      %p135 = scmp.ne.s32.totalorder %s121, %s122
      %p136 = scmp.eq.s32.totalorder %s24, 3
      %p137 = por %p135, %p136
      %p139 = scmp.ne.s32.totalorder %s122, %s138
      %p140 = scmp.eq.s32.totalorder %s24, 0
      %p141 = por %p139, %p140
      %s143 = sadd.s32 %s142, 1
      %p146 = scmp.eq.s32.totalorder %s18, 3
      %p147 = scmp.ne.s32.totalorder %s142, %s144
      %p148 = scmp.eq.s32.totalorder %s18, 0
      %p149 = por %p147, %p148
      %p150 = scmp.ne.s32.totalorder %s142, %s144
      %p151 = scmp.eq.s32.totalorder %s23, 3
      %p152 = por %p150, %p151
      %p153 = scmp.ne.s32.totalorder %s144, %s145
      %p154 = scmp.eq.s32.totalorder %s23, 0
      %p155 = por %p153, %p154
      %p156 = scmp.ne.s32.totalorder %s144, %s145
      %p157 = scmp.eq.s32.totalorder %s24, 3
      %p158 = por %p156, %p157
      %p160 = scmp.ne.s32.totalorder %s145, %s159
      %p161 = scmp.eq.s32.totalorder %s24, 0
      %p162 = por %p160, %p161
      %s163 = ssub.s32 %s25, %s37
      %p164 = scmp.eq.s32.totalorder %s163, 0
      %s166 = sadd.s32 %s165, 1
      %s167 = scalar_select %p164, %s165, %s166
      %p170 = pneg %p164
      %p171 = scmp.eq.s32.totalorder %s18, 3
      %p172 = por %p170, %p171
      %p173 = scmp.ne.s32.totalorder %s165, %s168
      %p174 = scmp.eq.s32.totalorder %s18, 0
      %p175 = por %p173, %p174
      %p176 = scmp.ne.s32.totalorder %s165, %s168
      %p177 = scmp.eq.s32.totalorder %s23, 3
      %p178 = por %p176, %p177
      %p179 = scmp.ne.s32.totalorder %s168, %s169
      %p180 = scmp.eq.s32.totalorder %s23, 0
      %p181 = por %p179, %p180
      %p182 = scmp.ne.s32.totalorder %s168, %s169
      %p183 = scmp.eq.s32.totalorder %s24, 3
      %p184 = por %p182, %p183
      %p186 = scmp.ne.s32.totalorder %s169, %s185
      %p187 = scmp.eq.s32.totalorder %s24, 0
      %p188 = por %p186, %p187
      %p189 = scmp.le.s32.totalorder 1, %s18
      %p190 = scmp.lt.s32.totalorder %s18, 5
      %p191 = pnand %p189, %p190
      %p192 = pneg %p191
      // Predicated region
      $region9: #{netd2_forward.1} parent=5 // pred_check
        _
      $region10: #{netd2_forward.1} parent=5 // pred_check_branch
        %194 = sbr.rel (%p191) target = $region12
      $region11: #{netd2_forward.1} parent=5 // pred_region
        %s195 = ssub.s32 %s18, 1
        // Predicated region
        $region13: #{netd2_forward.1} parent=11 // pred_check
          %p196 = pneg %p56
        $region14: #{netd2_forward.1} parent=11 // pred_check_branch
          %198 = sbr.rel (%p196) target = $region16
        $region15: #{netd2_forward.1} parent=11 // pred_region
          %p199 = scmp.lt.s32.totalorder %s27, 0
          %s200 = scalar_select %p199, %s27, 0
          %s201 = smul.addr %s200, 8
          %s202 = smul.addr %s201, 8
          %s203 = scalar_lea.vmem %s0, %s202
        $region16: #{netd2_forward.1} parent=11 // pred_fallthru
          _
        // Predicated region
        $region17: #{netd2_forward.1} parent=11 // pred_check
          %p204 = pneg %p155
        $region18: #{netd2_forward.1} parent=11 // pred_check_branch
          %206 = sbr.rel (%p204) target = $region20
        $region19: #{netd2_forward.1} parent=11 // pred_region
          %208 = vsyncadd [#allocation8], 0
          %s210 = sshll.u32 %s4, 4
          %s211 = int_to_ptr.hbm [resolvable:$true] %s210
          %s212 = sshll.u32 [#allocation7], 4
          %s213 = int_to_ptr.vmem [resolvable:$true] %s212
          %215 = dma.hbm_to_vmem [thread:$0]  %s211, 32, %s213, [#allocation8]
        $region20: #{netd2_forward.1} parent=11 // pred_fallthru
          _
      $region12: #{netd2_forward.1} parent=5 // pred_fallthru
        _
      %p216 = scmp.lt.s32.totalorder %s18, 4
      // Predicated region
      $region21: #{netd2_forward.1} parent=5 // pred_check
        %p217 = pneg %p216
      $region22: #{netd2_forward.1} parent=5 // pred_check_branch
        %219 = sbr.rel (%p217) target = $region24
      $region23: #{netd2_forward.1} parent=5 // pred_region
        // Predicated region
        $region25: #{netd2_forward.1} parent=23 // pred_check
          %p220 = pneg %p76
        $region26: #{netd2_forward.1} parent=23 // pred_check_branch
          %222 = sbr.rel (%p220) target = $region28
        $region27: #{netd2_forward.1} parent=23 // pred_region
          %s223 = sand.u32 %s66, 1
          %s224 = scalar_lea.sflag [#allocation3], %s223
          %s225 = sand.u32 %s66, 1
          %s226 = smul.addr %s225, 4096
          %s227 = scalar_lea.vmem [#allocation2], %s226
          %s228 = smul.u32 8, %s26
          %230 = vsyncadd %s224, 0
          %s231 = smul.addr %s228, 4
          %s232 = scalar_lea.hbm %s1, %s231
          %s233 = sshll.u32 %s232, 4
          %s234 = int_to_ptr.hbm [resolvable:$true] %s233
          %s235 = sshll.u32 %s227, 4
          %s236 = int_to_ptr.vmem [resolvable:$true] %s235
          %241 = dma.hbm_to_vmem [thread:$0]  %s234, 65536, %s236, %s224, 2048, 512, 32
        $region28: #{netd2_forward.1} parent=23 // pred_fallthru
          _
        // Predicated region
        $region29: #{netd2_forward.1} parent=23 // pred_check
          %p242 = pneg %p102
        $region30: #{netd2_forward.1} parent=23 // pred_check_branch
          %244 = sbr.rel (%p242) target = $region32
        $region31: #{netd2_forward.1} parent=23 // pred_region
          %s245 = sand.u32 %s18, 1
          %s246 = scalar_lea.sflag [#allocation5], %s245
          %s247 = sand.u32 %s92, 1
          %s248 = smul.addr %s247, 8
          %s249 = scalar_lea.vmem [#allocation4], %s248
          %s250 = smul.u32 8, %s26
          %252 = vsyncadd %s246, 0
          %s253 = scalar_lea.hbm %s2, %s250
          %s255 = sshll.u32 %s253, 4
          %s256 = int_to_ptr.hbm [resolvable:$true] %s255
          %s257 = sshll.u32 %s249, 4
          %s258 = int_to_ptr.vmem [resolvable:$true] %s257
          %260 = dma.hbm_to_vmem [thread:$0]  %s256, 128, %s258, %s246
        $region32: #{netd2_forward.1} parent=23 // pred_fallthru
          _
        // Predicated region
        $region33: #{netd2_forward.1} parent=23 // pred_check
          %p261 = pneg %p128
        $region34: #{netd2_forward.1} parent=23 // pred_check_branch
          %263 = sbr.rel (%p261) target = $region36
        $region35: #{netd2_forward.1} parent=23 // pred_region
          %s264 = sand.u32 %s18, 1
          %s265 = scalar_lea.sflag [#allocation5], %s264
          %s266 = sand.u32 %s118, 1
          %s267 = smul.addr %s266, 1024
          %s268 = scalar_lea.vmem [#allocation6], %s267
          %s269 = smul.u32 128, %s26
          %271 = vsyncadd %s265, 0
          %s272 = smul.addr %s269, 2
          %s273 = smul.addr %s272, 4
          %s274 = scalar_lea.hbm %s3, %s273
          %s275 = sshll.u32 %s274, 4
          %s276 = int_to_ptr.hbm [resolvable:$true] %s275
          %s277 = sshll.u32 %s268, 4
          %s278 = int_to_ptr.vmem [resolvable:$true] %s277
          %283 = dma.hbm_to_vmem [thread:$0]  %s276, 16384, %s278, %s265, 128, 128, 8
        $region36: #{netd2_forward.1} parent=23 // pred_fallthru
          _
      $region24: #{netd2_forward.1} parent=5 // pred_fallthru
        _
      %p284 = scmp.le.s32.totalorder 1, %s18
      %p285 = scmp.lt.s32.totalorder %s18, 5
      %p286 = pnand %p284, %p285
      %p287 = pneg %p286
      // Predicated region
      $region37: #{netd2_forward.1} parent=5 // pred_check
        _
      $region38: #{netd2_forward.1} parent=5 // pred_check_branch
        %289 = sbr.rel (%p286) target = $region40
      $region39: #{netd2_forward.1} parent=5 // pred_region
        %s290 = ssub.s32 %s18, 1
        %s291 = sand.u32 %s69, 1
        %s292 = scalar_lea.sflag [#allocation3], %s291
        %s293 = sand.u32 %s69, 1
        %s294 = smul.addr %s293, 4096
        %s295 = scalar_lea.vmem [#allocation2], %s294
        // Predicated region
        $region41: #{netd2_forward.1} parent=39 // pred_check
          %p296 = pneg %p82
        $region42: #{netd2_forward.1} parent=39 // pred_check_branch
          %298 = sbr.rel (%p296) target = $region44
        $region43: #{netd2_forward.1} parent=39 // pred_region
          %300 = dma.done %s292, 65536
        $region44: #{netd2_forward.1} parent=39 // pred_fallthru
          _
        %s301 = sand.u32 %s23, 1
        %s302 = scalar_lea.sflag [#allocation5], %s301
        %s303 = sand.u32 %s95, 1
        %s304 = smul.addr %s303, 8
        %s305 = scalar_lea.vmem [#allocation4], %s304
        // Predicated region
        $region45: #{netd2_forward.1} parent=39 // pred_check
          %p306 = pneg %p108
        $region46: #{netd2_forward.1} parent=39 // pred_check_branch
          %308 = sbr.rel (%p306) target = $region48
        $region47: #{netd2_forward.1} parent=39 // pred_region
          %310 = dma.done %s302, 128
        $region48: #{netd2_forward.1} parent=39 // pred_fallthru
          _
        %s311 = sand.u32 %s23, 1
        %s312 = scalar_lea.sflag [#allocation5], %s311
        %s313 = sand.u32 %s121, 1
        %s314 = smul.addr %s313, 1024
        %s315 = scalar_lea.vmem [#allocation6], %s314
        // Predicated region
        $region49: #{netd2_forward.1} parent=39 // pred_check
          %p316 = pneg %p134
        $region50: #{netd2_forward.1} parent=39 // pred_check_branch
          %318 = sbr.rel (%p316) target = $region52
        $region51: #{netd2_forward.1} parent=39 // pred_region
          %320 = dma.done %s312, 16384
        $region52: #{netd2_forward.1} parent=39 // pred_fallthru
          _
        // Predicated region
        $region53: #{netd2_forward.1} parent=39 // pred_check
          %p321 = pneg %p155
        $region54: #{netd2_forward.1} parent=39 // pred_check_branch
          %323 = sbr.rel (%p321) target = $region56
        $region55: #{netd2_forward.1} parent=39 // pred_region
          %325 = dma.done [#allocation8], 32
        $region56: #{netd2_forward.1} parent=39 // pred_fallthru
          _
        %p326 = scmp.lt.s32.totalorder %s27, 0
        %s327 = scalar_select %p326, %s27, 0
        %s328 = smul.addr %s327, 8
        %s329 = smul.addr %s328, 8
        %s330 = scalar_lea.vmem %s0, %s329
        %p331 = pneg %p56
        %p332 = pneg %p53
        %s333 = sand.u32 %s69, 1
        %s334 = scalar_lea.sflag [#allocation3], %s333
        %s335 = sand.u32 %s69, 1
        %s336 = smul.addr %s335, 4096
        %s337 = scalar_lea.vmem [#allocation2], %s336
        %p338 = pneg %p82
        %p339 = pneg %p79
        %s340 = sand.u32 %s23, 1
        %s341 = scalar_lea.sflag [#allocation5], %s340
        %s342 = sand.u32 %s95, 1
        %s343 = smul.addr %s342, 8
        %s344 = scalar_lea.vmem [#allocation4], %s343
        %p345 = pneg %p108
        %p346 = pneg %p105
        %s347 = sand.u32 %s23, 1
        %s348 = scalar_lea.sflag [#allocation5], %s347
        %s349 = sand.u32 %s121, 1
        %s350 = smul.addr %s349, 1024
        %s351 = scalar_lea.vmem [#allocation6], %s350
        %p352 = pneg %p134
        %p353 = pneg %p131
        %p354 = pneg %p155
        %p355 = pneg %p152
        %p356 = pneg %p181
        %p357 = pneg %p178
        %p358 = scmp.lt.s32.totalorder %s27, 0
        %s359 = scalar_select %p358, %s27, 0
        %s360 = smul.addr %s359, 2
        %s361 = smul.addr %s360, 8
        %s362 = scalar_lea.vmem %s5, %s361
        %p363 = scmp.lt.s32.totalorder %s27, 0
        %s364 = scalar_select %p363, %s27, 0
        %s365 = smul.addr %s364, 8
        %s366 = smul.addr %s365, 8
        %s367 = scalar_lea.vmem %s0, %s366
        %s368 = smul.u32 8, %s28
        %s369 = smul.u32 8, %s28
        %s370 = smul.u32 128, %s28
        %p371 = scmp.lt.s32.totalorder %s27, 0
        %s372 = scalar_select %p371, %s27, 0
        %s373 = smul.addr %s372, 2
        %s374 = smul.addr %s373, 8
        %s375 = scalar_lea.vmem %s5, %s374
        %p376 = scmp.eq.s32.totalorder %s28, 0
        // Predicated region
        $region57: #{netd2_forward.1} parent=39 // pred_check
          %p377 = pneg %p376
        $region58: #{netd2_forward.1} parent=39 // pred_check_branch
          %379 = sbr.rel (%p377) target = $region60
        $region59: #{netd2_forward.1} parent=39 // pred_region
          %380 = vst [vmem:[%s375] sm:$0xff] 0.0
          %381 = vst [vmem:[%s375 + $0x8] sm:$0xff] 0.0
        $region60: #{netd2_forward.1} parent=39 // pred_fallthru
          _
        %v382 = vld [vmem:[%s367] sm:$0xff]
        %v383 = vld [vmem:[%s367 + $0x8] sm:$0xff]
        %v384 = vld [vmem:[%s367 + $0x10] sm:$0xff]
        %v385 = vld [vmem:[%s367 + $0x18] sm:$0xff]
        %v386 = vld [vmem:[%s367 + $0x20] sm:$0xff]
        %v387 = vld [vmem:[%s367 + $0x28] sm:$0xff]
        %v388 = vld [vmem:[%s367 + $0x30] sm:$0xff]
        %v389 = vld [vmem:[%s367 + $0x38] sm:$0xff]
        %v390 = vpack.c.bf16 %v382, %v382
        %v391 = vpack.c.bf16 %v383, %v383
        %v392 = vpack.c.bf16 %v384, %v384
        %v393 = vpack.c.bf16 %v385, %v385
        %v394 = vpack.c.bf16 %v386, %v386
        %v395 = vpack.c.bf16 %v387, %v387
        %v396 = vpack.c.bf16 %v388, %v388
        %v397 = vpack.c.bf16 %v389, %v389
        %v398 = vld [vmem:[%s295] sm:$0xff]
        %v399 = vld [vmem:[%s295 + $0x8] sm:$0xff]
        %v400 = vld [vmem:[%s295 + $0x10] sm:$0xff]
        %v401 = vld [vmem:[%s295 + $0x18] sm:$0xff]
        %v402 = vld [vmem:[%s295 + $0x20] sm:$0xff]
        %v403 = vld [vmem:[%s295 + $0x28] sm:$0xff]
        %v404 = vld [vmem:[%s295 + $0x30] sm:$0xff]
        %v405 = vld [vmem:[%s295 + $0x38] sm:$0xff]
        %v406 = vld [vmem:[%s295 + $0x40] sm:$0xff]
        %v407 = vld [vmem:[%s295 + $0x48] sm:$0xff]
        %v408 = vld [vmem:[%s295 + $0x50] sm:$0xff]
        %v409 = vld [vmem:[%s295 + $0x58] sm:$0xff]
        %v410 = vld [vmem:[%s295 + $0x60] sm:$0xff]
        %v411 = vld [vmem:[%s295 + $0x68] sm:$0xff]
        %v412 = vld [vmem:[%s295 + $0x70] sm:$0xff]
        %v413 = vld [vmem:[%s295 + $0x78] sm:$0xff]
        %v414 = vld [vmem:[%s295 + $0x80] sm:$0xff]
        %v415 = vld [vmem:[%s295 + $0x88] sm:$0xff]
        %v416 = vld [vmem:[%s295 + $0x90] sm:$0xff]
        %v417 = vld [vmem:[%s295 + $0x98] sm:$0xff]
        %v418 = vld [vmem:[%s295 + $0xa0] sm:$0xff]
        %v419 = vld [vmem:[%s295 + $0xa8] sm:$0xff]
        %v420 = vld [vmem:[%s295 + $0xb0] sm:$0xff]
        %v421 = vld [vmem:[%s295 + $0xb8] sm:$0xff]
        %v422 = vld [vmem:[%s295 + $0xc0] sm:$0xff]
        %v423 = vld [vmem:[%s295 + $0xc8] sm:$0xff]
        %v424 = vld [vmem:[%s295 + $0xd0] sm:$0xff]
        %v425 = vld [vmem:[%s295 + $0xd8] sm:$0xff]
        %v426 = vld [vmem:[%s295 + $0xe0] sm:$0xff]
        %v427 = vld [vmem:[%s295 + $0xe8] sm:$0xff]
        %v428 = vld [vmem:[%s295 + $0xf0] sm:$0xff]
        %v429 = vld [vmem:[%s295 + $0xf8] sm:$0xff]
        %v430 = vld [vmem:[%s295 + $0x100] sm:$0xff]
        %v431 = vld [vmem:[%s295 + $0x108] sm:$0xff]
        %v432 = vld [vmem:[%s295 + $0x110] sm:$0xff]
        %v433 = vld [vmem:[%s295 + $0x118] sm:$0xff]
        %v434 = vld [vmem:[%s295 + $0x120] sm:$0xff]
        %v435 = vld [vmem:[%s295 + $0x128] sm:$0xff]
        %v436 = vld [vmem:[%s295 + $0x130] sm:$0xff]
        %v437 = vld [vmem:[%s295 + $0x138] sm:$0xff]
        %v438 = vld [vmem:[%s295 + $0x140] sm:$0xff]
        %v439 = vld [vmem:[%s295 + $0x148] sm:$0xff]
        %v440 = vld [vmem:[%s295 + $0x150] sm:$0xff]
        %v441 = vld [vmem:[%s295 + $0x158] sm:$0xff]
        %v442 = vld [vmem:[%s295 + $0x160] sm:$0xff]
        %v443 = vld [vmem:[%s295 + $0x168] sm:$0xff]
        %v444 = vld [vmem:[%s295 + $0x170] sm:$0xff]
        %v445 = vld [vmem:[%s295 + $0x178] sm:$0xff]
        %v446 = vld [vmem:[%s295 + $0x180] sm:$0xff]
        %v447 = vld [vmem:[%s295 + $0x188] sm:$0xff]
        %v448 = vld [vmem:[%s295 + $0x190] sm:$0xff]
        %v449 = vld [vmem:[%s295 + $0x198] sm:$0xff]
        %v450 = vld [vmem:[%s295 + $0x1a0] sm:$0xff]
        %v451 = vld [vmem:[%s295 + $0x1a8] sm:$0xff]
        %v452 = vld [vmem:[%s295 + $0x1b0] sm:$0xff]
        %v453 = vld [vmem:[%s295 + $0x1b8] sm:$0xff]
        %v454 = vld [vmem:[%s295 + $0x1c0] sm:$0xff]
        %v455 = vld [vmem:[%s295 + $0x1c8] sm:$0xff]
        %v456 = vld [vmem:[%s295 + $0x1d0] sm:$0xff]
        %v457 = vld [vmem:[%s295 + $0x1d8] sm:$0xff]
        %v458 = vld [vmem:[%s295 + $0x1e0] sm:$0xff]
        %v459 = vld [vmem:[%s295 + $0x1e8] sm:$0xff]
        %v460 = vld [vmem:[%s295 + $0x1f0] sm:$0xff]
        %v461 = vld [vmem:[%s295 + $0x1f8] sm:$0xff]
        %v462 = vld [vmem:[%s295 + $0x200] sm:$0xff]
        %v463 = vld [vmem:[%s295 + $0x208] sm:$0xff]
        %v464 = vld [vmem:[%s295 + $0x210] sm:$0xff]
        %v465 = vld [vmem:[%s295 + $0x218] sm:$0xff]
        %v466 = vld [vmem:[%s295 + $0x220] sm:$0xff]
        %v467 = vld [vmem:[%s295 + $0x228] sm:$0xff]
        %v468 = vld [vmem:[%s295 + $0x230] sm:$0xff]
        %v469 = vld [vmem:[%s295 + $0x238] sm:$0xff]
        %v470 = vld [vmem:[%s295 + $0x240] sm:$0xff]
        %v471 = vld [vmem:[%s295 + $0x248] sm:$0xff]
        %v472 = vld [vmem:[%s295 + $0x250] sm:$0xff]
        %v473 = vld [vmem:[%s295 + $0x258] sm:$0xff]
        %v474 = vld [vmem:[%s295 + $0x260] sm:$0xff]
        %v475 = vld [vmem:[%s295 + $0x268] sm:$0xff]
        %v476 = vld [vmem:[%s295 + $0x270] sm:$0xff]
        %v477 = vld [vmem:[%s295 + $0x278] sm:$0xff]
        %v478 = vld [vmem:[%s295 + $0x280] sm:$0xff]
        %v479 = vld [vmem:[%s295 + $0x288] sm:$0xff]
        %v480 = vld [vmem:[%s295 + $0x290] sm:$0xff]
        %v481 = vld [vmem:[%s295 + $0x298] sm:$0xff]
        %v482 = vld [vmem:[%s295 + $0x2a0] sm:$0xff]
        %v483 = vld [vmem:[%s295 + $0x2a8] sm:$0xff]
        %v484 = vld [vmem:[%s295 + $0x2b0] sm:$0xff]
        %v485 = vld [vmem:[%s295 + $0x2b8] sm:$0xff]
        %v486 = vld [vmem:[%s295 + $0x2c0] sm:$0xff]
        %v487 = vld [vmem:[%s295 + $0x2c8] sm:$0xff]
        %v488 = vld [vmem:[%s295 + $0x2d0] sm:$0xff]
        %v489 = vld [vmem:[%s295 + $0x2d8] sm:$0xff]
        %v490 = vld [vmem:[%s295 + $0x2e0] sm:$0xff]
        %v491 = vld [vmem:[%s295 + $0x2e8] sm:$0xff]
        %v492 = vld [vmem:[%s295 + $0x2f0] sm:$0xff]
        %v493 = vld [vmem:[%s295 + $0x2f8] sm:$0xff]
        %v494 = vld [vmem:[%s295 + $0x300] sm:$0xff]
        %v495 = vld [vmem:[%s295 + $0x308] sm:$0xff]
        %v496 = vld [vmem:[%s295 + $0x310] sm:$0xff]
        %v497 = vld [vmem:[%s295 + $0x318] sm:$0xff]
        %v498 = vld [vmem:[%s295 + $0x320] sm:$0xff]
        %v499 = vld [vmem:[%s295 + $0x328] sm:$0xff]
        %v500 = vld [vmem:[%s295 + $0x330] sm:$0xff]
        %v501 = vld [vmem:[%s295 + $0x338] sm:$0xff]
        %v502 = vld [vmem:[%s295 + $0x340] sm:$0xff]
        %v503 = vld [vmem:[%s295 + $0x348] sm:$0xff]
        %v504 = vld [vmem:[%s295 + $0x350] sm:$0xff]
        %v505 = vld [vmem:[%s295 + $0x358] sm:$0xff]
        %v506 = vld [vmem:[%s295 + $0x360] sm:$0xff]
        %v507 = vld [vmem:[%s295 + $0x368] sm:$0xff]
        %v508 = vld [vmem:[%s295 + $0x370] sm:$0xff]
        %v509 = vld [vmem:[%s295 + $0x378] sm:$0xff]
        %v510 = vld [vmem:[%s295 + $0x380] sm:$0xff]
        %v511 = vld [vmem:[%s295 + $0x388] sm:$0xff]
        %v512 = vld [vmem:[%s295 + $0x390] sm:$0xff]
        %v513 = vld [vmem:[%s295 + $0x398] sm:$0xff]
        %v514 = vld [vmem:[%s295 + $0x3a0] sm:$0xff]
        %v515 = vld [vmem:[%s295 + $0x3a8] sm:$0xff]
        %v516 = vld [vmem:[%s295 + $0x3b0] sm:$0xff]
        %v517 = vld [vmem:[%s295 + $0x3b8] sm:$0xff]
        %v518 = vld [vmem:[%s295 + $0x3c0] sm:$0xff]
        %v519 = vld [vmem:[%s295 + $0x3c8] sm:$0xff]
        %v520 = vld [vmem:[%s295 + $0x3d0] sm:$0xff]
        %v521 = vld [vmem:[%s295 + $0x3d8] sm:$0xff]
        %v522 = vld [vmem:[%s295 + $0x3e0] sm:$0xff]
        %v523 = vld [vmem:[%s295 + $0x3e8] sm:$0xff]
        %v524 = vld [vmem:[%s295 + $0x3f0] sm:$0xff]
        %v525 = vld [vmem:[%s295 + $0x3f8] sm:$0xff]
        %v526 = vld [vmem:[%s295 + $0x400] sm:$0xff]
        %v527 = vld [vmem:[%s295 + $0x408] sm:$0xff]
        %v528 = vld [vmem:[%s295 + $0x410] sm:$0xff]
        %v529 = vld [vmem:[%s295 + $0x418] sm:$0xff]
        %v530 = vld [vmem:[%s295 + $0x420] sm:$0xff]
        %v531 = vld [vmem:[%s295 + $0x428] sm:$0xff]
        %v532 = vld [vmem:[%s295 + $0x430] sm:$0xff]
        %v533 = vld [vmem:[%s295 + $0x438] sm:$0xff]
        %v534 = vld [vmem:[%s295 + $0x440] sm:$0xff]
        %v535 = vld [vmem:[%s295 + $0x448] sm:$0xff]
        %v536 = vld [vmem:[%s295 + $0x450] sm:$0xff]
        %v537 = vld [vmem:[%s295 + $0x458] sm:$0xff]
        %v538 = vld [vmem:[%s295 + $0x460] sm:$0xff]
        %v539 = vld [vmem:[%s295 + $0x468] sm:$0xff]
        %v540 = vld [vmem:[%s295 + $0x470] sm:$0xff]
        %v541 = vld [vmem:[%s295 + $0x478] sm:$0xff]
        %v542 = vld [vmem:[%s295 + $0x480] sm:$0xff]
        %v543 = vld [vmem:[%s295 + $0x488] sm:$0xff]
        %v544 = vld [vmem:[%s295 + $0x490] sm:$0xff]
        %v545 = vld [vmem:[%s295 + $0x498] sm:$0xff]
        %v546 = vld [vmem:[%s295 + $0x4a0] sm:$0xff]
        %v547 = vld [vmem:[%s295 + $0x4a8] sm:$0xff]
        %v548 = vld [vmem:[%s295 + $0x4b0] sm:$0xff]
        %v549 = vld [vmem:[%s295 + $0x4b8] sm:$0xff]
        %v550 = vld [vmem:[%s295 + $0x4c0] sm:$0xff]
        %v551 = vld [vmem:[%s295 + $0x4c8] sm:$0xff]
        %v552 = vld [vmem:[%s295 + $0x4d0] sm:$0xff]
        %v553 = vld [vmem:[%s295 + $0x4d8] sm:$0xff]
        %v554 = vld [vmem:[%s295 + $0x4e0] sm:$0xff]
        %v555 = vld [vmem:[%s295 + $0x4e8] sm:$0xff]
        %v556 = vld [vmem:[%s295 + $0x4f0] sm:$0xff]
        %v557 = vld [vmem:[%s295 + $0x4f8] sm:$0xff]
        %v558 = vld [vmem:[%s295 + $0x500] sm:$0xff]
        %v559 = vld [vmem:[%s295 + $0x508] sm:$0xff]
        %v560 = vld [vmem:[%s295 + $0x510] sm:$0xff]
        %v561 = vld [vmem:[%s295 + $0x518] sm:$0xff]
        %v562 = vld [vmem:[%s295 + $0x520] sm:$0xff]
        %v563 = vld [vmem:[%s295 + $0x528] sm:$0xff]
        %v564 = vld [vmem:[%s295 + $0x530] sm:$0xff]
        %v565 = vld [vmem:[%s295 + $0x538] sm:$0xff]
        %v566 = vld [vmem:[%s295 + $0x540] sm:$0xff]
        %v567 = vld [vmem:[%s295 + $0x548] sm:$0xff]
        %v568 = vld [vmem:[%s295 + $0x550] sm:$0xff]
        %v569 = vld [vmem:[%s295 + $0x558] sm:$0xff]
        %v570 = vld [vmem:[%s295 + $0x560] sm:$0xff]
        %v571 = vld [vmem:[%s295 + $0x568] sm:$0xff]
        %v572 = vld [vmem:[%s295 + $0x570] sm:$0xff]
        %v573 = vld [vmem:[%s295 + $0x578] sm:$0xff]
        %v574 = vld [vmem:[%s295 + $0x580] sm:$0xff]
        %v575 = vld [vmem:[%s295 + $0x588] sm:$0xff]
        %v576 = vld [vmem:[%s295 + $0x590] sm:$0xff]
        %v577 = vld [vmem:[%s295 + $0x598] sm:$0xff]
        %v578 = vld [vmem:[%s295 + $0x5a0] sm:$0xff]
        %v579 = vld [vmem:[%s295 + $0x5a8] sm:$0xff]
        %v580 = vld [vmem:[%s295 + $0x5b0] sm:$0xff]
        %v581 = vld [vmem:[%s295 + $0x5b8] sm:$0xff]
        %v582 = vld [vmem:[%s295 + $0x5c0] sm:$0xff]
        %v583 = vld [vmem:[%s295 + $0x5c8] sm:$0xff]
        %v584 = vld [vmem:[%s295 + $0x5d0] sm:$0xff]
        %v585 = vld [vmem:[%s295 + $0x5d8] sm:$0xff]
        %v586 = vld [vmem:[%s295 + $0x5e0] sm:$0xff]
        %v587 = vld [vmem:[%s295 + $0x5e8] sm:$0xff]
        %v588 = vld [vmem:[%s295 + $0x5f0] sm:$0xff]
        %v589 = vld [vmem:[%s295 + $0x5f8] sm:$0xff]
        %v590 = vld [vmem:[%s295 + $0x600] sm:$0xff]
        %v591 = vld [vmem:[%s295 + $0x608] sm:$0xff]
        %v592 = vld [vmem:[%s295 + $0x610] sm:$0xff]
        %v593 = vld [vmem:[%s295 + $0x618] sm:$0xff]
        %v594 = vld [vmem:[%s295 + $0x620] sm:$0xff]
        %v595 = vld [vmem:[%s295 + $0x628] sm:$0xff]
        %v596 = vld [vmem:[%s295 + $0x630] sm:$0xff]
        %v597 = vld [vmem:[%s295 + $0x638] sm:$0xff]
        %v598 = vld [vmem:[%s295 + $0x640] sm:$0xff]
        %v599 = vld [vmem:[%s295 + $0x648] sm:$0xff]
        %v600 = vld [vmem:[%s295 + $0x650] sm:$0xff]
        %v601 = vld [vmem:[%s295 + $0x658] sm:$0xff]
        %v602 = vld [vmem:[%s295 + $0x660] sm:$0xff]
        %v603 = vld [vmem:[%s295 + $0x668] sm:$0xff]
        %v604 = vld [vmem:[%s295 + $0x670] sm:$0xff]
        %v605 = vld [vmem:[%s295 + $0x678] sm:$0xff]
        %v606 = vld [vmem:[%s295 + $0x680] sm:$0xff]
        %v607 = vld [vmem:[%s295 + $0x688] sm:$0xff]
        %v608 = vld [vmem:[%s295 + $0x690] sm:$0xff]
        %v609 = vld [vmem:[%s295 + $0x698] sm:$0xff]
        %v610 = vld [vmem:[%s295 + $0x6a0] sm:$0xff]
        %v611 = vld [vmem:[%s295 + $0x6a8] sm:$0xff]
        %v612 = vld [vmem:[%s295 + $0x6b0] sm:$0xff]
        %v613 = vld [vmem:[%s295 + $0x6b8] sm:$0xff]
        %v614 = vld [vmem:[%s295 + $0x6c0] sm:$0xff]
        %v615 = vld [vmem:[%s295 + $0x6c8] sm:$0xff]
        %v616 = vld [vmem:[%s295 + $0x6d0] sm:$0xff]
        %v617 = vld [vmem:[%s295 + $0x6d8] sm:$0xff]
        %v618 = vld [vmem:[%s295 + $0x6e0] sm:$0xff]
        %v619 = vld [vmem:[%s295 + $0x6e8] sm:$0xff]
        %v620 = vld [vmem:[%s295 + $0x6f0] sm:$0xff]
        %v621 = vld [vmem:[%s295 + $0x6f8] sm:$0xff]
        %v622 = vld [vmem:[%s295 + $0x700] sm:$0xff]
        %v623 = vld [vmem:[%s295 + $0x708] sm:$0xff]
        %v624 = vld [vmem:[%s295 + $0x710] sm:$0xff]
        %v625 = vld [vmem:[%s295 + $0x718] sm:$0xff]
        %v626 = vld [vmem:[%s295 + $0x720] sm:$0xff]
        %v627 = vld [vmem:[%s295 + $0x728] sm:$0xff]
        %v628 = vld [vmem:[%s295 + $0x730] sm:$0xff]
        %v629 = vld [vmem:[%s295 + $0x738] sm:$0xff]
        %v630 = vld [vmem:[%s295 + $0x740] sm:$0xff]
        %v631 = vld [vmem:[%s295 + $0x748] sm:$0xff]
        %v632 = vld [vmem:[%s295 + $0x750] sm:$0xff]
        %v633 = vld [vmem:[%s295 + $0x758] sm:$0xff]
        %v634 = vld [vmem:[%s295 + $0x760] sm:$0xff]
        %v635 = vld [vmem:[%s295 + $0x768] sm:$0xff]
        %v636 = vld [vmem:[%s295 + $0x770] sm:$0xff]
        %v637 = vld [vmem:[%s295 + $0x778] sm:$0xff]
        %v638 = vld [vmem:[%s295 + $0x780] sm:$0xff]
        %v639 = vld [vmem:[%s295 + $0x788] sm:$0xff]
        %v640 = vld [vmem:[%s295 + $0x790] sm:$0xff]
        %v641 = vld [vmem:[%s295 + $0x798] sm:$0xff]
        %v642 = vld [vmem:[%s295 + $0x7a0] sm:$0xff]
        %v643 = vld [vmem:[%s295 + $0x7a8] sm:$0xff]
        %v644 = vld [vmem:[%s295 + $0x7b0] sm:$0xff]
        %v645 = vld [vmem:[%s295 + $0x7b8] sm:$0xff]
        %v646 = vld [vmem:[%s295 + $0x7c0] sm:$0xff]
        %v647 = vld [vmem:[%s295 + $0x7c8] sm:$0xff]
        %v648 = vld [vmem:[%s295 + $0x7d0] sm:$0xff]
        %v649 = vld [vmem:[%s295 + $0x7d8] sm:$0xff]
        %v650 = vld [vmem:[%s295 + $0x7e0] sm:$0xff]
        %v651 = vld [vmem:[%s295 + $0x7e8] sm:$0xff]
        %v652 = vld [vmem:[%s295 + $0x7f0] sm:$0xff]
        %v653 = vld [vmem:[%s295 + $0x7f8] sm:$0xff]
        %v654 = vld [vmem:[%s295 + $0x800] sm:$0xff]
        %v655 = vld [vmem:[%s295 + $0x808] sm:$0xff]
        %v656 = vld [vmem:[%s295 + $0x810] sm:$0xff]
        %v657 = vld [vmem:[%s295 + $0x818] sm:$0xff]
        %v658 = vld [vmem:[%s295 + $0x820] sm:$0xff]
        %v659 = vld [vmem:[%s295 + $0x828] sm:$0xff]
        %v660 = vld [vmem:[%s295 + $0x830] sm:$0xff]
        %v661 = vld [vmem:[%s295 + $0x838] sm:$0xff]
        %v662 = vld [vmem:[%s295 + $0x840] sm:$0xff]
        %v663 = vld [vmem:[%s295 + $0x848] sm:$0xff]
        %v664 = vld [vmem:[%s295 + $0x850] sm:$0xff]
        %v665 = vld [vmem:[%s295 + $0x858] sm:$0xff]
        %v666 = vld [vmem:[%s295 + $0x860] sm:$0xff]
        %v667 = vld [vmem:[%s295 + $0x868] sm:$0xff]
        %v668 = vld [vmem:[%s295 + $0x870] sm:$0xff]
        %v669 = vld [vmem:[%s295 + $0x878] sm:$0xff]
        %v670 = vld [vmem:[%s295 + $0x880] sm:$0xff]
        %v671 = vld [vmem:[%s295 + $0x888] sm:$0xff]
        %v672 = vld [vmem:[%s295 + $0x890] sm:$0xff]
        %v673 = vld [vmem:[%s295 + $0x898] sm:$0xff]
        %v674 = vld [vmem:[%s295 + $0x8a0] sm:$0xff]
        %v675 = vld [vmem:[%s295 + $0x8a8] sm:$0xff]
        %v676 = vld [vmem:[%s295 + $0x8b0] sm:$0xff]
        %v677 = vld [vmem:[%s295 + $0x8b8] sm:$0xff]
        %v678 = vld [vmem:[%s295 + $0x8c0] sm:$0xff]
        %v679 = vld [vmem:[%s295 + $0x8c8] sm:$0xff]
        %v680 = vld [vmem:[%s295 + $0x8d0] sm:$0xff]
        %v681 = vld [vmem:[%s295 + $0x8d8] sm:$0xff]
        %v682 = vld [vmem:[%s295 + $0x8e0] sm:$0xff]
        %v683 = vld [vmem:[%s295 + $0x8e8] sm:$0xff]
        %v684 = vld [vmem:[%s295 + $0x8f0] sm:$0xff]
        %v685 = vld [vmem:[%s295 + $0x8f8] sm:$0xff]
        %v686 = vld [vmem:[%s295 + $0x900] sm:$0xff]
        %v687 = vld [vmem:[%s295 + $0x908] sm:$0xff]
        %v688 = vld [vmem:[%s295 + $0x910] sm:$0xff]
        %v689 = vld [vmem:[%s295 + $0x918] sm:$0xff]
        %v690 = vld [vmem:[%s295 + $0x920] sm:$0xff]
        %v691 = vld [vmem:[%s295 + $0x928] sm:$0xff]
        %v692 = vld [vmem:[%s295 + $0x930] sm:$0xff]
        %v693 = vld [vmem:[%s295 + $0x938] sm:$0xff]
        %v694 = vld [vmem:[%s295 + $0x940] sm:$0xff]
        %v695 = vld [vmem:[%s295 + $0x948] sm:$0xff]
        %v696 = vld [vmem:[%s295 + $0x950] sm:$0xff]
        %v697 = vld [vmem:[%s295 + $0x958] sm:$0xff]
        %v698 = vld [vmem:[%s295 + $0x960] sm:$0xff]
        %v699 = vld [vmem:[%s295 + $0x968] sm:$0xff]
        %v700 = vld [vmem:[%s295 + $0x970] sm:$0xff]
        %v701 = vld [vmem:[%s295 + $0x978] sm:$0xff]
        %v702 = vld [vmem:[%s295 + $0x980] sm:$0xff]
        %v703 = vld [vmem:[%s295 + $0x988] sm:$0xff]
        %v704 = vld [vmem:[%s295 + $0x990] sm:$0xff]
        %v705 = vld [vmem:[%s295 + $0x998] sm:$0xff]
        %v706 = vld [vmem:[%s295 + $0x9a0] sm:$0xff]
        %v707 = vld [vmem:[%s295 + $0x9a8] sm:$0xff]
        %v708 = vld [vmem:[%s295 + $0x9b0] sm:$0xff]
        %v709 = vld [vmem:[%s295 + $0x9b8] sm:$0xff]
        %v710 = vld [vmem:[%s295 + $0x9c0] sm:$0xff]
        %v711 = vld [vmem:[%s295 + $0x9c8] sm:$0xff]
        %v712 = vld [vmem:[%s295 + $0x9d0] sm:$0xff]
        %v713 = vld [vmem:[%s295 + $0x9d8] sm:$0xff]
        %v714 = vld [vmem:[%s295 + $0x9e0] sm:$0xff]
        %v715 = vld [vmem:[%s295 + $0x9e8] sm:$0xff]
        %v716 = vld [vmem:[%s295 + $0x9f0] sm:$0xff]
        %v717 = vld [vmem:[%s295 + $0x9f8] sm:$0xff]
        %v718 = vld [vmem:[%s295 + $0xa00] sm:$0xff]
        %v719 = vld [vmem:[%s295 + $0xa08] sm:$0xff]
        %v720 = vld [vmem:[%s295 + $0xa10] sm:$0xff]
        %v721 = vld [vmem:[%s295 + $0xa18] sm:$0xff]
        %v722 = vld [vmem:[%s295 + $0xa20] sm:$0xff]
        %v723 = vld [vmem:[%s295 + $0xa28] sm:$0xff]
        %v724 = vld [vmem:[%s295 + $0xa30] sm:$0xff]
        %v725 = vld [vmem:[%s295 + $0xa38] sm:$0xff]
        %v726 = vld [vmem:[%s295 + $0xa40] sm:$0xff]
        %v727 = vld [vmem:[%s295 + $0xa48] sm:$0xff]
        %v728 = vld [vmem:[%s295 + $0xa50] sm:$0xff]
        %v729 = vld [vmem:[%s295 + $0xa58] sm:$0xff]
        %v730 = vld [vmem:[%s295 + $0xa60] sm:$0xff]
        %v731 = vld [vmem:[%s295 + $0xa68] sm:$0xff]
        %v732 = vld [vmem:[%s295 + $0xa70] sm:$0xff]
        %v733 = vld [vmem:[%s295 + $0xa78] sm:$0xff]
        %v734 = vld [vmem:[%s295 + $0xa80] sm:$0xff]
        %v735 = vld [vmem:[%s295 + $0xa88] sm:$0xff]
        %v736 = vld [vmem:[%s295 + $0xa90] sm:$0xff]
        %v737 = vld [vmem:[%s295 + $0xa98] sm:$0xff]
        %v738 = vld [vmem:[%s295 + $0xaa0] sm:$0xff]
        %v739 = vld [vmem:[%s295 + $0xaa8] sm:$0xff]
        %v740 = vld [vmem:[%s295 + $0xab0] sm:$0xff]
        %v741 = vld [vmem:[%s295 + $0xab8] sm:$0xff]
        %v742 = vld [vmem:[%s295 + $0xac0] sm:$0xff]
        %v743 = vld [vmem:[%s295 + $0xac8] sm:$0xff]
        %v744 = vld [vmem:[%s295 + $0xad0] sm:$0xff]
        %v745 = vld [vmem:[%s295 + $0xad8] sm:$0xff]
        %v746 = vld [vmem:[%s295 + $0xae0] sm:$0xff]
        %v747 = vld [vmem:[%s295 + $0xae8] sm:$0xff]
        %v748 = vld [vmem:[%s295 + $0xaf0] sm:$0xff]
        %v749 = vld [vmem:[%s295 + $0xaf8] sm:$0xff]
        %v750 = vld [vmem:[%s295 + $0xb00] sm:$0xff]
        %v751 = vld [vmem:[%s295 + $0xb08] sm:$0xff]
        %v752 = vld [vmem:[%s295 + $0xb10] sm:$0xff]
        %v753 = vld [vmem:[%s295 + $0xb18] sm:$0xff]
        %v754 = vld [vmem:[%s295 + $0xb20] sm:$0xff]
        %v755 = vld [vmem:[%s295 + $0xb28] sm:$0xff]
        %v756 = vld [vmem:[%s295 + $0xb30] sm:$0xff]
        %v757 = vld [vmem:[%s295 + $0xb38] sm:$0xff]
        %v758 = vld [vmem:[%s295 + $0xb40] sm:$0xff]
        %v759 = vld [vmem:[%s295 + $0xb48] sm:$0xff]
        %v760 = vld [vmem:[%s295 + $0xb50] sm:$0xff]
        %v761 = vld [vmem:[%s295 + $0xb58] sm:$0xff]
        %v762 = vld [vmem:[%s295 + $0xb60] sm:$0xff]
        %v763 = vld [vmem:[%s295 + $0xb68] sm:$0xff]
        %v764 = vld [vmem:[%s295 + $0xb70] sm:$0xff]
        %v765 = vld [vmem:[%s295 + $0xb78] sm:$0xff]
        %v766 = vld [vmem:[%s295 + $0xb80] sm:$0xff]
        %v767 = vld [vmem:[%s295 + $0xb88] sm:$0xff]
        %v768 = vld [vmem:[%s295 + $0xb90] sm:$0xff]
        %v769 = vld [vmem:[%s295 + $0xb98] sm:$0xff]
        %v770 = vld [vmem:[%s295 + $0xba0] sm:$0xff]
        %v771 = vld [vmem:[%s295 + $0xba8] sm:$0xff]
        %v772 = vld [vmem:[%s295 + $0xbb0] sm:$0xff]
        %v773 = vld [vmem:[%s295 + $0xbb8] sm:$0xff]
        %v774 = vld [vmem:[%s295 + $0xbc0] sm:$0xff]
        %v775 = vld [vmem:[%s295 + $0xbc8] sm:$0xff]
        %v776 = vld [vmem:[%s295 + $0xbd0] sm:$0xff]
        %v777 = vld [vmem:[%s295 + $0xbd8] sm:$0xff]
        %v778 = vld [vmem:[%s295 + $0xbe0] sm:$0xff]
        %v779 = vld [vmem:[%s295 + $0xbe8] sm:$0xff]
        %v780 = vld [vmem:[%s295 + $0xbf0] sm:$0xff]
        %v781 = vld [vmem:[%s295 + $0xbf8] sm:$0xff]
        %v782 = vld [vmem:[%s295 + $0xc00] sm:$0xff]
        %v783 = vld [vmem:[%s295 + $0xc08] sm:$0xff]
        %v784 = vld [vmem:[%s295 + $0xc10] sm:$0xff]
        %v785 = vld [vmem:[%s295 + $0xc18] sm:$0xff]
        %v786 = vld [vmem:[%s295 + $0xc20] sm:$0xff]
        %v787 = vld [vmem:[%s295 + $0xc28] sm:$0xff]
        %v788 = vld [vmem:[%s295 + $0xc30] sm:$0xff]
        %v789 = vld [vmem:[%s295 + $0xc38] sm:$0xff]
        %v790 = vld [vmem:[%s295 + $0xc40] sm:$0xff]
        %v791 = vld [vmem:[%s295 + $0xc48] sm:$0xff]
        %v792 = vld [vmem:[%s295 + $0xc50] sm:$0xff]
        %v793 = vld [vmem:[%s295 + $0xc58] sm:$0xff]
        %v794 = vld [vmem:[%s295 + $0xc60] sm:$0xff]
        %v795 = vld [vmem:[%s295 + $0xc68] sm:$0xff]
        %v796 = vld [vmem:[%s295 + $0xc70] sm:$0xff]
        %v797 = vld [vmem:[%s295 + $0xc78] sm:$0xff]
        %v798 = vld [vmem:[%s295 + $0xc80] sm:$0xff]
        %v799 = vld [vmem:[%s295 + $0xc88] sm:$0xff]
        %v800 = vld [vmem:[%s295 + $0xc90] sm:$0xff]
        %v801 = vld [vmem:[%s295 + $0xc98] sm:$0xff]
        %v802 = vld [vmem:[%s295 + $0xca0] sm:$0xff]
        %v803 = vld [vmem:[%s295 + $0xca8] sm:$0xff]
        %v804 = vld [vmem:[%s295 + $0xcb0] sm:$0xff]
        %v805 = vld [vmem:[%s295 + $0xcb8] sm:$0xff]
        %v806 = vld [vmem:[%s295 + $0xcc0] sm:$0xff]
        %v807 = vld [vmem:[%s295 + $0xcc8] sm:$0xff]
        %v808 = vld [vmem:[%s295 + $0xcd0] sm:$0xff]
        %v809 = vld [vmem:[%s295 + $0xcd8] sm:$0xff]
        %v810 = vld [vmem:[%s295 + $0xce0] sm:$0xff]
        %v811 = vld [vmem:[%s295 + $0xce8] sm:$0xff]
        %v812 = vld [vmem:[%s295 + $0xcf0] sm:$0xff]
        %v813 = vld [vmem:[%s295 + $0xcf8] sm:$0xff]
        %v814 = vld [vmem:[%s295 + $0xd00] sm:$0xff]
        %v815 = vld [vmem:[%s295 + $0xd08] sm:$0xff]
        %v816 = vld [vmem:[%s295 + $0xd10] sm:$0xff]
        %v817 = vld [vmem:[%s295 + $0xd18] sm:$0xff]
        %v818 = vld [vmem:[%s295 + $0xd20] sm:$0xff]
        %v819 = vld [vmem:[%s295 + $0xd28] sm:$0xff]
        %v820 = vld [vmem:[%s295 + $0xd30] sm:$0xff]
        %v821 = vld [vmem:[%s295 + $0xd38] sm:$0xff]
        %v822 = vld [vmem:[%s295 + $0xd40] sm:$0xff]
        %v823 = vld [vmem:[%s295 + $0xd48] sm:$0xff]
        %v824 = vld [vmem:[%s295 + $0xd50] sm:$0xff]
        %v825 = vld [vmem:[%s295 + $0xd58] sm:$0xff]
        %v826 = vld [vmem:[%s295 + $0xd60] sm:$0xff]
        %v827 = vld [vmem:[%s295 + $0xd68] sm:$0xff]
        %v828 = vld [vmem:[%s295 + $0xd70] sm:$0xff]
        %v829 = vld [vmem:[%s295 + $0xd78] sm:$0xff]
        %v830 = vld [vmem:[%s295 + $0xd80] sm:$0xff]
        %v831 = vld [vmem:[%s295 + $0xd88] sm:$0xff]
        %v832 = vld [vmem:[%s295 + $0xd90] sm:$0xff]
        %v833 = vld [vmem:[%s295 + $0xd98] sm:$0xff]
        %v834 = vld [vmem:[%s295 + $0xda0] sm:$0xff]
        %v835 = vld [vmem:[%s295 + $0xda8] sm:$0xff]
        %v836 = vld [vmem:[%s295 + $0xdb0] sm:$0xff]
        %v837 = vld [vmem:[%s295 + $0xdb8] sm:$0xff]
        %v838 = vld [vmem:[%s295 + $0xdc0] sm:$0xff]
        %v839 = vld [vmem:[%s295 + $0xdc8] sm:$0xff]
        %v840 = vld [vmem:[%s295 + $0xdd0] sm:$0xff]
        %v841 = vld [vmem:[%s295 + $0xdd8] sm:$0xff]
        %v842 = vld [vmem:[%s295 + $0xde0] sm:$0xff]
        %v843 = vld [vmem:[%s295 + $0xde8] sm:$0xff]
        %v844 = vld [vmem:[%s295 + $0xdf0] sm:$0xff]
        %v845 = vld [vmem:[%s295 + $0xdf8] sm:$0xff]
        %v846 = vld [vmem:[%s295 + $0xe00] sm:$0xff]
        %v847 = vld [vmem:[%s295 + $0xe08] sm:$0xff]
        %v848 = vld [vmem:[%s295 + $0xe10] sm:$0xff]
        %v849 = vld [vmem:[%s295 + $0xe18] sm:$0xff]
        %v850 = vld [vmem:[%s295 + $0xe20] sm:$0xff]
        %v851 = vld [vmem:[%s295 + $0xe28] sm:$0xff]
        %v852 = vld [vmem:[%s295 + $0xe30] sm:$0xff]
        %v853 = vld [vmem:[%s295 + $0xe38] sm:$0xff]
        %v854 = vld [vmem:[%s295 + $0xe40] sm:$0xff]
        %v855 = vld [vmem:[%s295 + $0xe48] sm:$0xff]
        %v856 = vld [vmem:[%s295 + $0xe50] sm:$0xff]
        %v857 = vld [vmem:[%s295 + $0xe58] sm:$0xff]
        %v858 = vld [vmem:[%s295 + $0xe60] sm:$0xff]
        %v859 = vld [vmem:[%s295 + $0xe68] sm:$0xff]
        %v860 = vld [vmem:[%s295 + $0xe70] sm:$0xff]
        %v861 = vld [vmem:[%s295 + $0xe78] sm:$0xff]
        %v862 = vld [vmem:[%s295 + $0xe80] sm:$0xff]
        %v863 = vld [vmem:[%s295 + $0xe88] sm:$0xff]
        %v864 = vld [vmem:[%s295 + $0xe90] sm:$0xff]
        %v865 = vld [vmem:[%s295 + $0xe98] sm:$0xff]
        %v866 = vld [vmem:[%s295 + $0xea0] sm:$0xff]
        %v867 = vld [vmem:[%s295 + $0xea8] sm:$0xff]
        %v868 = vld [vmem:[%s295 + $0xeb0] sm:$0xff]
        %v869 = vld [vmem:[%s295 + $0xeb8] sm:$0xff]
        %v870 = vld [vmem:[%s295 + $0xec0] sm:$0xff]
        %v871 = vld [vmem:[%s295 + $0xec8] sm:$0xff]
        %v872 = vld [vmem:[%s295 + $0xed0] sm:$0xff]
        %v873 = vld [vmem:[%s295 + $0xed8] sm:$0xff]
        %v874 = vld [vmem:[%s295 + $0xee0] sm:$0xff]
        %v875 = vld [vmem:[%s295 + $0xee8] sm:$0xff]
        %v876 = vld [vmem:[%s295 + $0xef0] sm:$0xff]
        %v877 = vld [vmem:[%s295 + $0xef8] sm:$0xff]
        %v878 = vld [vmem:[%s295 + $0xf00] sm:$0xff]
        %v879 = vld [vmem:[%s295 + $0xf08] sm:$0xff]
        %v880 = vld [vmem:[%s295 + $0xf10] sm:$0xff]
        %v881 = vld [vmem:[%s295 + $0xf18] sm:$0xff]
        %v882 = vld [vmem:[%s295 + $0xf20] sm:$0xff]
        %v883 = vld [vmem:[%s295 + $0xf28] sm:$0xff]
        %v884 = vld [vmem:[%s295 + $0xf30] sm:$0xff]
        %v885 = vld [vmem:[%s295 + $0xf38] sm:$0xff]
        %v886 = vld [vmem:[%s295 + $0xf40] sm:$0xff]
        %v887 = vld [vmem:[%s295 + $0xf48] sm:$0xff]
        %v888 = vld [vmem:[%s295 + $0xf50] sm:$0xff]
        %v889 = vld [vmem:[%s295 + $0xf58] sm:$0xff]
        %v890 = vld [vmem:[%s295 + $0xf60] sm:$0xff]
        %v891 = vld [vmem:[%s295 + $0xf68] sm:$0xff]
        %v892 = vld [vmem:[%s295 + $0xf70] sm:$0xff]
        %v893 = vld [vmem:[%s295 + $0xf78] sm:$0xff]
        %v894 = vld [vmem:[%s295 + $0xf80] sm:$0xff]
        %v895 = vld [vmem:[%s295 + $0xf88] sm:$0xff]
        %v896 = vld [vmem:[%s295 + $0xf90] sm:$0xff]
        %v897 = vld [vmem:[%s295 + $0xf98] sm:$0xff]
        %v898 = vld [vmem:[%s295 + $0xfa0] sm:$0xff]
        %v899 = vld [vmem:[%s295 + $0xfa8] sm:$0xff]
        %v900 = vld [vmem:[%s295 + $0xfb0] sm:$0xff]
        %v901 = vld [vmem:[%s295 + $0xfb8] sm:$0xff]
        %v902 = vld [vmem:[%s295 + $0xfc0] sm:$0xff]
        %v903 = vld [vmem:[%s295 + $0xfc8] sm:$0xff]
        %v904 = vld [vmem:[%s295 + $0xfd0] sm:$0xff]
        %v905 = vld [vmem:[%s295 + $0xfd8] sm:$0xff]
        %v906 = vld [vmem:[%s295 + $0xfe0] sm:$0xff]
        %v907 = vld [vmem:[%s295 + $0xfe8] sm:$0xff]
        %v908 = vld [vmem:[%s295 + $0xff0] sm:$0xff]
        %v909 = vld [vmem:[%s295 + $0xff8] sm:$0xff]
        %v910 = vld [vmem:[%s305] sm:$0xff]
        %v912 = vperm.slane %v910, 0
        %v913 = vperm.slane %v910, 1
        %v914 = vperm.slane %v910, 2
        %v915 = vperm.slane %v910, 3
        %v916 = vperm.slane %v910, 4
        %v917 = vperm.slane %v910, 5
        %v918 = vperm.slane %v910, 6
        %v919 = vperm.slane %v910, 7
        %v1440 = vunpack.c.l.b16 %v398
        %v1441 = vunpack.c.h.b16 %v398
        %v1442 = vunpack.c.l.b16 %v399
        %v1443 = vunpack.c.h.b16 %v399
        %v1444 = vunpack.c.l.b16 %v400
        %v1445 = vunpack.c.h.b16 %v400
        %v1446 = vunpack.c.l.b16 %v401
        %v1447 = vunpack.c.h.b16 %v401
        %v1448 = vunpack.c.l.b16 %v402
        %v1449 = vunpack.c.h.b16 %v402
        %v1450 = vunpack.c.l.b16 %v403
        %v1451 = vunpack.c.h.b16 %v403
        %v1452 = vunpack.c.l.b16 %v404
        %v1453 = vunpack.c.h.b16 %v404
        %v1454 = vunpack.c.l.b16 %v405
        %v1455 = vunpack.c.h.b16 %v405
        %v1456 = vunpack.c.l.b16 %v406
        %v1457 = vunpack.c.h.b16 %v406
        %v1458 = vunpack.c.l.b16 %v407
        %v1459 = vunpack.c.h.b16 %v407
        %v1460 = vunpack.c.l.b16 %v408
        %v1461 = vunpack.c.h.b16 %v408
        %v1462 = vunpack.c.l.b16 %v409
        %v1463 = vunpack.c.h.b16 %v409
        %v1464 = vunpack.c.l.b16 %v410
        %v1465 = vunpack.c.h.b16 %v410
        %v1466 = vunpack.c.l.b16 %v411
        %v1467 = vunpack.c.h.b16 %v411
        %v1468 = vunpack.c.l.b16 %v412
        %v1469 = vunpack.c.h.b16 %v412
        %v1470 = vunpack.c.l.b16 %v413
        %v1471 = vunpack.c.h.b16 %v413
        %v1472 = vunpack.c.l.b16 %v414
        %v1473 = vunpack.c.h.b16 %v414
        %v1474 = vunpack.c.l.b16 %v415
        %v1475 = vunpack.c.h.b16 %v415
        %v1476 = vunpack.c.l.b16 %v416
        %v1477 = vunpack.c.h.b16 %v416
        %v1478 = vunpack.c.l.b16 %v417
        %v1479 = vunpack.c.h.b16 %v417
        %v1480 = vunpack.c.l.b16 %v418
        %v1481 = vunpack.c.h.b16 %v418
        %v1482 = vunpack.c.l.b16 %v419
        %v1483 = vunpack.c.h.b16 %v419
        %v1484 = vunpack.c.l.b16 %v420
        %v1485 = vunpack.c.h.b16 %v420
        %v1486 = vunpack.c.l.b16 %v421
        %v1487 = vunpack.c.h.b16 %v421
        %v1488 = vunpack.c.l.b16 %v422
        %v1489 = vunpack.c.h.b16 %v422
        %v1490 = vunpack.c.l.b16 %v423
        %v1491 = vunpack.c.h.b16 %v423
        %v1492 = vunpack.c.l.b16 %v424
        %v1493 = vunpack.c.h.b16 %v424
        %v1494 = vunpack.c.l.b16 %v425
        %v1495 = vunpack.c.h.b16 %v425
        %v1496 = vunpack.c.l.b16 %v426
        %v1497 = vunpack.c.h.b16 %v426
        %v1498 = vunpack.c.l.b16 %v427
        %v1499 = vunpack.c.h.b16 %v427
        %v1500 = vunpack.c.l.b16 %v428
        %v1501 = vunpack.c.h.b16 %v428
        %v1502 = vunpack.c.l.b16 %v429
        %v1503 = vunpack.c.h.b16 %v429
        %v1504 = vunpack.c.l.b16 %v430
        %v1505 = vunpack.c.h.b16 %v430
        %v1506 = vunpack.c.l.b16 %v431
        %v1507 = vunpack.c.h.b16 %v431
        %v1508 = vunpack.c.l.b16 %v432
        %v1509 = vunpack.c.h.b16 %v432
        %v1510 = vunpack.c.l.b16 %v433
        %v1511 = vunpack.c.h.b16 %v433
        %v1512 = vunpack.c.l.b16 %v434
        %v1513 = vunpack.c.h.b16 %v434
        %v1514 = vunpack.c.l.b16 %v435
        %v1515 = vunpack.c.h.b16 %v435
        %v1516 = vunpack.c.l.b16 %v436
        %v1517 = vunpack.c.h.b16 %v436
        %v1518 = vunpack.c.l.b16 %v437
        %v1519 = vunpack.c.h.b16 %v437
        %v1520 = vunpack.c.l.b16 %v438
        %v1521 = vunpack.c.h.b16 %v438
        %v1522 = vunpack.c.l.b16 %v439
        %v1523 = vunpack.c.h.b16 %v439
        %v1524 = vunpack.c.l.b16 %v440
        %v1525 = vunpack.c.h.b16 %v440
        %v1526 = vunpack.c.l.b16 %v441
        %v1527 = vunpack.c.h.b16 %v441
        %v1528 = vunpack.c.l.b16 %v442
        %v1529 = vunpack.c.h.b16 %v442
        %v1530 = vunpack.c.l.b16 %v443
        %v1531 = vunpack.c.h.b16 %v443
        %v1532 = vunpack.c.l.b16 %v444
        %v1533 = vunpack.c.h.b16 %v444
        %v1534 = vunpack.c.l.b16 %v445
        %v1535 = vunpack.c.h.b16 %v445
        %v1536 = vunpack.c.l.b16 %v446
        %v1537 = vunpack.c.h.b16 %v446
        %v1538 = vunpack.c.l.b16 %v447
        %v1539 = vunpack.c.h.b16 %v447
        %v1540 = vunpack.c.l.b16 %v448
        %v1541 = vunpack.c.h.b16 %v448
        %v1542 = vunpack.c.l.b16 %v449
        %v1543 = vunpack.c.h.b16 %v449
        %v1544 = vunpack.c.l.b16 %v450
        %v1545 = vunpack.c.h.b16 %v450
        %v1546 = vunpack.c.l.b16 %v451
        %v1547 = vunpack.c.h.b16 %v451
        %v1548 = vunpack.c.l.b16 %v452
        %v1549 = vunpack.c.h.b16 %v452
        %v1550 = vunpack.c.l.b16 %v453
        %v1551 = vunpack.c.h.b16 %v453
        %v1552 = vunpack.c.l.b16 %v454
        %v1553 = vunpack.c.h.b16 %v454
        %v1554 = vunpack.c.l.b16 %v455
        %v1555 = vunpack.c.h.b16 %v455
        %v1556 = vunpack.c.l.b16 %v456
        %v1557 = vunpack.c.h.b16 %v456
        %v1558 = vunpack.c.l.b16 %v457
        %v1559 = vunpack.c.h.b16 %v457
        %v1560 = vunpack.c.l.b16 %v458
        %v1561 = vunpack.c.h.b16 %v458
        %v1562 = vunpack.c.l.b16 %v459
        %v1563 = vunpack.c.h.b16 %v459
        %v1564 = vunpack.c.l.b16 %v460
        %v1565 = vunpack.c.h.b16 %v460
        %v1566 = vunpack.c.l.b16 %v461
        %v1567 = vunpack.c.h.b16 %v461
        %v1568 = vunpack.c.l.b16 %v462
        %v1569 = vunpack.c.h.b16 %v462
        %v1570 = vunpack.c.l.b16 %v463
        %v1571 = vunpack.c.h.b16 %v463
        %v1572 = vunpack.c.l.b16 %v464
        %v1573 = vunpack.c.h.b16 %v464
        %v1574 = vunpack.c.l.b16 %v465
        %v1575 = vunpack.c.h.b16 %v465
        %v1576 = vunpack.c.l.b16 %v466
        %v1577 = vunpack.c.h.b16 %v466
        %v1578 = vunpack.c.l.b16 %v467
        %v1579 = vunpack.c.h.b16 %v467
        %v1580 = vunpack.c.l.b16 %v468
        %v1581 = vunpack.c.h.b16 %v468
        %v1582 = vunpack.c.l.b16 %v469
        %v1583 = vunpack.c.h.b16 %v469
        %v1584 = vunpack.c.l.b16 %v470
        %v1585 = vunpack.c.h.b16 %v470
        %v1586 = vunpack.c.l.b16 %v471
        %v1587 = vunpack.c.h.b16 %v471
        %v1588 = vunpack.c.l.b16 %v472
        %v1589 = vunpack.c.h.b16 %v472
        %v1590 = vunpack.c.l.b16 %v473
        %v1591 = vunpack.c.h.b16 %v473
        %v1592 = vunpack.c.l.b16 %v474
        %v1593 = vunpack.c.h.b16 %v474
        %v1594 = vunpack.c.l.b16 %v475
        %v1595 = vunpack.c.h.b16 %v475
        %v1596 = vunpack.c.l.b16 %v476
        %v1597 = vunpack.c.h.b16 %v476
        %v1598 = vunpack.c.l.b16 %v477
        %v1599 = vunpack.c.h.b16 %v477
        %v1600 = vunpack.c.l.b16 %v478
        %v1601 = vunpack.c.h.b16 %v478
        %v1602 = vunpack.c.l.b16 %v479
        %v1603 = vunpack.c.h.b16 %v479
        %v1604 = vunpack.c.l.b16 %v480
        %v1605 = vunpack.c.h.b16 %v480
        %v1606 = vunpack.c.l.b16 %v481
        %v1607 = vunpack.c.h.b16 %v481
        %v1608 = vunpack.c.l.b16 %v482
        %v1609 = vunpack.c.h.b16 %v482
        %v1610 = vunpack.c.l.b16 %v483
        %v1611 = vunpack.c.h.b16 %v483
        %v1612 = vunpack.c.l.b16 %v484
        %v1613 = vunpack.c.h.b16 %v484
        %v1614 = vunpack.c.l.b16 %v485
        %v1615 = vunpack.c.h.b16 %v485
        %v1616 = vunpack.c.l.b16 %v486
        %v1617 = vunpack.c.h.b16 %v486
        %v1618 = vunpack.c.l.b16 %v487
        %v1619 = vunpack.c.h.b16 %v487
        %v1620 = vunpack.c.l.b16 %v488
        %v1621 = vunpack.c.h.b16 %v488
        %v1622 = vunpack.c.l.b16 %v489
        %v1623 = vunpack.c.h.b16 %v489
        %v1624 = vunpack.c.l.b16 %v490
        %v1625 = vunpack.c.h.b16 %v490
        %v1626 = vunpack.c.l.b16 %v491
        %v1627 = vunpack.c.h.b16 %v491
        %v1628 = vunpack.c.l.b16 %v492
        %v1629 = vunpack.c.h.b16 %v492
        %v1630 = vunpack.c.l.b16 %v493
        %v1631 = vunpack.c.h.b16 %v493
        %v1632 = vunpack.c.l.b16 %v494
        %v1633 = vunpack.c.h.b16 %v494
        %v1634 = vunpack.c.l.b16 %v495
        %v1635 = vunpack.c.h.b16 %v495
        %v1636 = vunpack.c.l.b16 %v496
        %v1637 = vunpack.c.h.b16 %v496
        %v1638 = vunpack.c.l.b16 %v497
        %v1639 = vunpack.c.h.b16 %v497
        %v1640 = vunpack.c.l.b16 %v498
        %v1641 = vunpack.c.h.b16 %v498
        %v1642 = vunpack.c.l.b16 %v499
        %v1643 = vunpack.c.h.b16 %v499
        %v1644 = vunpack.c.l.b16 %v500
        %v1645 = vunpack.c.h.b16 %v500
        %v1646 = vunpack.c.l.b16 %v501
        %v1647 = vunpack.c.h.b16 %v501
        %v1648 = vunpack.c.l.b16 %v502
        %v1649 = vunpack.c.h.b16 %v502
        %v1650 = vunpack.c.l.b16 %v503
        %v1651 = vunpack.c.h.b16 %v503
        %v1652 = vunpack.c.l.b16 %v504
        %v1653 = vunpack.c.h.b16 %v504
        %v1654 = vunpack.c.l.b16 %v505
        %v1655 = vunpack.c.h.b16 %v505
        %v1656 = vunpack.c.l.b16 %v506
        %v1657 = vunpack.c.h.b16 %v506
        %v1658 = vunpack.c.l.b16 %v507
        %v1659 = vunpack.c.h.b16 %v507
        %v1660 = vunpack.c.l.b16 %v508
        %v1661 = vunpack.c.h.b16 %v508
        %v1662 = vunpack.c.l.b16 %v509
        %v1663 = vunpack.c.h.b16 %v509
        %v1664 = vunpack.c.l.b16 %v510
        %v1665 = vunpack.c.h.b16 %v510
        %v1666 = vunpack.c.l.b16 %v511
        %v1667 = vunpack.c.h.b16 %v511
        %v1668 = vunpack.c.l.b16 %v512
        %v1669 = vunpack.c.h.b16 %v512
        %v1670 = vunpack.c.l.b16 %v513
        %v1671 = vunpack.c.h.b16 %v513
        %v1672 = vunpack.c.l.b16 %v514
        %v1673 = vunpack.c.h.b16 %v514
        %v1674 = vunpack.c.l.b16 %v515
        %v1675 = vunpack.c.h.b16 %v515
        %v1676 = vunpack.c.l.b16 %v516
        %v1677 = vunpack.c.h.b16 %v516
        %v1678 = vunpack.c.l.b16 %v517
        %v1679 = vunpack.c.h.b16 %v517
        %v1680 = vunpack.c.l.b16 %v518
        %v1681 = vunpack.c.h.b16 %v518
        %v1682 = vunpack.c.l.b16 %v519
        %v1683 = vunpack.c.h.b16 %v519
        %v1684 = vunpack.c.l.b16 %v520
        %v1685 = vunpack.c.h.b16 %v520
        %v1686 = vunpack.c.l.b16 %v521
        %v1687 = vunpack.c.h.b16 %v521
        %v1688 = vunpack.c.l.b16 %v522
        %v1689 = vunpack.c.h.b16 %v522
        %v1690 = vunpack.c.l.b16 %v523
        %v1691 = vunpack.c.h.b16 %v523
        %v1692 = vunpack.c.l.b16 %v524
        %v1693 = vunpack.c.h.b16 %v524
        %v1694 = vunpack.c.l.b16 %v525
        %v1695 = vunpack.c.h.b16 %v525
        %v1696 = vunpack.c.l.b16 %v526
        %v1697 = vunpack.c.h.b16 %v526
        %v1698 = vunpack.c.l.b16 %v527
        %v1699 = vunpack.c.h.b16 %v527
        %v1700 = vunpack.c.l.b16 %v528
        %v1701 = vunpack.c.h.b16 %v528
        %v1702 = vunpack.c.l.b16 %v529
        %v1703 = vunpack.c.h.b16 %v529
        %v1704 = vunpack.c.l.b16 %v530
        %v1705 = vunpack.c.h.b16 %v530
        %v1706 = vunpack.c.l.b16 %v531
        %v1707 = vunpack.c.h.b16 %v531
        %v1708 = vunpack.c.l.b16 %v532
        %v1709 = vunpack.c.h.b16 %v532
        %v1710 = vunpack.c.l.b16 %v533
        %v1711 = vunpack.c.h.b16 %v533
        %v1712 = vunpack.c.l.b16 %v534
        %v1713 = vunpack.c.h.b16 %v534
        %v1714 = vunpack.c.l.b16 %v535
        %v1715 = vunpack.c.h.b16 %v535
        %v1716 = vunpack.c.l.b16 %v536
        %v1717 = vunpack.c.h.b16 %v536
        %v1718 = vunpack.c.l.b16 %v537
        %v1719 = vunpack.c.h.b16 %v537
        %v1720 = vunpack.c.l.b16 %v538
        %v1721 = vunpack.c.h.b16 %v538
        %v1722 = vunpack.c.l.b16 %v539
        %v1723 = vunpack.c.h.b16 %v539
        %v1724 = vunpack.c.l.b16 %v540
        %v1725 = vunpack.c.h.b16 %v540
        %v1726 = vunpack.c.l.b16 %v541
        %v1727 = vunpack.c.h.b16 %v541
        %v1728 = vunpack.c.l.b16 %v542
        %v1729 = vunpack.c.h.b16 %v542
        %v1730 = vunpack.c.l.b16 %v543
        %v1731 = vunpack.c.h.b16 %v543
        %v1732 = vunpack.c.l.b16 %v544
        %v1733 = vunpack.c.h.b16 %v544
        %v1734 = vunpack.c.l.b16 %v545
        %v1735 = vunpack.c.h.b16 %v545
        %v1736 = vunpack.c.l.b16 %v546
        %v1737 = vunpack.c.h.b16 %v546
        %v1738 = vunpack.c.l.b16 %v547
        %v1739 = vunpack.c.h.b16 %v547
        %v1740 = vunpack.c.l.b16 %v548
        %v1741 = vunpack.c.h.b16 %v548
        %v1742 = vunpack.c.l.b16 %v549
        %v1743 = vunpack.c.h.b16 %v549
        %v1744 = vunpack.c.l.b16 %v550
        %v1745 = vunpack.c.h.b16 %v550
        %v1746 = vunpack.c.l.b16 %v551
        %v1747 = vunpack.c.h.b16 %v551
        %v1748 = vunpack.c.l.b16 %v552
        %v1749 = vunpack.c.h.b16 %v552
        %v1750 = vunpack.c.l.b16 %v553
        %v1751 = vunpack.c.h.b16 %v553
        %v1752 = vunpack.c.l.b16 %v554
        %v1753 = vunpack.c.h.b16 %v554
        %v1754 = vunpack.c.l.b16 %v555
        %v1755 = vunpack.c.h.b16 %v555
        %v1756 = vunpack.c.l.b16 %v556
        %v1757 = vunpack.c.h.b16 %v556
        %v1758 = vunpack.c.l.b16 %v557
        %v1759 = vunpack.c.h.b16 %v557
        %v1760 = vunpack.c.l.b16 %v558
        %v1761 = vunpack.c.h.b16 %v558
        %v1762 = vunpack.c.l.b16 %v559
        %v1763 = vunpack.c.h.b16 %v559
        %v1764 = vunpack.c.l.b16 %v560
        %v1765 = vunpack.c.h.b16 %v560
        %v1766 = vunpack.c.l.b16 %v561
        %v1767 = vunpack.c.h.b16 %v561
        %v1768 = vunpack.c.l.b16 %v562
        %v1769 = vunpack.c.h.b16 %v562
        %v1770 = vunpack.c.l.b16 %v563
        %v1771 = vunpack.c.h.b16 %v563
        %v1772 = vunpack.c.l.b16 %v564
        %v1773 = vunpack.c.h.b16 %v564
        %v1774 = vunpack.c.l.b16 %v565
        %v1775 = vunpack.c.h.b16 %v565
        %v1776 = vunpack.c.l.b16 %v566
        %v1777 = vunpack.c.h.b16 %v566
        %v1778 = vunpack.c.l.b16 %v567
        %v1779 = vunpack.c.h.b16 %v567
        %v1780 = vunpack.c.l.b16 %v568
        %v1781 = vunpack.c.h.b16 %v568
        %v1782 = vunpack.c.l.b16 %v569
        %v1783 = vunpack.c.h.b16 %v569
        %v1784 = vunpack.c.l.b16 %v570
        %v1785 = vunpack.c.h.b16 %v570
        %v1786 = vunpack.c.l.b16 %v571
        %v1787 = vunpack.c.h.b16 %v571
        %v1788 = vunpack.c.l.b16 %v572
        %v1789 = vunpack.c.h.b16 %v572
        %v1790 = vunpack.c.l.b16 %v573
        %v1791 = vunpack.c.h.b16 %v573
        %v1792 = vunpack.c.l.b16 %v574
        %v1793 = vunpack.c.h.b16 %v574
        %v1794 = vunpack.c.l.b16 %v575
        %v1795 = vunpack.c.h.b16 %v575
        %v1796 = vunpack.c.l.b16 %v576
        %v1797 = vunpack.c.h.b16 %v576
        %v1798 = vunpack.c.l.b16 %v577
        %v1799 = vunpack.c.h.b16 %v577
        %v1800 = vunpack.c.l.b16 %v578
        %v1801 = vunpack.c.h.b16 %v578
        %v1802 = vunpack.c.l.b16 %v579
        %v1803 = vunpack.c.h.b16 %v579
        %v1804 = vunpack.c.l.b16 %v580
        %v1805 = vunpack.c.h.b16 %v580
        %v1806 = vunpack.c.l.b16 %v581
        %v1807 = vunpack.c.h.b16 %v581
        %v1808 = vunpack.c.l.b16 %v582
        %v1809 = vunpack.c.h.b16 %v582
        %v1810 = vunpack.c.l.b16 %v583
        %v1811 = vunpack.c.h.b16 %v583
        %v1812 = vunpack.c.l.b16 %v584
        %v1813 = vunpack.c.h.b16 %v584
        %v1814 = vunpack.c.l.b16 %v585
        %v1815 = vunpack.c.h.b16 %v585
        %v1816 = vunpack.c.l.b16 %v586
        %v1817 = vunpack.c.h.b16 %v586
        %v1818 = vunpack.c.l.b16 %v587
        %v1819 = vunpack.c.h.b16 %v587
        %v1820 = vunpack.c.l.b16 %v588
        %v1821 = vunpack.c.h.b16 %v588
        %v1822 = vunpack.c.l.b16 %v589
        %v1823 = vunpack.c.h.b16 %v589
        %v1824 = vunpack.c.l.b16 %v590
        %v1825 = vunpack.c.h.b16 %v590
        %v1826 = vunpack.c.l.b16 %v591
        %v1827 = vunpack.c.h.b16 %v591
        %v1828 = vunpack.c.l.b16 %v592
        %v1829 = vunpack.c.h.b16 %v592
        %v1830 = vunpack.c.l.b16 %v593
        %v1831 = vunpack.c.h.b16 %v593
        %v1832 = vunpack.c.l.b16 %v594
        %v1833 = vunpack.c.h.b16 %v594
        %v1834 = vunpack.c.l.b16 %v595
        %v1835 = vunpack.c.h.b16 %v595
        %v1836 = vunpack.c.l.b16 %v596
        %v1837 = vunpack.c.h.b16 %v596
        %v1838 = vunpack.c.l.b16 %v597
        %v1839 = vunpack.c.h.b16 %v597
        %v1840 = vunpack.c.l.b16 %v598
        %v1841 = vunpack.c.h.b16 %v598
        %v1842 = vunpack.c.l.b16 %v599
        %v1843 = vunpack.c.h.b16 %v599
        %v1844 = vunpack.c.l.b16 %v600
        %v1845 = vunpack.c.h.b16 %v600
        %v1846 = vunpack.c.l.b16 %v601
        %v1847 = vunpack.c.h.b16 %v601
        %v1848 = vunpack.c.l.b16 %v602
        %v1849 = vunpack.c.h.b16 %v602
        %v1850 = vunpack.c.l.b16 %v603
        %v1851 = vunpack.c.h.b16 %v603
        %v1852 = vunpack.c.l.b16 %v604
        %v1853 = vunpack.c.h.b16 %v604
        %v1854 = vunpack.c.l.b16 %v605
        %v1855 = vunpack.c.h.b16 %v605
        %v1856 = vunpack.c.l.b16 %v606
        %v1857 = vunpack.c.h.b16 %v606
        %v1858 = vunpack.c.l.b16 %v607
        %v1859 = vunpack.c.h.b16 %v607
        %v1860 = vunpack.c.l.b16 %v608
        %v1861 = vunpack.c.h.b16 %v608
        %v1862 = vunpack.c.l.b16 %v609
        %v1863 = vunpack.c.h.b16 %v609
        %v1864 = vunpack.c.l.b16 %v610
        %v1865 = vunpack.c.h.b16 %v610
        %v1866 = vunpack.c.l.b16 %v611
        %v1867 = vunpack.c.h.b16 %v611
        %v1868 = vunpack.c.l.b16 %v612
        %v1869 = vunpack.c.h.b16 %v612
        %v1870 = vunpack.c.l.b16 %v613
        %v1871 = vunpack.c.h.b16 %v613
        %v1872 = vunpack.c.l.b16 %v614
        %v1873 = vunpack.c.h.b16 %v614
        %v1874 = vunpack.c.l.b16 %v615
        %v1875 = vunpack.c.h.b16 %v615
        %v1876 = vunpack.c.l.b16 %v616
        %v1877 = vunpack.c.h.b16 %v616
        %v1878 = vunpack.c.l.b16 %v617
        %v1879 = vunpack.c.h.b16 %v617
        %v1880 = vunpack.c.l.b16 %v618
        %v1881 = vunpack.c.h.b16 %v618
        %v1882 = vunpack.c.l.b16 %v619
        %v1883 = vunpack.c.h.b16 %v619
        %v1884 = vunpack.c.l.b16 %v620
        %v1885 = vunpack.c.h.b16 %v620
        %v1886 = vunpack.c.l.b16 %v621
        %v1887 = vunpack.c.h.b16 %v621
        %v1888 = vunpack.c.l.b16 %v622
        %v1889 = vunpack.c.h.b16 %v622
        %v1890 = vunpack.c.l.b16 %v623
        %v1891 = vunpack.c.h.b16 %v623
        %v1892 = vunpack.c.l.b16 %v624
        %v1893 = vunpack.c.h.b16 %v624
        %v1894 = vunpack.c.l.b16 %v625
        %v1895 = vunpack.c.h.b16 %v625
        %v1896 = vunpack.c.l.b16 %v626
        %v1897 = vunpack.c.h.b16 %v626
        %v1898 = vunpack.c.l.b16 %v627
        %v1899 = vunpack.c.h.b16 %v627
        %v1900 = vunpack.c.l.b16 %v628
        %v1901 = vunpack.c.h.b16 %v628
        %v1902 = vunpack.c.l.b16 %v629
        %v1903 = vunpack.c.h.b16 %v629
        %v1904 = vunpack.c.l.b16 %v630
        %v1905 = vunpack.c.h.b16 %v630
        %v1906 = vunpack.c.l.b16 %v631
        %v1907 = vunpack.c.h.b16 %v631
        %v1908 = vunpack.c.l.b16 %v632
        %v1909 = vunpack.c.h.b16 %v632
        %v1910 = vunpack.c.l.b16 %v633
        %v1911 = vunpack.c.h.b16 %v633
        %v1912 = vunpack.c.l.b16 %v634
        %v1913 = vunpack.c.h.b16 %v634
        %v1914 = vunpack.c.l.b16 %v635
        %v1915 = vunpack.c.h.b16 %v635
        %v1916 = vunpack.c.l.b16 %v636
        %v1917 = vunpack.c.h.b16 %v636
        %v1918 = vunpack.c.l.b16 %v637
        %v1919 = vunpack.c.h.b16 %v637
        %v1920 = vunpack.c.l.b16 %v638
        %v1921 = vunpack.c.h.b16 %v638
        %v1922 = vunpack.c.l.b16 %v639
        %v1923 = vunpack.c.h.b16 %v639
        %v1924 = vunpack.c.l.b16 %v640
        %v1925 = vunpack.c.h.b16 %v640
        %v1926 = vunpack.c.l.b16 %v641
        %v1927 = vunpack.c.h.b16 %v641
        %v1928 = vunpack.c.l.b16 %v642
        %v1929 = vunpack.c.h.b16 %v642
        %v1930 = vunpack.c.l.b16 %v643
        %v1931 = vunpack.c.h.b16 %v643
        %v1932 = vunpack.c.l.b16 %v644
        %v1933 = vunpack.c.h.b16 %v644
        %v1934 = vunpack.c.l.b16 %v645
        %v1935 = vunpack.c.h.b16 %v645
        %v1936 = vunpack.c.l.b16 %v646
        %v1937 = vunpack.c.h.b16 %v646
        %v1938 = vunpack.c.l.b16 %v647
        %v1939 = vunpack.c.h.b16 %v647
        %v1940 = vunpack.c.l.b16 %v648
        %v1941 = vunpack.c.h.b16 %v648
        %v1942 = vunpack.c.l.b16 %v649
        %v1943 = vunpack.c.h.b16 %v649
        %v1944 = vunpack.c.l.b16 %v650
        %v1945 = vunpack.c.h.b16 %v650
        %v1946 = vunpack.c.l.b16 %v651
        %v1947 = vunpack.c.h.b16 %v651
        %v1948 = vunpack.c.l.b16 %v652
        %v1949 = vunpack.c.h.b16 %v652
        %v1950 = vunpack.c.l.b16 %v653
        %v1951 = vunpack.c.h.b16 %v653
        %v1952 = vunpack.c.l.b16 %v654
        %v1953 = vunpack.c.h.b16 %v654
        %v1954 = vunpack.c.l.b16 %v655
        %v1955 = vunpack.c.h.b16 %v655
        %v1956 = vunpack.c.l.b16 %v656
        %v1957 = vunpack.c.h.b16 %v656
        %v1958 = vunpack.c.l.b16 %v657
        %v1959 = vunpack.c.h.b16 %v657
        %v1960 = vunpack.c.l.b16 %v658
        %v1961 = vunpack.c.h.b16 %v658
        %v1962 = vunpack.c.l.b16 %v659
        %v1963 = vunpack.c.h.b16 %v659
        %v1964 = vunpack.c.l.b16 %v660
        %v1965 = vunpack.c.h.b16 %v660
        %v1966 = vunpack.c.l.b16 %v661
        %v1967 = vunpack.c.h.b16 %v661
        %v1968 = vunpack.c.l.b16 %v662
        %v1969 = vunpack.c.h.b16 %v662
        %v1970 = vunpack.c.l.b16 %v663
        %v1971 = vunpack.c.h.b16 %v663
        %v1972 = vunpack.c.l.b16 %v664
        %v1973 = vunpack.c.h.b16 %v664
        %v1974 = vunpack.c.l.b16 %v665
        %v1975 = vunpack.c.h.b16 %v665
        %v1976 = vunpack.c.l.b16 %v666
        %v1977 = vunpack.c.h.b16 %v666
        %v1978 = vunpack.c.l.b16 %v667
        %v1979 = vunpack.c.h.b16 %v667
        %v1980 = vunpack.c.l.b16 %v668
        %v1981 = vunpack.c.h.b16 %v668
        %v1982 = vunpack.c.l.b16 %v669
        %v1983 = vunpack.c.h.b16 %v669
        %v1984 = vunpack.c.l.b16 %v670
        %v1985 = vunpack.c.h.b16 %v670
        %v1986 = vunpack.c.l.b16 %v671
        %v1987 = vunpack.c.h.b16 %v671
        %v1988 = vunpack.c.l.b16 %v672
        %v1989 = vunpack.c.h.b16 %v672
        %v1990 = vunpack.c.l.b16 %v673
        %v1991 = vunpack.c.h.b16 %v673
        %v1992 = vunpack.c.l.b16 %v674
        %v1993 = vunpack.c.h.b16 %v674
        %v1994 = vunpack.c.l.b16 %v675
        %v1995 = vunpack.c.h.b16 %v675
        %v1996 = vunpack.c.l.b16 %v676
        %v1997 = vunpack.c.h.b16 %v676
        %v1998 = vunpack.c.l.b16 %v677
        %v1999 = vunpack.c.h.b16 %v677
        %v2000 = vunpack.c.l.b16 %v678
        %v2001 = vunpack.c.h.b16 %v678
        %v2002 = vunpack.c.l.b16 %v679
        %v2003 = vunpack.c.h.b16 %v679
        %v2004 = vunpack.c.l.b16 %v680
        %v2005 = vunpack.c.h.b16 %v680
        %v2006 = vunpack.c.l.b16 %v681
        %v2007 = vunpack.c.h.b16 %v681
        %v2008 = vunpack.c.l.b16 %v682
        %v2009 = vunpack.c.h.b16 %v682
        %v2010 = vunpack.c.l.b16 %v683
        %v2011 = vunpack.c.h.b16 %v683
        %v2012 = vunpack.c.l.b16 %v684
        %v2013 = vunpack.c.h.b16 %v684
        %v2014 = vunpack.c.l.b16 %v685
        %v2015 = vunpack.c.h.b16 %v685
        %v2016 = vunpack.c.l.b16 %v686
        %v2017 = vunpack.c.h.b16 %v686
        %v2018 = vunpack.c.l.b16 %v687
        %v2019 = vunpack.c.h.b16 %v687
        %v2020 = vunpack.c.l.b16 %v688
        %v2021 = vunpack.c.h.b16 %v688
        %v2022 = vunpack.c.l.b16 %v689
        %v2023 = vunpack.c.h.b16 %v689
        %v2024 = vunpack.c.l.b16 %v690
        %v2025 = vunpack.c.h.b16 %v690
        %v2026 = vunpack.c.l.b16 %v691
        %v2027 = vunpack.c.h.b16 %v691
        %v2028 = vunpack.c.l.b16 %v692
        %v2029 = vunpack.c.h.b16 %v692
        %v2030 = vunpack.c.l.b16 %v693
        %v2031 = vunpack.c.h.b16 %v693
        %v2032 = vunpack.c.l.b16 %v694
        %v2033 = vunpack.c.h.b16 %v694
        %v2034 = vunpack.c.l.b16 %v695
        %v2035 = vunpack.c.h.b16 %v695
        %v2036 = vunpack.c.l.b16 %v696
        %v2037 = vunpack.c.h.b16 %v696
        %v2038 = vunpack.c.l.b16 %v697
        %v2039 = vunpack.c.h.b16 %v697
        %v2040 = vunpack.c.l.b16 %v698
        %v2041 = vunpack.c.h.b16 %v698
        %v2042 = vunpack.c.l.b16 %v699
        %v2043 = vunpack.c.h.b16 %v699
        %v2044 = vunpack.c.l.b16 %v700
        %v2045 = vunpack.c.h.b16 %v700
        %v2046 = vunpack.c.l.b16 %v701
        %v2047 = vunpack.c.h.b16 %v701
        %v2048 = vunpack.c.l.b16 %v702
        %v2049 = vunpack.c.h.b16 %v702
        %v2050 = vunpack.c.l.b16 %v703
        %v2051 = vunpack.c.h.b16 %v703
        %v2052 = vunpack.c.l.b16 %v704
        %v2053 = vunpack.c.h.b16 %v704
        %v2054 = vunpack.c.l.b16 %v705
        %v2055 = vunpack.c.h.b16 %v705
        %v2056 = vunpack.c.l.b16 %v706
        %v2057 = vunpack.c.h.b16 %v706
        %v2058 = vunpack.c.l.b16 %v707
        %v2059 = vunpack.c.h.b16 %v707
        %v2060 = vunpack.c.l.b16 %v708
        %v2061 = vunpack.c.h.b16 %v708
        %v2062 = vunpack.c.l.b16 %v709
        %v2063 = vunpack.c.h.b16 %v709
        %v2064 = vunpack.c.l.b16 %v710
        %v2065 = vunpack.c.h.b16 %v710
        %v2066 = vunpack.c.l.b16 %v711
        %v2067 = vunpack.c.h.b16 %v711
        %v2068 = vunpack.c.l.b16 %v712
        %v2069 = vunpack.c.h.b16 %v712
        %v2070 = vunpack.c.l.b16 %v713
        %v2071 = vunpack.c.h.b16 %v713
        %v2072 = vunpack.c.l.b16 %v714
        %v2073 = vunpack.c.h.b16 %v714
        %v2074 = vunpack.c.l.b16 %v715
        %v2075 = vunpack.c.h.b16 %v715
        %v2076 = vunpack.c.l.b16 %v716
        %v2077 = vunpack.c.h.b16 %v716
        %v2078 = vunpack.c.l.b16 %v717
        %v2079 = vunpack.c.h.b16 %v717
        %v2080 = vunpack.c.l.b16 %v718
        %v2081 = vunpack.c.h.b16 %v718
        %v2082 = vunpack.c.l.b16 %v719
        %v2083 = vunpack.c.h.b16 %v719
        %v2084 = vunpack.c.l.b16 %v720
        %v2085 = vunpack.c.h.b16 %v720
        %v2086 = vunpack.c.l.b16 %v721
        %v2087 = vunpack.c.h.b16 %v721
        %v2088 = vunpack.c.l.b16 %v722
        %v2089 = vunpack.c.h.b16 %v722
        %v2090 = vunpack.c.l.b16 %v723
        %v2091 = vunpack.c.h.b16 %v723
        %v2092 = vunpack.c.l.b16 %v724
        %v2093 = vunpack.c.h.b16 %v724
        %v2094 = vunpack.c.l.b16 %v725
        %v2095 = vunpack.c.h.b16 %v725
        %v2096 = vunpack.c.l.b16 %v726
        %v2097 = vunpack.c.h.b16 %v726
        %v2098 = vunpack.c.l.b16 %v727
        %v2099 = vunpack.c.h.b16 %v727
        %v2100 = vunpack.c.l.b16 %v728
        %v2101 = vunpack.c.h.b16 %v728
        %v2102 = vunpack.c.l.b16 %v729
        %v2103 = vunpack.c.h.b16 %v729
        %v2104 = vunpack.c.l.b16 %v730
        %v2105 = vunpack.c.h.b16 %v730
        %v2106 = vunpack.c.l.b16 %v731
        %v2107 = vunpack.c.h.b16 %v731
        %v2108 = vunpack.c.l.b16 %v732
        %v2109 = vunpack.c.h.b16 %v732
        %v2110 = vunpack.c.l.b16 %v733
        %v2111 = vunpack.c.h.b16 %v733
        %v2112 = vunpack.c.l.b16 %v734
        %v2113 = vunpack.c.h.b16 %v734
        %v2114 = vunpack.c.l.b16 %v735
        %v2115 = vunpack.c.h.b16 %v735
        %v2116 = vunpack.c.l.b16 %v736
        %v2117 = vunpack.c.h.b16 %v736
        %v2118 = vunpack.c.l.b16 %v737
        %v2119 = vunpack.c.h.b16 %v737
        %v2120 = vunpack.c.l.b16 %v738
        %v2121 = vunpack.c.h.b16 %v738
        %v2122 = vunpack.c.l.b16 %v739
        %v2123 = vunpack.c.h.b16 %v739
        %v2124 = vunpack.c.l.b16 %v740
        %v2125 = vunpack.c.h.b16 %v740
        %v2126 = vunpack.c.l.b16 %v741
        %v2127 = vunpack.c.h.b16 %v741
        %v2128 = vunpack.c.l.b16 %v742
        %v2129 = vunpack.c.h.b16 %v742
        %v2130 = vunpack.c.l.b16 %v743
        %v2131 = vunpack.c.h.b16 %v743
        %v2132 = vunpack.c.l.b16 %v744
        %v2133 = vunpack.c.h.b16 %v744
        %v2134 = vunpack.c.l.b16 %v745
        %v2135 = vunpack.c.h.b16 %v745
        %v2136 = vunpack.c.l.b16 %v746
        %v2137 = vunpack.c.h.b16 %v746
        %v2138 = vunpack.c.l.b16 %v747
        %v2139 = vunpack.c.h.b16 %v747
        %v2140 = vunpack.c.l.b16 %v748
        %v2141 = vunpack.c.h.b16 %v748
        %v2142 = vunpack.c.l.b16 %v749
        %v2143 = vunpack.c.h.b16 %v749
        %v2144 = vunpack.c.l.b16 %v750
        %v2145 = vunpack.c.h.b16 %v750
        %v2146 = vunpack.c.l.b16 %v751
        %v2147 = vunpack.c.h.b16 %v751
        %v2148 = vunpack.c.l.b16 %v752
        %v2149 = vunpack.c.h.b16 %v752
        %v2150 = vunpack.c.l.b16 %v753
        %v2151 = vunpack.c.h.b16 %v753
        %v2152 = vunpack.c.l.b16 %v754
        %v2153 = vunpack.c.h.b16 %v754
        %v2154 = vunpack.c.l.b16 %v755
        %v2155 = vunpack.c.h.b16 %v755
        %v2156 = vunpack.c.l.b16 %v756
        %v2157 = vunpack.c.h.b16 %v756
        %v2158 = vunpack.c.l.b16 %v757
        %v2159 = vunpack.c.h.b16 %v757
        %v2160 = vunpack.c.l.b16 %v758
        %v2161 = vunpack.c.h.b16 %v758
        %v2162 = vunpack.c.l.b16 %v759
        %v2163 = vunpack.c.h.b16 %v759
        %v2164 = vunpack.c.l.b16 %v760
        %v2165 = vunpack.c.h.b16 %v760
        %v2166 = vunpack.c.l.b16 %v761
        %v2167 = vunpack.c.h.b16 %v761
        %v2168 = vunpack.c.l.b16 %v762
        %v2169 = vunpack.c.h.b16 %v762
        %v2170 = vunpack.c.l.b16 %v763
        %v2171 = vunpack.c.h.b16 %v763
        %v2172 = vunpack.c.l.b16 %v764
        %v2173 = vunpack.c.h.b16 %v764
        %v2174 = vunpack.c.l.b16 %v765
        %v2175 = vunpack.c.h.b16 %v765
        %v2176 = vunpack.c.l.b16 %v766
        %v2177 = vunpack.c.h.b16 %v766
        %v2178 = vunpack.c.l.b16 %v767
        %v2179 = vunpack.c.h.b16 %v767
        %v2180 = vunpack.c.l.b16 %v768
        %v2181 = vunpack.c.h.b16 %v768
        %v2182 = vunpack.c.l.b16 %v769
        %v2183 = vunpack.c.h.b16 %v769
        %v2184 = vunpack.c.l.b16 %v770
        %v2185 = vunpack.c.h.b16 %v770
        %v2186 = vunpack.c.l.b16 %v771
        %v2187 = vunpack.c.h.b16 %v771
        %v2188 = vunpack.c.l.b16 %v772
        %v2189 = vunpack.c.h.b16 %v772
        %v2190 = vunpack.c.l.b16 %v773
        %v2191 = vunpack.c.h.b16 %v773
        %v2192 = vunpack.c.l.b16 %v774
        %v2193 = vunpack.c.h.b16 %v774
        %v2194 = vunpack.c.l.b16 %v775
        %v2195 = vunpack.c.h.b16 %v775
        %v2196 = vunpack.c.l.b16 %v776
        %v2197 = vunpack.c.h.b16 %v776
        %v2198 = vunpack.c.l.b16 %v777
        %v2199 = vunpack.c.h.b16 %v777
        %v2200 = vunpack.c.l.b16 %v778
        %v2201 = vunpack.c.h.b16 %v778
        %v2202 = vunpack.c.l.b16 %v779
        %v2203 = vunpack.c.h.b16 %v779
        %v2204 = vunpack.c.l.b16 %v780
        %v2205 = vunpack.c.h.b16 %v780
        %v2206 = vunpack.c.l.b16 %v781
        %v2207 = vunpack.c.h.b16 %v781
        %v2208 = vunpack.c.l.b16 %v782
        %v2209 = vunpack.c.h.b16 %v782
        %v2210 = vunpack.c.l.b16 %v783
        %v2211 = vunpack.c.h.b16 %v783
        %v2212 = vunpack.c.l.b16 %v784
        %v2213 = vunpack.c.h.b16 %v784
        %v2214 = vunpack.c.l.b16 %v785
        %v2215 = vunpack.c.h.b16 %v785
        %v2216 = vunpack.c.l.b16 %v786
        %v2217 = vunpack.c.h.b16 %v786
        %v2218 = vunpack.c.l.b16 %v787
        %v2219 = vunpack.c.h.b16 %v787
        %v2220 = vunpack.c.l.b16 %v788
        %v2221 = vunpack.c.h.b16 %v788
        %v2222 = vunpack.c.l.b16 %v789
        %v2223 = vunpack.c.h.b16 %v789
        %v2224 = vunpack.c.l.b16 %v790
        %v2225 = vunpack.c.h.b16 %v790
        %v2226 = vunpack.c.l.b16 %v791
        %v2227 = vunpack.c.h.b16 %v791
        %v2228 = vunpack.c.l.b16 %v792
        %v2229 = vunpack.c.h.b16 %v792
        %v2230 = vunpack.c.l.b16 %v793
        %v2231 = vunpack.c.h.b16 %v793
        %v2232 = vunpack.c.l.b16 %v794
        %v2233 = vunpack.c.h.b16 %v794
        %v2234 = vunpack.c.l.b16 %v795
        %v2235 = vunpack.c.h.b16 %v795
        %v2236 = vunpack.c.l.b16 %v796
        %v2237 = vunpack.c.h.b16 %v796
        %v2238 = vunpack.c.l.b16 %v797
        %v2239 = vunpack.c.h.b16 %v797
        %v2240 = vunpack.c.l.b16 %v798
        %v2241 = vunpack.c.h.b16 %v798
        %v2242 = vunpack.c.l.b16 %v799
        %v2243 = vunpack.c.h.b16 %v799
        %v2244 = vunpack.c.l.b16 %v800
        %v2245 = vunpack.c.h.b16 %v800
        %v2246 = vunpack.c.l.b16 %v801
        %v2247 = vunpack.c.h.b16 %v801
        %v2248 = vunpack.c.l.b16 %v802
        %v2249 = vunpack.c.h.b16 %v802
        %v2250 = vunpack.c.l.b16 %v803
        %v2251 = vunpack.c.h.b16 %v803
        %v2252 = vunpack.c.l.b16 %v804
        %v2253 = vunpack.c.h.b16 %v804
        %v2254 = vunpack.c.l.b16 %v805
        %v2255 = vunpack.c.h.b16 %v805
        %v2256 = vunpack.c.l.b16 %v806
        %v2257 = vunpack.c.h.b16 %v806
        %v2258 = vunpack.c.l.b16 %v807
        %v2259 = vunpack.c.h.b16 %v807
        %v2260 = vunpack.c.l.b16 %v808
        %v2261 = vunpack.c.h.b16 %v808
        %v2262 = vunpack.c.l.b16 %v809
        %v2263 = vunpack.c.h.b16 %v809
        %v2264 = vunpack.c.l.b16 %v810
        %v2265 = vunpack.c.h.b16 %v810
        %v2266 = vunpack.c.l.b16 %v811
        %v2267 = vunpack.c.h.b16 %v811
        %v2268 = vunpack.c.l.b16 %v812
        %v2269 = vunpack.c.h.b16 %v812
        %v2270 = vunpack.c.l.b16 %v813
        %v2271 = vunpack.c.h.b16 %v813
        %v2272 = vunpack.c.l.b16 %v814
        %v2273 = vunpack.c.h.b16 %v814
        %v2274 = vunpack.c.l.b16 %v815
        %v2275 = vunpack.c.h.b16 %v815
        %v2276 = vunpack.c.l.b16 %v816
        %v2277 = vunpack.c.h.b16 %v816
        %v2278 = vunpack.c.l.b16 %v817
        %v2279 = vunpack.c.h.b16 %v817
        %v2280 = vunpack.c.l.b16 %v818
        %v2281 = vunpack.c.h.b16 %v818
        %v2282 = vunpack.c.l.b16 %v819
        %v2283 = vunpack.c.h.b16 %v819
        %v2284 = vunpack.c.l.b16 %v820
        %v2285 = vunpack.c.h.b16 %v820
        %v2286 = vunpack.c.l.b16 %v821
        %v2287 = vunpack.c.h.b16 %v821
        %v2288 = vunpack.c.l.b16 %v822
        %v2289 = vunpack.c.h.b16 %v822
        %v2290 = vunpack.c.l.b16 %v823
        %v2291 = vunpack.c.h.b16 %v823
        %v2292 = vunpack.c.l.b16 %v824
        %v2293 = vunpack.c.h.b16 %v824
        %v2294 = vunpack.c.l.b16 %v825
        %v2295 = vunpack.c.h.b16 %v825
        %v2296 = vunpack.c.l.b16 %v826
        %v2297 = vunpack.c.h.b16 %v826
        %v2298 = vunpack.c.l.b16 %v827
        %v2299 = vunpack.c.h.b16 %v827
        %v2300 = vunpack.c.l.b16 %v828
        %v2301 = vunpack.c.h.b16 %v828
        %v2302 = vunpack.c.l.b16 %v829
        %v2303 = vunpack.c.h.b16 %v829
        %v2304 = vunpack.c.l.b16 %v830
        %v2305 = vunpack.c.h.b16 %v830
        %v2306 = vunpack.c.l.b16 %v831
        %v2307 = vunpack.c.h.b16 %v831
        %v2308 = vunpack.c.l.b16 %v832
        %v2309 = vunpack.c.h.b16 %v832
        %v2310 = vunpack.c.l.b16 %v833
        %v2311 = vunpack.c.h.b16 %v833
        %v2312 = vunpack.c.l.b16 %v834
        %v2313 = vunpack.c.h.b16 %v834
        %v2314 = vunpack.c.l.b16 %v835
        %v2315 = vunpack.c.h.b16 %v835
        %v2316 = vunpack.c.l.b16 %v836
        %v2317 = vunpack.c.h.b16 %v836
        %v2318 = vunpack.c.l.b16 %v837
        %v2319 = vunpack.c.h.b16 %v837
        %v2320 = vunpack.c.l.b16 %v838
        %v2321 = vunpack.c.h.b16 %v838
        %v2322 = vunpack.c.l.b16 %v839
        %v2323 = vunpack.c.h.b16 %v839
        %v2324 = vunpack.c.l.b16 %v840
        %v2325 = vunpack.c.h.b16 %v840
        %v2326 = vunpack.c.l.b16 %v841
        %v2327 = vunpack.c.h.b16 %v841
        %v2328 = vunpack.c.l.b16 %v842
        %v2329 = vunpack.c.h.b16 %v842
        %v2330 = vunpack.c.l.b16 %v843
        %v2331 = vunpack.c.h.b16 %v843
        %v2332 = vunpack.c.l.b16 %v844
        %v2333 = vunpack.c.h.b16 %v844
        %v2334 = vunpack.c.l.b16 %v845
        %v2335 = vunpack.c.h.b16 %v845
        %v2336 = vunpack.c.l.b16 %v846
        %v2337 = vunpack.c.h.b16 %v846
        %v2338 = vunpack.c.l.b16 %v847
        %v2339 = vunpack.c.h.b16 %v847
        %v2340 = vunpack.c.l.b16 %v848
        %v2341 = vunpack.c.h.b16 %v848
        %v2342 = vunpack.c.l.b16 %v849
        %v2343 = vunpack.c.h.b16 %v849
        %v2344 = vunpack.c.l.b16 %v850
        %v2345 = vunpack.c.h.b16 %v850
        %v2346 = vunpack.c.l.b16 %v851
        %v2347 = vunpack.c.h.b16 %v851
        %v2348 = vunpack.c.l.b16 %v852
        %v2349 = vunpack.c.h.b16 %v852
        %v2350 = vunpack.c.l.b16 %v853
        %v2351 = vunpack.c.h.b16 %v853
        %v2352 = vunpack.c.l.b16 %v854
        %v2353 = vunpack.c.h.b16 %v854
        %v2354 = vunpack.c.l.b16 %v855
        %v2355 = vunpack.c.h.b16 %v855
        %v2356 = vunpack.c.l.b16 %v856
        %v2357 = vunpack.c.h.b16 %v856
        %v2358 = vunpack.c.l.b16 %v857
        %v2359 = vunpack.c.h.b16 %v857
        %v2360 = vunpack.c.l.b16 %v858
        %v2361 = vunpack.c.h.b16 %v858
        %v2362 = vunpack.c.l.b16 %v859
        %v2363 = vunpack.c.h.b16 %v859
        %v2364 = vunpack.c.l.b16 %v860
        %v2365 = vunpack.c.h.b16 %v860
        %v2366 = vunpack.c.l.b16 %v861
        %v2367 = vunpack.c.h.b16 %v861
        %v2368 = vunpack.c.l.b16 %v862
        %v2369 = vunpack.c.h.b16 %v862
        %v2370 = vunpack.c.l.b16 %v863
        %v2371 = vunpack.c.h.b16 %v863
        %v2372 = vunpack.c.l.b16 %v864
        %v2373 = vunpack.c.h.b16 %v864
        %v2374 = vunpack.c.l.b16 %v865
        %v2375 = vunpack.c.h.b16 %v865
        %v2376 = vunpack.c.l.b16 %v866
        %v2377 = vunpack.c.h.b16 %v866
        %v2378 = vunpack.c.l.b16 %v867
        %v2379 = vunpack.c.h.b16 %v867
        %v2380 = vunpack.c.l.b16 %v868
        %v2381 = vunpack.c.h.b16 %v868
        %v2382 = vunpack.c.l.b16 %v869
        %v2383 = vunpack.c.h.b16 %v869
        %v2384 = vunpack.c.l.b16 %v870
        %v2385 = vunpack.c.h.b16 %v870
        %v2386 = vunpack.c.l.b16 %v871
        %v2387 = vunpack.c.h.b16 %v871
        %v2388 = vunpack.c.l.b16 %v872
        %v2389 = vunpack.c.h.b16 %v872
        %v2390 = vunpack.c.l.b16 %v873
        %v2391 = vunpack.c.h.b16 %v873
        %v2392 = vunpack.c.l.b16 %v874
        %v2393 = vunpack.c.h.b16 %v874
        %v2394 = vunpack.c.l.b16 %v875
        %v2395 = vunpack.c.h.b16 %v875
        %v2396 = vunpack.c.l.b16 %v876
        %v2397 = vunpack.c.h.b16 %v876
        %v2398 = vunpack.c.l.b16 %v877
        %v2399 = vunpack.c.h.b16 %v877
        %v2400 = vunpack.c.l.b16 %v878
        %v2401 = vunpack.c.h.b16 %v878
        %v2402 = vunpack.c.l.b16 %v879
        %v2403 = vunpack.c.h.b16 %v879
        %v2404 = vunpack.c.l.b16 %v880
        %v2405 = vunpack.c.h.b16 %v880
        %v2406 = vunpack.c.l.b16 %v881
        %v2407 = vunpack.c.h.b16 %v881
        %v2408 = vunpack.c.l.b16 %v882
        %v2409 = vunpack.c.h.b16 %v882
        %v2410 = vunpack.c.l.b16 %v883
        %v2411 = vunpack.c.h.b16 %v883
        %v2412 = vunpack.c.l.b16 %v884
        %v2413 = vunpack.c.h.b16 %v884
        %v2414 = vunpack.c.l.b16 %v885
        %v2415 = vunpack.c.h.b16 %v885
        %v2416 = vunpack.c.l.b16 %v886
        %v2417 = vunpack.c.h.b16 %v886
        %v2418 = vunpack.c.l.b16 %v887
        %v2419 = vunpack.c.h.b16 %v887
        %v2420 = vunpack.c.l.b16 %v888
        %v2421 = vunpack.c.h.b16 %v888
        %v2422 = vunpack.c.l.b16 %v889
        %v2423 = vunpack.c.h.b16 %v889
        %v2424 = vunpack.c.l.b16 %v890
        %v2425 = vunpack.c.h.b16 %v890
        %v2426 = vunpack.c.l.b16 %v891
        %v2427 = vunpack.c.h.b16 %v891
        %v2428 = vunpack.c.l.b16 %v892
        %v2429 = vunpack.c.h.b16 %v892
        %v2430 = vunpack.c.l.b16 %v893
        %v2431 = vunpack.c.h.b16 %v893
        %v2432 = vunpack.c.l.b16 %v894
        %v2433 = vunpack.c.h.b16 %v894
        %v2434 = vunpack.c.l.b16 %v895
        %v2435 = vunpack.c.h.b16 %v895
        %v2436 = vunpack.c.l.b16 %v896
        %v2437 = vunpack.c.h.b16 %v896
        %v2438 = vunpack.c.l.b16 %v897
        %v2439 = vunpack.c.h.b16 %v897
        %v2440 = vunpack.c.l.b16 %v898
        %v2441 = vunpack.c.h.b16 %v898
        %v2442 = vunpack.c.l.b16 %v899
        %v2443 = vunpack.c.h.b16 %v899
        %v2444 = vunpack.c.l.b16 %v900
        %v2445 = vunpack.c.h.b16 %v900
        %v2446 = vunpack.c.l.b16 %v901
        %v2447 = vunpack.c.h.b16 %v901
        %v2448 = vunpack.c.l.b16 %v902
        %v2449 = vunpack.c.h.b16 %v902
        %v2450 = vunpack.c.l.b16 %v903
        %v2451 = vunpack.c.h.b16 %v903
        %v2452 = vunpack.c.l.b16 %v904
        %v2453 = vunpack.c.h.b16 %v904
        %v2454 = vunpack.c.l.b16 %v905
        %v2455 = vunpack.c.h.b16 %v905
        %v2456 = vunpack.c.l.b16 %v906
        %v2457 = vunpack.c.h.b16 %v906
        %v2458 = vunpack.c.l.b16 %v907
        %v2459 = vunpack.c.h.b16 %v907
        %v2460 = vunpack.c.l.b16 %v908
        %v2461 = vunpack.c.h.b16 %v908
        %v2462 = vunpack.c.l.b16 %v909
        %v2463 = vunpack.c.h.b16 %v909
        %v2464 = vpack.c.b16 %v1448, %v1440
        %v2465 = vpack.c.b16 %v1449, %v1441
        %v2466 = vpack.c.b16 %v1450, %v1442
        %v2467 = vpack.c.b16 %v1451, %v1443
        %v2468 = vpack.c.b16 %v1452, %v1444
        %v2469 = vpack.c.b16 %v1453, %v1445
        %v2470 = vpack.c.b16 %v1454, %v1446
        %v2471 = vpack.c.b16 %v1455, %v1447
        %v2472 = vpack.c.b16 %v1464, %v1456
        %v2473 = vpack.c.b16 %v1465, %v1457
        %v2474 = vpack.c.b16 %v1466, %v1458
        %v2475 = vpack.c.b16 %v1467, %v1459
        %v2476 = vpack.c.b16 %v1468, %v1460
        %v2477 = vpack.c.b16 %v1469, %v1461
        %v2478 = vpack.c.b16 %v1470, %v1462
        %v2479 = vpack.c.b16 %v1471, %v1463
        %v2480 = vpack.c.b16 %v1480, %v1472
        %v2481 = vpack.c.b16 %v1481, %v1473
        %v2482 = vpack.c.b16 %v1482, %v1474
        %v2483 = vpack.c.b16 %v1483, %v1475
        %v2484 = vpack.c.b16 %v1484, %v1476
        %v2485 = vpack.c.b16 %v1485, %v1477
        %v2486 = vpack.c.b16 %v1486, %v1478
        %v2487 = vpack.c.b16 %v1487, %v1479
        %v2488 = vpack.c.b16 %v1496, %v1488
        %v2489 = vpack.c.b16 %v1497, %v1489
        %v2490 = vpack.c.b16 %v1498, %v1490
        %v2491 = vpack.c.b16 %v1499, %v1491
        %v2492 = vpack.c.b16 %v1500, %v1492
        %v2493 = vpack.c.b16 %v1501, %v1493
        %v2494 = vpack.c.b16 %v1502, %v1494
        %v2495 = vpack.c.b16 %v1503, %v1495
        %v2496 = vpack.c.b16 %v1512, %v1504
        %v2497 = vpack.c.b16 %v1513, %v1505
        %v2498 = vpack.c.b16 %v1514, %v1506
        %v2499 = vpack.c.b16 %v1515, %v1507
        %v2500 = vpack.c.b16 %v1516, %v1508
        %v2501 = vpack.c.b16 %v1517, %v1509
        %v2502 = vpack.c.b16 %v1518, %v1510
        %v2503 = vpack.c.b16 %v1519, %v1511
        %v2504 = vpack.c.b16 %v1528, %v1520
        %v2505 = vpack.c.b16 %v1529, %v1521
        %v2506 = vpack.c.b16 %v1530, %v1522
        %v2507 = vpack.c.b16 %v1531, %v1523
        %v2508 = vpack.c.b16 %v1532, %v1524
        %v2509 = vpack.c.b16 %v1533, %v1525
        %v2510 = vpack.c.b16 %v1534, %v1526
        %v2511 = vpack.c.b16 %v1535, %v1527
        %v2512 = vpack.c.b16 %v1544, %v1536
        %v2513 = vpack.c.b16 %v1545, %v1537
        %v2514 = vpack.c.b16 %v1546, %v1538
        %v2515 = vpack.c.b16 %v1547, %v1539
        %v2516 = vpack.c.b16 %v1548, %v1540
        %v2517 = vpack.c.b16 %v1549, %v1541
        %v2518 = vpack.c.b16 %v1550, %v1542
        %v2519 = vpack.c.b16 %v1551, %v1543
        %v2520 = vpack.c.b16 %v1560, %v1552
        %v2521 = vpack.c.b16 %v1561, %v1553
        %v2522 = vpack.c.b16 %v1562, %v1554
        %v2523 = vpack.c.b16 %v1563, %v1555
        %v2524 = vpack.c.b16 %v1564, %v1556
        %v2525 = vpack.c.b16 %v1565, %v1557
        %v2526 = vpack.c.b16 %v1566, %v1558
        %v2527 = vpack.c.b16 %v1567, %v1559
        %v2528 = vpack.c.b16 %v1576, %v1568
        %v2529 = vpack.c.b16 %v1577, %v1569
        %v2530 = vpack.c.b16 %v1578, %v1570
        %v2531 = vpack.c.b16 %v1579, %v1571
        %v2532 = vpack.c.b16 %v1580, %v1572
        %v2533 = vpack.c.b16 %v1581, %v1573
        %v2534 = vpack.c.b16 %v1582, %v1574
        %v2535 = vpack.c.b16 %v1583, %v1575
        %v2536 = vpack.c.b16 %v1592, %v1584
        %v2537 = vpack.c.b16 %v1593, %v1585
        %v2538 = vpack.c.b16 %v1594, %v1586
        %v2539 = vpack.c.b16 %v1595, %v1587
        %v2540 = vpack.c.b16 %v1596, %v1588
        %v2541 = vpack.c.b16 %v1597, %v1589
        %v2542 = vpack.c.b16 %v1598, %v1590
        %v2543 = vpack.c.b16 %v1599, %v1591
        %v2544 = vpack.c.b16 %v1608, %v1600
        %v2545 = vpack.c.b16 %v1609, %v1601
        %v2546 = vpack.c.b16 %v1610, %v1602
        %v2547 = vpack.c.b16 %v1611, %v1603
        %v2548 = vpack.c.b16 %v1612, %v1604
        %v2549 = vpack.c.b16 %v1613, %v1605
        %v2550 = vpack.c.b16 %v1614, %v1606
        %v2551 = vpack.c.b16 %v1615, %v1607
        %v2552 = vpack.c.b16 %v1624, %v1616
        %v2553 = vpack.c.b16 %v1625, %v1617
        %v2554 = vpack.c.b16 %v1626, %v1618
        %v2555 = vpack.c.b16 %v1627, %v1619
        %v2556 = vpack.c.b16 %v1628, %v1620
        %v2557 = vpack.c.b16 %v1629, %v1621
        %v2558 = vpack.c.b16 %v1630, %v1622
        %v2559 = vpack.c.b16 %v1631, %v1623
        %v2560 = vpack.c.b16 %v1640, %v1632
        %v2561 = vpack.c.b16 %v1641, %v1633
        %v2562 = vpack.c.b16 %v1642, %v1634
        %v2563 = vpack.c.b16 %v1643, %v1635
        %v2564 = vpack.c.b16 %v1644, %v1636
        %v2565 = vpack.c.b16 %v1645, %v1637
        %v2566 = vpack.c.b16 %v1646, %v1638
        %v2567 = vpack.c.b16 %v1647, %v1639
        %v2568 = vpack.c.b16 %v1656, %v1648
        %v2569 = vpack.c.b16 %v1657, %v1649
        %v2570 = vpack.c.b16 %v1658, %v1650
        %v2571 = vpack.c.b16 %v1659, %v1651
        %v2572 = vpack.c.b16 %v1660, %v1652
        %v2573 = vpack.c.b16 %v1661, %v1653
        %v2574 = vpack.c.b16 %v1662, %v1654
        %v2575 = vpack.c.b16 %v1663, %v1655
        %v2576 = vpack.c.b16 %v1672, %v1664
        %v2577 = vpack.c.b16 %v1673, %v1665
        %v2578 = vpack.c.b16 %v1674, %v1666
        %v2579 = vpack.c.b16 %v1675, %v1667
        %v2580 = vpack.c.b16 %v1676, %v1668
        %v2581 = vpack.c.b16 %v1677, %v1669
        %v2582 = vpack.c.b16 %v1678, %v1670
        %v2583 = vpack.c.b16 %v1679, %v1671
        %v2584 = vpack.c.b16 %v1688, %v1680
        %v2585 = vpack.c.b16 %v1689, %v1681
        %v2586 = vpack.c.b16 %v1690, %v1682
        %v2587 = vpack.c.b16 %v1691, %v1683
        %v2588 = vpack.c.b16 %v1692, %v1684
        %v2589 = vpack.c.b16 %v1693, %v1685
        %v2590 = vpack.c.b16 %v1694, %v1686
        %v2591 = vpack.c.b16 %v1695, %v1687
        %v2592 = vpack.c.b16 %v1704, %v1696
        %v2593 = vpack.c.b16 %v1705, %v1697
        %v2594 = vpack.c.b16 %v1706, %v1698
        %v2595 = vpack.c.b16 %v1707, %v1699
        %v2596 = vpack.c.b16 %v1708, %v1700
        %v2597 = vpack.c.b16 %v1709, %v1701
        %v2598 = vpack.c.b16 %v1710, %v1702
        %v2599 = vpack.c.b16 %v1711, %v1703
        %v2600 = vpack.c.b16 %v1720, %v1712
        %v2601 = vpack.c.b16 %v1721, %v1713
        %v2602 = vpack.c.b16 %v1722, %v1714
        %v2603 = vpack.c.b16 %v1723, %v1715
        %v2604 = vpack.c.b16 %v1724, %v1716
        %v2605 = vpack.c.b16 %v1725, %v1717
        %v2606 = vpack.c.b16 %v1726, %v1718
        %v2607 = vpack.c.b16 %v1727, %v1719
        %v2608 = vpack.c.b16 %v1736, %v1728
        %v2609 = vpack.c.b16 %v1737, %v1729
        %v2610 = vpack.c.b16 %v1738, %v1730
        %v2611 = vpack.c.b16 %v1739, %v1731
        %v2612 = vpack.c.b16 %v1740, %v1732
        %v2613 = vpack.c.b16 %v1741, %v1733
        %v2614 = vpack.c.b16 %v1742, %v1734
        %v2615 = vpack.c.b16 %v1743, %v1735
        %v2616 = vpack.c.b16 %v1752, %v1744
        %v2617 = vpack.c.b16 %v1753, %v1745
        %v2618 = vpack.c.b16 %v1754, %v1746
        %v2619 = vpack.c.b16 %v1755, %v1747
        %v2620 = vpack.c.b16 %v1756, %v1748
        %v2621 = vpack.c.b16 %v1757, %v1749
        %v2622 = vpack.c.b16 %v1758, %v1750
        %v2623 = vpack.c.b16 %v1759, %v1751
        %v2624 = vpack.c.b16 %v1768, %v1760
        %v2625 = vpack.c.b16 %v1769, %v1761
        %v2626 = vpack.c.b16 %v1770, %v1762
        %v2627 = vpack.c.b16 %v1771, %v1763
        %v2628 = vpack.c.b16 %v1772, %v1764
        %v2629 = vpack.c.b16 %v1773, %v1765
        %v2630 = vpack.c.b16 %v1774, %v1766
        %v2631 = vpack.c.b16 %v1775, %v1767
        %v2632 = vpack.c.b16 %v1784, %v1776
        %v2633 = vpack.c.b16 %v1785, %v1777
        %v2634 = vpack.c.b16 %v1786, %v1778
        %v2635 = vpack.c.b16 %v1787, %v1779
        %v2636 = vpack.c.b16 %v1788, %v1780
        %v2637 = vpack.c.b16 %v1789, %v1781
        %v2638 = vpack.c.b16 %v1790, %v1782
        %v2639 = vpack.c.b16 %v1791, %v1783
        %v2640 = vpack.c.b16 %v1800, %v1792
        %v2641 = vpack.c.b16 %v1801, %v1793
        %v2642 = vpack.c.b16 %v1802, %v1794
        %v2643 = vpack.c.b16 %v1803, %v1795
        %v2644 = vpack.c.b16 %v1804, %v1796
        %v2645 = vpack.c.b16 %v1805, %v1797
        %v2646 = vpack.c.b16 %v1806, %v1798
        %v2647 = vpack.c.b16 %v1807, %v1799
        %v2648 = vpack.c.b16 %v1816, %v1808
        %v2649 = vpack.c.b16 %v1817, %v1809
        %v2650 = vpack.c.b16 %v1818, %v1810
        %v2651 = vpack.c.b16 %v1819, %v1811
        %v2652 = vpack.c.b16 %v1820, %v1812
        %v2653 = vpack.c.b16 %v1821, %v1813
        %v2654 = vpack.c.b16 %v1822, %v1814
        %v2655 = vpack.c.b16 %v1823, %v1815
        %v2656 = vpack.c.b16 %v1832, %v1824
        %v2657 = vpack.c.b16 %v1833, %v1825
        %v2658 = vpack.c.b16 %v1834, %v1826
        %v2659 = vpack.c.b16 %v1835, %v1827
        %v2660 = vpack.c.b16 %v1836, %v1828
        %v2661 = vpack.c.b16 %v1837, %v1829
        %v2662 = vpack.c.b16 %v1838, %v1830
        %v2663 = vpack.c.b16 %v1839, %v1831
        %v2664 = vpack.c.b16 %v1848, %v1840
        %v2665 = vpack.c.b16 %v1849, %v1841
        %v2666 = vpack.c.b16 %v1850, %v1842
        %v2667 = vpack.c.b16 %v1851, %v1843
        %v2668 = vpack.c.b16 %v1852, %v1844
        %v2669 = vpack.c.b16 %v1853, %v1845
        %v2670 = vpack.c.b16 %v1854, %v1846
        %v2671 = vpack.c.b16 %v1855, %v1847
        %v2672 = vpack.c.b16 %v1864, %v1856
        %v2673 = vpack.c.b16 %v1865, %v1857
        %v2674 = vpack.c.b16 %v1866, %v1858
        %v2675 = vpack.c.b16 %v1867, %v1859
        %v2676 = vpack.c.b16 %v1868, %v1860
        %v2677 = vpack.c.b16 %v1869, %v1861
        %v2678 = vpack.c.b16 %v1870, %v1862
        %v2679 = vpack.c.b16 %v1871, %v1863
        %v2680 = vpack.c.b16 %v1880, %v1872
        %v2681 = vpack.c.b16 %v1881, %v1873
        %v2682 = vpack.c.b16 %v1882, %v1874
        %v2683 = vpack.c.b16 %v1883, %v1875
        %v2684 = vpack.c.b16 %v1884, %v1876
        %v2685 = vpack.c.b16 %v1885, %v1877
        %v2686 = vpack.c.b16 %v1886, %v1878
        %v2687 = vpack.c.b16 %v1887, %v1879
        %v2688 = vpack.c.b16 %v1896, %v1888
        %v2689 = vpack.c.b16 %v1897, %v1889
        %v2690 = vpack.c.b16 %v1898, %v1890
        %v2691 = vpack.c.b16 %v1899, %v1891
        %v2692 = vpack.c.b16 %v1900, %v1892
        %v2693 = vpack.c.b16 %v1901, %v1893
        %v2694 = vpack.c.b16 %v1902, %v1894
        %v2695 = vpack.c.b16 %v1903, %v1895
        %v2696 = vpack.c.b16 %v1912, %v1904
        %v2697 = vpack.c.b16 %v1913, %v1905
        %v2698 = vpack.c.b16 %v1914, %v1906
        %v2699 = vpack.c.b16 %v1915, %v1907
        %v2700 = vpack.c.b16 %v1916, %v1908
        %v2701 = vpack.c.b16 %v1917, %v1909
        %v2702 = vpack.c.b16 %v1918, %v1910
        %v2703 = vpack.c.b16 %v1919, %v1911
        %v2704 = vpack.c.b16 %v1928, %v1920
        %v2705 = vpack.c.b16 %v1929, %v1921
        %v2706 = vpack.c.b16 %v1930, %v1922
        %v2707 = vpack.c.b16 %v1931, %v1923
        %v2708 = vpack.c.b16 %v1932, %v1924
        %v2709 = vpack.c.b16 %v1933, %v1925
        %v2710 = vpack.c.b16 %v1934, %v1926
        %v2711 = vpack.c.b16 %v1935, %v1927
        %v2712 = vpack.c.b16 %v1944, %v1936
        %v2713 = vpack.c.b16 %v1945, %v1937
        %v2714 = vpack.c.b16 %v1946, %v1938
        %v2715 = vpack.c.b16 %v1947, %v1939
        %v2716 = vpack.c.b16 %v1948, %v1940
        %v2717 = vpack.c.b16 %v1949, %v1941
        %v2718 = vpack.c.b16 %v1950, %v1942
        %v2719 = vpack.c.b16 %v1951, %v1943
        %v2720 = vpack.c.b16 %v1960, %v1952
        %v2721 = vpack.c.b16 %v1961, %v1953
        %v2722 = vpack.c.b16 %v1962, %v1954
        %v2723 = vpack.c.b16 %v1963, %v1955
        %v2724 = vpack.c.b16 %v1964, %v1956
        %v2725 = vpack.c.b16 %v1965, %v1957
        %v2726 = vpack.c.b16 %v1966, %v1958
        %v2727 = vpack.c.b16 %v1967, %v1959
        %v2728 = vpack.c.b16 %v1976, %v1968
        %v2729 = vpack.c.b16 %v1977, %v1969
        %v2730 = vpack.c.b16 %v1978, %v1970
        %v2731 = vpack.c.b16 %v1979, %v1971
        %v2732 = vpack.c.b16 %v1980, %v1972
        %v2733 = vpack.c.b16 %v1981, %v1973
        %v2734 = vpack.c.b16 %v1982, %v1974
        %v2735 = vpack.c.b16 %v1983, %v1975
        %v2736 = vpack.c.b16 %v1992, %v1984
        %v2737 = vpack.c.b16 %v1993, %v1985
        %v2738 = vpack.c.b16 %v1994, %v1986
        %v2739 = vpack.c.b16 %v1995, %v1987
        %v2740 = vpack.c.b16 %v1996, %v1988
        %v2741 = vpack.c.b16 %v1997, %v1989
        %v2742 = vpack.c.b16 %v1998, %v1990
        %v2743 = vpack.c.b16 %v1999, %v1991
        %v2744 = vpack.c.b16 %v2008, %v2000
        %v2745 = vpack.c.b16 %v2009, %v2001
        %v2746 = vpack.c.b16 %v2010, %v2002
        %v2747 = vpack.c.b16 %v2011, %v2003
        %v2748 = vpack.c.b16 %v2012, %v2004
        %v2749 = vpack.c.b16 %v2013, %v2005
        %v2750 = vpack.c.b16 %v2014, %v2006
        %v2751 = vpack.c.b16 %v2015, %v2007
        %v2752 = vpack.c.b16 %v2024, %v2016
        %v2753 = vpack.c.b16 %v2025, %v2017
        %v2754 = vpack.c.b16 %v2026, %v2018
        %v2755 = vpack.c.b16 %v2027, %v2019
        %v2756 = vpack.c.b16 %v2028, %v2020
        %v2757 = vpack.c.b16 %v2029, %v2021
        %v2758 = vpack.c.b16 %v2030, %v2022
        %v2759 = vpack.c.b16 %v2031, %v2023
        %v2760 = vpack.c.b16 %v2040, %v2032
        %v2761 = vpack.c.b16 %v2041, %v2033
        %v2762 = vpack.c.b16 %v2042, %v2034
        %v2763 = vpack.c.b16 %v2043, %v2035
        %v2764 = vpack.c.b16 %v2044, %v2036
        %v2765 = vpack.c.b16 %v2045, %v2037
        %v2766 = vpack.c.b16 %v2046, %v2038
        %v2767 = vpack.c.b16 %v2047, %v2039
        %v2768 = vpack.c.b16 %v2056, %v2048
        %v2769 = vpack.c.b16 %v2057, %v2049
        %v2770 = vpack.c.b16 %v2058, %v2050
        %v2771 = vpack.c.b16 %v2059, %v2051
        %v2772 = vpack.c.b16 %v2060, %v2052
        %v2773 = vpack.c.b16 %v2061, %v2053
        %v2774 = vpack.c.b16 %v2062, %v2054
        %v2775 = vpack.c.b16 %v2063, %v2055
        %v2776 = vpack.c.b16 %v2072, %v2064
        %v2777 = vpack.c.b16 %v2073, %v2065
        %v2778 = vpack.c.b16 %v2074, %v2066
        %v2779 = vpack.c.b16 %v2075, %v2067
        %v2780 = vpack.c.b16 %v2076, %v2068
        %v2781 = vpack.c.b16 %v2077, %v2069
        %v2782 = vpack.c.b16 %v2078, %v2070
        %v2783 = vpack.c.b16 %v2079, %v2071
        %v2784 = vpack.c.b16 %v2088, %v2080
        %v2785 = vpack.c.b16 %v2089, %v2081
        %v2786 = vpack.c.b16 %v2090, %v2082
        %v2787 = vpack.c.b16 %v2091, %v2083
        %v2788 = vpack.c.b16 %v2092, %v2084
        %v2789 = vpack.c.b16 %v2093, %v2085
        %v2790 = vpack.c.b16 %v2094, %v2086
        %v2791 = vpack.c.b16 %v2095, %v2087
        %v2792 = vpack.c.b16 %v2104, %v2096
        %v2793 = vpack.c.b16 %v2105, %v2097
        %v2794 = vpack.c.b16 %v2106, %v2098
        %v2795 = vpack.c.b16 %v2107, %v2099
        %v2796 = vpack.c.b16 %v2108, %v2100
        %v2797 = vpack.c.b16 %v2109, %v2101
        %v2798 = vpack.c.b16 %v2110, %v2102
        %v2799 = vpack.c.b16 %v2111, %v2103
        %v2800 = vpack.c.b16 %v2120, %v2112
        %v2801 = vpack.c.b16 %v2121, %v2113
        %v2802 = vpack.c.b16 %v2122, %v2114
        %v2803 = vpack.c.b16 %v2123, %v2115
        %v2804 = vpack.c.b16 %v2124, %v2116
        %v2805 = vpack.c.b16 %v2125, %v2117
        %v2806 = vpack.c.b16 %v2126, %v2118
        %v2807 = vpack.c.b16 %v2127, %v2119
        %v2808 = vpack.c.b16 %v2136, %v2128
        %v2809 = vpack.c.b16 %v2137, %v2129
        %v2810 = vpack.c.b16 %v2138, %v2130
        %v2811 = vpack.c.b16 %v2139, %v2131
        %v2812 = vpack.c.b16 %v2140, %v2132
        %v2813 = vpack.c.b16 %v2141, %v2133
        %v2814 = vpack.c.b16 %v2142, %v2134
        %v2815 = vpack.c.b16 %v2143, %v2135
        %v2816 = vpack.c.b16 %v2152, %v2144
        %v2817 = vpack.c.b16 %v2153, %v2145
        %v2818 = vpack.c.b16 %v2154, %v2146
        %v2819 = vpack.c.b16 %v2155, %v2147
        %v2820 = vpack.c.b16 %v2156, %v2148
        %v2821 = vpack.c.b16 %v2157, %v2149
        %v2822 = vpack.c.b16 %v2158, %v2150
        %v2823 = vpack.c.b16 %v2159, %v2151
        %v2824 = vpack.c.b16 %v2168, %v2160
        %v2825 = vpack.c.b16 %v2169, %v2161
        %v2826 = vpack.c.b16 %v2170, %v2162
        %v2827 = vpack.c.b16 %v2171, %v2163
        %v2828 = vpack.c.b16 %v2172, %v2164
        %v2829 = vpack.c.b16 %v2173, %v2165
        %v2830 = vpack.c.b16 %v2174, %v2166
        %v2831 = vpack.c.b16 %v2175, %v2167
        %v2832 = vpack.c.b16 %v2184, %v2176
        %v2833 = vpack.c.b16 %v2185, %v2177
        %v2834 = vpack.c.b16 %v2186, %v2178
        %v2835 = vpack.c.b16 %v2187, %v2179
        %v2836 = vpack.c.b16 %v2188, %v2180
        %v2837 = vpack.c.b16 %v2189, %v2181
        %v2838 = vpack.c.b16 %v2190, %v2182
        %v2839 = vpack.c.b16 %v2191, %v2183
        %v2840 = vpack.c.b16 %v2200, %v2192
        %v2841 = vpack.c.b16 %v2201, %v2193
        %v2842 = vpack.c.b16 %v2202, %v2194
        %v2843 = vpack.c.b16 %v2203, %v2195
        %v2844 = vpack.c.b16 %v2204, %v2196
        %v2845 = vpack.c.b16 %v2205, %v2197
        %v2846 = vpack.c.b16 %v2206, %v2198
        %v2847 = vpack.c.b16 %v2207, %v2199
        %v2848 = vpack.c.b16 %v2216, %v2208
        %v2849 = vpack.c.b16 %v2217, %v2209
        %v2850 = vpack.c.b16 %v2218, %v2210
        %v2851 = vpack.c.b16 %v2219, %v2211
        %v2852 = vpack.c.b16 %v2220, %v2212
        %v2853 = vpack.c.b16 %v2221, %v2213
        %v2854 = vpack.c.b16 %v2222, %v2214
        %v2855 = vpack.c.b16 %v2223, %v2215
        %v2856 = vpack.c.b16 %v2232, %v2224
        %v2857 = vpack.c.b16 %v2233, %v2225
        %v2858 = vpack.c.b16 %v2234, %v2226
        %v2859 = vpack.c.b16 %v2235, %v2227
        %v2860 = vpack.c.b16 %v2236, %v2228
        %v2861 = vpack.c.b16 %v2237, %v2229
        %v2862 = vpack.c.b16 %v2238, %v2230
        %v2863 = vpack.c.b16 %v2239, %v2231
        %v2864 = vpack.c.b16 %v2248, %v2240
        %v2865 = vpack.c.b16 %v2249, %v2241
        %v2866 = vpack.c.b16 %v2250, %v2242
        %v2867 = vpack.c.b16 %v2251, %v2243
        %v2868 = vpack.c.b16 %v2252, %v2244
        %v2869 = vpack.c.b16 %v2253, %v2245
        %v2870 = vpack.c.b16 %v2254, %v2246
        %v2871 = vpack.c.b16 %v2255, %v2247
        %v2872 = vpack.c.b16 %v2264, %v2256
        %v2873 = vpack.c.b16 %v2265, %v2257
        %v2874 = vpack.c.b16 %v2266, %v2258
        %v2875 = vpack.c.b16 %v2267, %v2259
        %v2876 = vpack.c.b16 %v2268, %v2260
        %v2877 = vpack.c.b16 %v2269, %v2261
        %v2878 = vpack.c.b16 %v2270, %v2262
        %v2879 = vpack.c.b16 %v2271, %v2263
        %v2880 = vpack.c.b16 %v2280, %v2272
        %v2881 = vpack.c.b16 %v2281, %v2273
        %v2882 = vpack.c.b16 %v2282, %v2274
        %v2883 = vpack.c.b16 %v2283, %v2275
        %v2884 = vpack.c.b16 %v2284, %v2276
        %v2885 = vpack.c.b16 %v2285, %v2277
        %v2886 = vpack.c.b16 %v2286, %v2278
        %v2887 = vpack.c.b16 %v2287, %v2279
        %v2888 = vpack.c.b16 %v2296, %v2288
        %v2889 = vpack.c.b16 %v2297, %v2289
        %v2890 = vpack.c.b16 %v2298, %v2290
        %v2891 = vpack.c.b16 %v2299, %v2291
        %v2892 = vpack.c.b16 %v2300, %v2292
        %v2893 = vpack.c.b16 %v2301, %v2293
        %v2894 = vpack.c.b16 %v2302, %v2294
        %v2895 = vpack.c.b16 %v2303, %v2295
        %v2896 = vpack.c.b16 %v2312, %v2304
        %v2897 = vpack.c.b16 %v2313, %v2305
        %v2898 = vpack.c.b16 %v2314, %v2306
        %v2899 = vpack.c.b16 %v2315, %v2307
        %v2900 = vpack.c.b16 %v2316, %v2308
        %v2901 = vpack.c.b16 %v2317, %v2309
        %v2902 = vpack.c.b16 %v2318, %v2310
        %v2903 = vpack.c.b16 %v2319, %v2311
        %v2904 = vpack.c.b16 %v2328, %v2320
        %v2905 = vpack.c.b16 %v2329, %v2321
        %v2906 = vpack.c.b16 %v2330, %v2322
        %v2907 = vpack.c.b16 %v2331, %v2323
        %v2908 = vpack.c.b16 %v2332, %v2324
        %v2909 = vpack.c.b16 %v2333, %v2325
        %v2910 = vpack.c.b16 %v2334, %v2326
        %v2911 = vpack.c.b16 %v2335, %v2327
        %v2912 = vpack.c.b16 %v2344, %v2336
        %v2913 = vpack.c.b16 %v2345, %v2337
        %v2914 = vpack.c.b16 %v2346, %v2338
        %v2915 = vpack.c.b16 %v2347, %v2339
        %v2916 = vpack.c.b16 %v2348, %v2340
        %v2917 = vpack.c.b16 %v2349, %v2341
        %v2918 = vpack.c.b16 %v2350, %v2342
        %v2919 = vpack.c.b16 %v2351, %v2343
        %v2920 = vpack.c.b16 %v2360, %v2352
        %v2921 = vpack.c.b16 %v2361, %v2353
        %v2922 = vpack.c.b16 %v2362, %v2354
        %v2923 = vpack.c.b16 %v2363, %v2355
        %v2924 = vpack.c.b16 %v2364, %v2356
        %v2925 = vpack.c.b16 %v2365, %v2357
        %v2926 = vpack.c.b16 %v2366, %v2358
        %v2927 = vpack.c.b16 %v2367, %v2359
        %v2928 = vpack.c.b16 %v2376, %v2368
        %v2929 = vpack.c.b16 %v2377, %v2369
        %v2930 = vpack.c.b16 %v2378, %v2370
        %v2931 = vpack.c.b16 %v2379, %v2371
        %v2932 = vpack.c.b16 %v2380, %v2372
        %v2933 = vpack.c.b16 %v2381, %v2373
        %v2934 = vpack.c.b16 %v2382, %v2374
        %v2935 = vpack.c.b16 %v2383, %v2375
        %v2936 = vpack.c.b16 %v2392, %v2384
        %v2937 = vpack.c.b16 %v2393, %v2385
        %v2938 = vpack.c.b16 %v2394, %v2386
        %v2939 = vpack.c.b16 %v2395, %v2387
        %v2940 = vpack.c.b16 %v2396, %v2388
        %v2941 = vpack.c.b16 %v2397, %v2389
        %v2942 = vpack.c.b16 %v2398, %v2390
        %v2943 = vpack.c.b16 %v2399, %v2391
        %v2944 = vpack.c.b16 %v2408, %v2400
        %v2945 = vpack.c.b16 %v2409, %v2401
        %v2946 = vpack.c.b16 %v2410, %v2402
        %v2947 = vpack.c.b16 %v2411, %v2403
        %v2948 = vpack.c.b16 %v2412, %v2404
        %v2949 = vpack.c.b16 %v2413, %v2405
        %v2950 = vpack.c.b16 %v2414, %v2406
        %v2951 = vpack.c.b16 %v2415, %v2407
        %v2952 = vpack.c.b16 %v2424, %v2416
        %v2953 = vpack.c.b16 %v2425, %v2417
        %v2954 = vpack.c.b16 %v2426, %v2418
        %v2955 = vpack.c.b16 %v2427, %v2419
        %v2956 = vpack.c.b16 %v2428, %v2420
        %v2957 = vpack.c.b16 %v2429, %v2421
        %v2958 = vpack.c.b16 %v2430, %v2422
        %v2959 = vpack.c.b16 %v2431, %v2423
        %v2960 = vpack.c.b16 %v2440, %v2432
        %v2961 = vpack.c.b16 %v2441, %v2433
        %v2962 = vpack.c.b16 %v2442, %v2434
        %v2963 = vpack.c.b16 %v2443, %v2435
        %v2964 = vpack.c.b16 %v2444, %v2436
        %v2965 = vpack.c.b16 %v2445, %v2437
        %v2966 = vpack.c.b16 %v2446, %v2438
        %v2967 = vpack.c.b16 %v2447, %v2439
        %v2968 = vpack.c.b16 %v2456, %v2448
        %v2969 = vpack.c.b16 %v2457, %v2449
        %v2970 = vpack.c.b16 %v2458, %v2450
        %v2971 = vpack.c.b16 %v2459, %v2451
        %v2972 = vpack.c.b16 %v2460, %v2452
        %v2973 = vpack.c.b16 %v2461, %v2453
        %v2974 = vpack.c.b16 %v2462, %v2454
        %v2975 = vpack.c.b16 %v2463, %v2455
        %3488 = vmatpush.bf16.msra.mxu0 %v2520
        %3489 = vmatpush.bf16.msra.mxu0 %v2512
        %3490 = vmatpush.bf16.msra.mxu0 %v2504
        %3491 = vmatpush.bf16.msra.mxu0 %v2496
        %3492 = vmatpush.bf16.msra.mxu0 %v2488
        %3493 = vmatpush.bf16.msra.mxu0 %v2480
        %3494 = vmatpush.bf16.msra.mxu0 %v2472
        %3495 = vmatpush.bf16.msra.mxu0 %v2464
        %3496 = vmatmul.bf16.gmra.mxu0 %v390
        %v3497 = vpop.f32.mrf.mxu0
        %v3498 = vadd.f32 %v912, %v3497
        %v3499 = vpop.f32.mrf.mxu0
        %3500 = vdwg.mxu0
        %3501 = vmatpush.bf16.msra.mxu0 %v2584
        %3502 = vmatpush.bf16.msra.mxu0 %v2576
        %3503 = vmatpush.bf16.msra.mxu0 %v2568
        %3504 = vmatpush.bf16.msra.mxu0 %v2560
        %3505 = vmatpush.bf16.msra.mxu0 %v2552
        %3506 = vmatpush.bf16.msra.mxu0 %v2544
        %3507 = vmatpush.bf16.msra.mxu0 %v2536
        %3508 = vmatpush.bf16.msra.mxu0 %v2528
        %3509 = vmatmul.bf16.gmra.mxu0 %v391
        %v3510 = vpop.f32.mrf.mxu0
        %v3511 = vadd.f32 %v3498, %v3510
        %v3512 = vpop.f32.mrf.mxu0
        %3513 = vdwg.mxu0
        %3514 = vmatpush.bf16.msra.mxu0 %v2648
        %3515 = vmatpush.bf16.msra.mxu0 %v2640
        %3516 = vmatpush.bf16.msra.mxu0 %v2632
        %3517 = vmatpush.bf16.msra.mxu0 %v2624
        %3518 = vmatpush.bf16.msra.mxu0 %v2616
        %3519 = vmatpush.bf16.msra.mxu0 %v2608
        %3520 = vmatpush.bf16.msra.mxu0 %v2600
        %3521 = vmatpush.bf16.msra.mxu0 %v2592
        %3522 = vmatmul.bf16.gmra.mxu0 %v392
        %v3523 = vpop.f32.mrf.mxu0
        %v3524 = vadd.f32 %v3511, %v3523
        %v3525 = vpop.f32.mrf.mxu0
        %3526 = vdwg.mxu0
        %3527 = vmatpush.bf16.msra.mxu0 %v2712
        %3528 = vmatpush.bf16.msra.mxu0 %v2704
        %3529 = vmatpush.bf16.msra.mxu0 %v2696
        %3530 = vmatpush.bf16.msra.mxu0 %v2688
        %3531 = vmatpush.bf16.msra.mxu0 %v2680
        %3532 = vmatpush.bf16.msra.mxu0 %v2672
        %3533 = vmatpush.bf16.msra.mxu0 %v2664
        %3534 = vmatpush.bf16.msra.mxu0 %v2656
        %3535 = vmatmul.bf16.gmra.mxu0 %v393
        %v3536 = vpop.f32.mrf.mxu0
        %v3537 = vadd.f32 %v3524, %v3536
        %v3538 = vpop.f32.mrf.mxu0
        %3539 = vdwg.mxu0
        %3540 = vmatpush.bf16.msra.mxu0 %v2776
        %3541 = vmatpush.bf16.msra.mxu0 %v2768
        %3542 = vmatpush.bf16.msra.mxu0 %v2760
        %3543 = vmatpush.bf16.msra.mxu0 %v2752
        %3544 = vmatpush.bf16.msra.mxu0 %v2744
        %3545 = vmatpush.bf16.msra.mxu0 %v2736
        %3546 = vmatpush.bf16.msra.mxu0 %v2728
        %3547 = vmatpush.bf16.msra.mxu0 %v2720
        %3548 = vmatmul.bf16.gmra.mxu0 %v394
        %v3549 = vpop.f32.mrf.mxu0
        %v3550 = vadd.f32 %v3537, %v3549
        %v3551 = vpop.f32.mrf.mxu0
        %3552 = vdwg.mxu0
        %3553 = vmatpush.bf16.msra.mxu0 %v2840
        %3554 = vmatpush.bf16.msra.mxu0 %v2832
        %3555 = vmatpush.bf16.msra.mxu0 %v2824
        %3556 = vmatpush.bf16.msra.mxu0 %v2816
        %3557 = vmatpush.bf16.msra.mxu0 %v2808
        %3558 = vmatpush.bf16.msra.mxu0 %v2800
        %3559 = vmatpush.bf16.msra.mxu0 %v2792
        %3560 = vmatpush.bf16.msra.mxu0 %v2784
        %3561 = vmatmul.bf16.gmra.mxu0 %v395
        %v3562 = vpop.f32.mrf.mxu0
        %v3563 = vadd.f32 %v3550, %v3562
        %v3564 = vpop.f32.mrf.mxu0
        %3565 = vdwg.mxu0
        %3566 = vmatpush.bf16.msra.mxu0 %v2904
        %3567 = vmatpush.bf16.msra.mxu0 %v2896
        %3568 = vmatpush.bf16.msra.mxu0 %v2888
        %3569 = vmatpush.bf16.msra.mxu0 %v2880
        %3570 = vmatpush.bf16.msra.mxu0 %v2872
        %3571 = vmatpush.bf16.msra.mxu0 %v2864
        %3572 = vmatpush.bf16.msra.mxu0 %v2856
        %3573 = vmatpush.bf16.msra.mxu0 %v2848
        %3574 = vmatmul.bf16.gmra.mxu0 %v396
        %v3575 = vpop.f32.mrf.mxu0
        %v3576 = vadd.f32 %v3563, %v3575
        %v3577 = vpop.f32.mrf.mxu0
        %3578 = vdwg.mxu0
        %3579 = vmatpush.bf16.msra.mxu0 %v2968
        %3580 = vmatpush.bf16.msra.mxu0 %v2960
        %3581 = vmatpush.bf16.msra.mxu0 %v2952
        %3582 = vmatpush.bf16.msra.mxu0 %v2944
        %3583 = vmatpush.bf16.msra.mxu0 %v2936
        %3584 = vmatpush.bf16.msra.mxu0 %v2928
        %3585 = vmatpush.bf16.msra.mxu0 %v2920
        %3586 = vmatpush.bf16.msra.mxu0 %v2912
        %3587 = vmatmul.bf16.gmra.mxu0 %v397
        %v3588 = vpop.f32.mrf.mxu0
        %v3589 = vadd.f32 %v3576, %v3588
        %v3590 = vpop.f32.mrf.mxu0
        %3591 = vdwg.mxu0
        %3592 = vmatpush.bf16.msra.mxu0 %v2521
        %3593 = vmatpush.bf16.msra.mxu0 %v2513
        %3594 = vmatpush.bf16.msra.mxu0 %v2505
        %3595 = vmatpush.bf16.msra.mxu0 %v2497
        %3596 = vmatpush.bf16.msra.mxu0 %v2489
        %3597 = vmatpush.bf16.msra.mxu0 %v2481
        %3598 = vmatpush.bf16.msra.mxu0 %v2473
        %3599 = vmatpush.bf16.msra.mxu0 %v2465
        %3600 = vmatmul.bf16.gmra.mxu0 %v390
        %v3601 = vpop.f32.mrf.mxu0
        %v3602 = vadd.f32 %v913, %v3601
        %v3603 = vpop.f32.mrf.mxu0
        %3604 = vdwg.mxu0
        %3605 = vmatpush.bf16.msra.mxu0 %v2585
        %3606 = vmatpush.bf16.msra.mxu0 %v2577
        %3607 = vmatpush.bf16.msra.mxu0 %v2569
        %3608 = vmatpush.bf16.msra.mxu0 %v2561
        %3609 = vmatpush.bf16.msra.mxu0 %v2553
        %3610 = vmatpush.bf16.msra.mxu0 %v2545
        %3611 = vmatpush.bf16.msra.mxu0 %v2537
        %3612 = vmatpush.bf16.msra.mxu0 %v2529
        %3613 = vmatmul.bf16.gmra.mxu0 %v391
        %v3614 = vpop.f32.mrf.mxu0
        %v3615 = vadd.f32 %v3602, %v3614
        %v3616 = vpop.f32.mrf.mxu0
        %3617 = vdwg.mxu0
        %3618 = vmatpush.bf16.msra.mxu0 %v2649
        %3619 = vmatpush.bf16.msra.mxu0 %v2641
        %3620 = vmatpush.bf16.msra.mxu0 %v2633
        %3621 = vmatpush.bf16.msra.mxu0 %v2625
        %3622 = vmatpush.bf16.msra.mxu0 %v2617
        %3623 = vmatpush.bf16.msra.mxu0 %v2609
        %3624 = vmatpush.bf16.msra.mxu0 %v2601
        %3625 = vmatpush.bf16.msra.mxu0 %v2593
        %3626 = vmatmul.bf16.gmra.mxu0 %v392
        %v3627 = vpop.f32.mrf.mxu0
        %v3628 = vadd.f32 %v3615, %v3627
        %v3629 = vpop.f32.mrf.mxu0
        %3630 = vdwg.mxu0
        %3631 = vmatpush.bf16.msra.mxu0 %v2713
        %3632 = vmatpush.bf16.msra.mxu0 %v2705
        %3633 = vmatpush.bf16.msra.mxu0 %v2697
        %3634 = vmatpush.bf16.msra.mxu0 %v2689
        %3635 = vmatpush.bf16.msra.mxu0 %v2681
        %3636 = vmatpush.bf16.msra.mxu0 %v2673
        %3637 = vmatpush.bf16.msra.mxu0 %v2665
        %3638 = vmatpush.bf16.msra.mxu0 %v2657
        %3639 = vmatmul.bf16.gmra.mxu0 %v393
        %v3640 = vpop.f32.mrf.mxu0
        %v3641 = vadd.f32 %v3628, %v3640
        %v3642 = vpop.f32.mrf.mxu0
        %3643 = vdwg.mxu0
        %3644 = vmatpush.bf16.msra.mxu0 %v2777
        %3645 = vmatpush.bf16.msra.mxu0 %v2769
        %3646 = vmatpush.bf16.msra.mxu0 %v2761
        %3647 = vmatpush.bf16.msra.mxu0 %v2753
        %3648 = vmatpush.bf16.msra.mxu0 %v2745
        %3649 = vmatpush.bf16.msra.mxu0 %v2737
        %3650 = vmatpush.bf16.msra.mxu0 %v2729
        %3651 = vmatpush.bf16.msra.mxu0 %v2721
        %3652 = vmatmul.bf16.gmra.mxu0 %v394
        %v3653 = vpop.f32.mrf.mxu0
        %v3654 = vadd.f32 %v3641, %v3653
        %v3655 = vpop.f32.mrf.mxu0
        %3656 = vdwg.mxu0
        %3657 = vmatpush.bf16.msra.mxu0 %v2841
        %3658 = vmatpush.bf16.msra.mxu0 %v2833
        %3659 = vmatpush.bf16.msra.mxu0 %v2825
        %3660 = vmatpush.bf16.msra.mxu0 %v2817
        %3661 = vmatpush.bf16.msra.mxu0 %v2809
        %3662 = vmatpush.bf16.msra.mxu0 %v2801
        %3663 = vmatpush.bf16.msra.mxu0 %v2793
        %3664 = vmatpush.bf16.msra.mxu0 %v2785
        %3665 = vmatmul.bf16.gmra.mxu0 %v395
        %v3666 = vpop.f32.mrf.mxu0
        %v3667 = vadd.f32 %v3654, %v3666
        %v3668 = vpop.f32.mrf.mxu0
        %3669 = vdwg.mxu0
        %3670 = vmatpush.bf16.msra.mxu0 %v2905
        %3671 = vmatpush.bf16.msra.mxu0 %v2897
        %3672 = vmatpush.bf16.msra.mxu0 %v2889
        %3673 = vmatpush.bf16.msra.mxu0 %v2881
        %3674 = vmatpush.bf16.msra.mxu0 %v2873
        %3675 = vmatpush.bf16.msra.mxu0 %v2865
        %3676 = vmatpush.bf16.msra.mxu0 %v2857
        %3677 = vmatpush.bf16.msra.mxu0 %v2849
        %3678 = vmatmul.bf16.gmra.mxu0 %v396
        %v3679 = vpop.f32.mrf.mxu0
        %v3680 = vadd.f32 %v3667, %v3679
        %v3681 = vpop.f32.mrf.mxu0
        %3682 = vdwg.mxu0
        %3683 = vmatpush.bf16.msra.mxu0 %v2969
        %3684 = vmatpush.bf16.msra.mxu0 %v2961
        %3685 = vmatpush.bf16.msra.mxu0 %v2953
        %3686 = vmatpush.bf16.msra.mxu0 %v2945
        %3687 = vmatpush.bf16.msra.mxu0 %v2937
        %3688 = vmatpush.bf16.msra.mxu0 %v2929
        %3689 = vmatpush.bf16.msra.mxu0 %v2921
        %3690 = vmatpush.bf16.msra.mxu0 %v2913
        %3691 = vmatmul.bf16.gmra.mxu0 %v397
        %v3692 = vpop.f32.mrf.mxu0
        %v3693 = vadd.f32 %v3680, %v3692
        %v3694 = vpop.f32.mrf.mxu0
        %3695 = vdwg.mxu0
        %3696 = vmatpush.bf16.msra.mxu0 %v2522
        %3697 = vmatpush.bf16.msra.mxu0 %v2514
        %3698 = vmatpush.bf16.msra.mxu0 %v2506
        %3699 = vmatpush.bf16.msra.mxu0 %v2498
        %3700 = vmatpush.bf16.msra.mxu0 %v2490
        %3701 = vmatpush.bf16.msra.mxu0 %v2482
        %3702 = vmatpush.bf16.msra.mxu0 %v2474
        %3703 = vmatpush.bf16.msra.mxu0 %v2466
        %3704 = vmatmul.bf16.gmra.mxu0 %v390
        %v3705 = vpop.f32.mrf.mxu0
        %v3706 = vadd.f32 %v914, %v3705
        %v3707 = vpop.f32.mrf.mxu0
        %3708 = vdwg.mxu0
        %3709 = vmatpush.bf16.msra.mxu0 %v2586
        %3710 = vmatpush.bf16.msra.mxu0 %v2578
        %3711 = vmatpush.bf16.msra.mxu0 %v2570
        %3712 = vmatpush.bf16.msra.mxu0 %v2562
        %3713 = vmatpush.bf16.msra.mxu0 %v2554
        %3714 = vmatpush.bf16.msra.mxu0 %v2546
        %3715 = vmatpush.bf16.msra.mxu0 %v2538
        %3716 = vmatpush.bf16.msra.mxu0 %v2530
        %3717 = vmatmul.bf16.gmra.mxu0 %v391
        %v3718 = vpop.f32.mrf.mxu0
        %v3719 = vadd.f32 %v3706, %v3718
        %v3720 = vpop.f32.mrf.mxu0
        %3721 = vdwg.mxu0
        %3722 = vmatpush.bf16.msra.mxu0 %v2650
        %3723 = vmatpush.bf16.msra.mxu0 %v2642
        %3724 = vmatpush.bf16.msra.mxu0 %v2634
        %3725 = vmatpush.bf16.msra.mxu0 %v2626
        %3726 = vmatpush.bf16.msra.mxu0 %v2618
        %3727 = vmatpush.bf16.msra.mxu0 %v2610
        %3728 = vmatpush.bf16.msra.mxu0 %v2602
        %3729 = vmatpush.bf16.msra.mxu0 %v2594
        %3730 = vmatmul.bf16.gmra.mxu0 %v392
        %v3731 = vpop.f32.mrf.mxu0
        %v3732 = vadd.f32 %v3719, %v3731
        %v3733 = vpop.f32.mrf.mxu0
        %3734 = vdwg.mxu0
        %3735 = vmatpush.bf16.msra.mxu0 %v2714
        %3736 = vmatpush.bf16.msra.mxu0 %v2706
        %3737 = vmatpush.bf16.msra.mxu0 %v2698
        %3738 = vmatpush.bf16.msra.mxu0 %v2690
        %3739 = vmatpush.bf16.msra.mxu0 %v2682
        %3740 = vmatpush.bf16.msra.mxu0 %v2674
        %3741 = vmatpush.bf16.msra.mxu0 %v2666
        %3742 = vmatpush.bf16.msra.mxu0 %v2658
        %3743 = vmatmul.bf16.gmra.mxu0 %v393
        %v3744 = vpop.f32.mrf.mxu0
        %v3745 = vadd.f32 %v3732, %v3744
        %v3746 = vpop.f32.mrf.mxu0
        %3747 = vdwg.mxu0
        %3748 = vmatpush.bf16.msra.mxu0 %v2778
        %3749 = vmatpush.bf16.msra.mxu0 %v2770
        %3750 = vmatpush.bf16.msra.mxu0 %v2762
        %3751 = vmatpush.bf16.msra.mxu0 %v2754
        %3752 = vmatpush.bf16.msra.mxu0 %v2746
        %3753 = vmatpush.bf16.msra.mxu0 %v2738
        %3754 = vmatpush.bf16.msra.mxu0 %v2730
        %3755 = vmatpush.bf16.msra.mxu0 %v2722
        %3756 = vmatmul.bf16.gmra.mxu0 %v394
        %v3757 = vpop.f32.mrf.mxu0
        %v3758 = vadd.f32 %v3745, %v3757
        %v3759 = vpop.f32.mrf.mxu0
        %3760 = vdwg.mxu0
        %3761 = vmatpush.bf16.msra.mxu0 %v2842
        %3762 = vmatpush.bf16.msra.mxu0 %v2834
        %3763 = vmatpush.bf16.msra.mxu0 %v2826
        %3764 = vmatpush.bf16.msra.mxu0 %v2818
        %3765 = vmatpush.bf16.msra.mxu0 %v2810
        %3766 = vmatpush.bf16.msra.mxu0 %v2802
        %3767 = vmatpush.bf16.msra.mxu0 %v2794
        %3768 = vmatpush.bf16.msra.mxu0 %v2786
        %3769 = vmatmul.bf16.gmra.mxu0 %v395
        %v3770 = vpop.f32.mrf.mxu0
        %v3771 = vadd.f32 %v3758, %v3770
        %v3772 = vpop.f32.mrf.mxu0
        %3773 = vdwg.mxu0
        %3774 = vmatpush.bf16.msra.mxu0 %v2906
        %3775 = vmatpush.bf16.msra.mxu0 %v2898
        %3776 = vmatpush.bf16.msra.mxu0 %v2890
        %3777 = vmatpush.bf16.msra.mxu0 %v2882
        %3778 = vmatpush.bf16.msra.mxu0 %v2874
        %3779 = vmatpush.bf16.msra.mxu0 %v2866
        %3780 = vmatpush.bf16.msra.mxu0 %v2858
        %3781 = vmatpush.bf16.msra.mxu0 %v2850
        %3782 = vmatmul.bf16.gmra.mxu0 %v396
        %v3783 = vpop.f32.mrf.mxu0
        %v3784 = vadd.f32 %v3771, %v3783
        %v3785 = vpop.f32.mrf.mxu0
        %3786 = vdwg.mxu0
        %3787 = vmatpush.bf16.msra.mxu0 %v2970
        %3788 = vmatpush.bf16.msra.mxu0 %v2962
        %3789 = vmatpush.bf16.msra.mxu0 %v2954
        %3790 = vmatpush.bf16.msra.mxu0 %v2946
        %3791 = vmatpush.bf16.msra.mxu0 %v2938
        %3792 = vmatpush.bf16.msra.mxu0 %v2930
        %3793 = vmatpush.bf16.msra.mxu0 %v2922
        %3794 = vmatpush.bf16.msra.mxu0 %v2914
        %3795 = vmatmul.bf16.gmra.mxu0 %v397
        %v3796 = vpop.f32.mrf.mxu0
        %v3797 = vadd.f32 %v3784, %v3796
        %v3798 = vpop.f32.mrf.mxu0
        %3799 = vdwg.mxu0
        %3800 = vmatpush.bf16.msra.mxu0 %v2523
        %3801 = vmatpush.bf16.msra.mxu0 %v2515
        %3802 = vmatpush.bf16.msra.mxu0 %v2507
        %3803 = vmatpush.bf16.msra.mxu0 %v2499
        %3804 = vmatpush.bf16.msra.mxu0 %v2491
        %3805 = vmatpush.bf16.msra.mxu0 %v2483
        %3806 = vmatpush.bf16.msra.mxu0 %v2475
        %3807 = vmatpush.bf16.msra.mxu0 %v2467
        %3808 = vmatmul.bf16.gmra.mxu0 %v390
        %v3809 = vpop.f32.mrf.mxu0
        %v3810 = vadd.f32 %v915, %v3809
        %v3811 = vpop.f32.mrf.mxu0
        %3812 = vdwg.mxu0
        %3813 = vmatpush.bf16.msra.mxu0 %v2587
        %3814 = vmatpush.bf16.msra.mxu0 %v2579
        %3815 = vmatpush.bf16.msra.mxu0 %v2571
        %3816 = vmatpush.bf16.msra.mxu0 %v2563
        %3817 = vmatpush.bf16.msra.mxu0 %v2555
        %3818 = vmatpush.bf16.msra.mxu0 %v2547
        %3819 = vmatpush.bf16.msra.mxu0 %v2539
        %3820 = vmatpush.bf16.msra.mxu0 %v2531
        %3821 = vmatmul.bf16.gmra.mxu0 %v391
        %v3822 = vpop.f32.mrf.mxu0
        %v3823 = vadd.f32 %v3810, %v3822
        %v3824 = vpop.f32.mrf.mxu0
        %3825 = vdwg.mxu0
        %3826 = vmatpush.bf16.msra.mxu0 %v2651
        %3827 = vmatpush.bf16.msra.mxu0 %v2643
        %3828 = vmatpush.bf16.msra.mxu0 %v2635
        %3829 = vmatpush.bf16.msra.mxu0 %v2627
        %3830 = vmatpush.bf16.msra.mxu0 %v2619
        %3831 = vmatpush.bf16.msra.mxu0 %v2611
        %3832 = vmatpush.bf16.msra.mxu0 %v2603
        %3833 = vmatpush.bf16.msra.mxu0 %v2595
        %3834 = vmatmul.bf16.gmra.mxu0 %v392
        %v3835 = vpop.f32.mrf.mxu0
        %v3836 = vadd.f32 %v3823, %v3835
        %v3837 = vpop.f32.mrf.mxu0
        %3838 = vdwg.mxu0
        %3839 = vmatpush.bf16.msra.mxu0 %v2715
        %3840 = vmatpush.bf16.msra.mxu0 %v2707
        %3841 = vmatpush.bf16.msra.mxu0 %v2699
        %3842 = vmatpush.bf16.msra.mxu0 %v2691
        %3843 = vmatpush.bf16.msra.mxu0 %v2683
        %3844 = vmatpush.bf16.msra.mxu0 %v2675
        %3845 = vmatpush.bf16.msra.mxu0 %v2667
        %3846 = vmatpush.bf16.msra.mxu0 %v2659
        %3847 = vmatmul.bf16.gmra.mxu0 %v393
        %v3848 = vpop.f32.mrf.mxu0
        %v3849 = vadd.f32 %v3836, %v3848
        %v3850 = vpop.f32.mrf.mxu0
        %3851 = vdwg.mxu0
        %3852 = vmatpush.bf16.msra.mxu0 %v2779
        %3853 = vmatpush.bf16.msra.mxu0 %v2771
        %3854 = vmatpush.bf16.msra.mxu0 %v2763
        %3855 = vmatpush.bf16.msra.mxu0 %v2755
        %3856 = vmatpush.bf16.msra.mxu0 %v2747
        %3857 = vmatpush.bf16.msra.mxu0 %v2739
        %3858 = vmatpush.bf16.msra.mxu0 %v2731
        %3859 = vmatpush.bf16.msra.mxu0 %v2723
        %3860 = vmatmul.bf16.gmra.mxu0 %v394
        %v3861 = vpop.f32.mrf.mxu0
        %v3862 = vadd.f32 %v3849, %v3861
        %v3863 = vpop.f32.mrf.mxu0
        %3864 = vdwg.mxu0
        %3865 = vmatpush.bf16.msra.mxu0 %v2843
        %3866 = vmatpush.bf16.msra.mxu0 %v2835
        %3867 = vmatpush.bf16.msra.mxu0 %v2827
        %3868 = vmatpush.bf16.msra.mxu0 %v2819
        %3869 = vmatpush.bf16.msra.mxu0 %v2811
        %3870 = vmatpush.bf16.msra.mxu0 %v2803
        %3871 = vmatpush.bf16.msra.mxu0 %v2795
        %3872 = vmatpush.bf16.msra.mxu0 %v2787
        %3873 = vmatmul.bf16.gmra.mxu0 %v395
        %v3874 = vpop.f32.mrf.mxu0
        %v3875 = vadd.f32 %v3862, %v3874
        %v3876 = vpop.f32.mrf.mxu0
        %3877 = vdwg.mxu0
        %3878 = vmatpush.bf16.msra.mxu0 %v2907
        %3879 = vmatpush.bf16.msra.mxu0 %v2899
        %3880 = vmatpush.bf16.msra.mxu0 %v2891
        %3881 = vmatpush.bf16.msra.mxu0 %v2883
        %3882 = vmatpush.bf16.msra.mxu0 %v2875
        %3883 = vmatpush.bf16.msra.mxu0 %v2867
        %3884 = vmatpush.bf16.msra.mxu0 %v2859
        %3885 = vmatpush.bf16.msra.mxu0 %v2851
        %3886 = vmatmul.bf16.gmra.mxu0 %v396
        %v3887 = vpop.f32.mrf.mxu0
        %v3888 = vadd.f32 %v3875, %v3887
        %v3889 = vpop.f32.mrf.mxu0
        %3890 = vdwg.mxu0
        %3891 = vmatpush.bf16.msra.mxu0 %v2971
        %3892 = vmatpush.bf16.msra.mxu0 %v2963
        %3893 = vmatpush.bf16.msra.mxu0 %v2955
        %3894 = vmatpush.bf16.msra.mxu0 %v2947
        %3895 = vmatpush.bf16.msra.mxu0 %v2939
        %3896 = vmatpush.bf16.msra.mxu0 %v2931
        %3897 = vmatpush.bf16.msra.mxu0 %v2923
        %3898 = vmatpush.bf16.msra.mxu0 %v2915
        %3899 = vmatmul.bf16.gmra.mxu0 %v397
        %v3900 = vpop.f32.mrf.mxu0
        %v3901 = vadd.f32 %v3888, %v3900
        %v3902 = vpop.f32.mrf.mxu0
        %3903 = vdwg.mxu0
        %3904 = vmatpush.bf16.msra.mxu0 %v2524
        %3905 = vmatpush.bf16.msra.mxu0 %v2516
        %3906 = vmatpush.bf16.msra.mxu0 %v2508
        %3907 = vmatpush.bf16.msra.mxu0 %v2500
        %3908 = vmatpush.bf16.msra.mxu0 %v2492
        %3909 = vmatpush.bf16.msra.mxu0 %v2484
        %3910 = vmatpush.bf16.msra.mxu0 %v2476
        %3911 = vmatpush.bf16.msra.mxu0 %v2468
        %3912 = vmatmul.bf16.gmra.mxu0 %v390
        %v3913 = vpop.f32.mrf.mxu0
        %v3914 = vadd.f32 %v916, %v3913
        %v3915 = vpop.f32.mrf.mxu0
        %3916 = vdwg.mxu0
        %3917 = vmatpush.bf16.msra.mxu0 %v2588
        %3918 = vmatpush.bf16.msra.mxu0 %v2580
        %3919 = vmatpush.bf16.msra.mxu0 %v2572
        %3920 = vmatpush.bf16.msra.mxu0 %v2564
        %3921 = vmatpush.bf16.msra.mxu0 %v2556
        %3922 = vmatpush.bf16.msra.mxu0 %v2548
        %3923 = vmatpush.bf16.msra.mxu0 %v2540
        %3924 = vmatpush.bf16.msra.mxu0 %v2532
        %3925 = vmatmul.bf16.gmra.mxu0 %v391
        %v3926 = vpop.f32.mrf.mxu0
        %v3927 = vadd.f32 %v3914, %v3926
        %v3928 = vpop.f32.mrf.mxu0
        %3929 = vdwg.mxu0
        %3930 = vmatpush.bf16.msra.mxu0 %v2652
        %3931 = vmatpush.bf16.msra.mxu0 %v2644
        %3932 = vmatpush.bf16.msra.mxu0 %v2636
        %3933 = vmatpush.bf16.msra.mxu0 %v2628
        %3934 = vmatpush.bf16.msra.mxu0 %v2620
        %3935 = vmatpush.bf16.msra.mxu0 %v2612
        %3936 = vmatpush.bf16.msra.mxu0 %v2604
        %3937 = vmatpush.bf16.msra.mxu0 %v2596
        %3938 = vmatmul.bf16.gmra.mxu0 %v392
        %v3939 = vpop.f32.mrf.mxu0
        %v3940 = vadd.f32 %v3927, %v3939
        %v3941 = vpop.f32.mrf.mxu0
        %3942 = vdwg.mxu0
        %3943 = vmatpush.bf16.msra.mxu0 %v2716
        %3944 = vmatpush.bf16.msra.mxu0 %v2708
        %3945 = vmatpush.bf16.msra.mxu0 %v2700
        %3946 = vmatpush.bf16.msra.mxu0 %v2692
        %3947 = vmatpush.bf16.msra.mxu0 %v2684
        %3948 = vmatpush.bf16.msra.mxu0 %v2676
        %3949 = vmatpush.bf16.msra.mxu0 %v2668
        %3950 = vmatpush.bf16.msra.mxu0 %v2660
        %3951 = vmatmul.bf16.gmra.mxu0 %v393
        %v3952 = vpop.f32.mrf.mxu0
        %v3953 = vadd.f32 %v3940, %v3952
        %v3954 = vpop.f32.mrf.mxu0
        %3955 = vdwg.mxu0
        %3956 = vmatpush.bf16.msra.mxu0 %v2780
        %3957 = vmatpush.bf16.msra.mxu0 %v2772
        %3958 = vmatpush.bf16.msra.mxu0 %v2764
        %3959 = vmatpush.bf16.msra.mxu0 %v2756
        %3960 = vmatpush.bf16.msra.mxu0 %v2748
        %3961 = vmatpush.bf16.msra.mxu0 %v2740
        %3962 = vmatpush.bf16.msra.mxu0 %v2732
        %3963 = vmatpush.bf16.msra.mxu0 %v2724
        %3964 = vmatmul.bf16.gmra.mxu0 %v394
        %v3965 = vpop.f32.mrf.mxu0
        %v3966 = vadd.f32 %v3953, %v3965
        %v3967 = vpop.f32.mrf.mxu0
        %3968 = vdwg.mxu0
        %3969 = vmatpush.bf16.msra.mxu0 %v2844
        %3970 = vmatpush.bf16.msra.mxu0 %v2836
        %3971 = vmatpush.bf16.msra.mxu0 %v2828
        %3972 = vmatpush.bf16.msra.mxu0 %v2820
        %3973 = vmatpush.bf16.msra.mxu0 %v2812
        %3974 = vmatpush.bf16.msra.mxu0 %v2804
        %3975 = vmatpush.bf16.msra.mxu0 %v2796
        %3976 = vmatpush.bf16.msra.mxu0 %v2788
        %3977 = vmatmul.bf16.gmra.mxu0 %v395
        %v3978 = vpop.f32.mrf.mxu0
        %v3979 = vadd.f32 %v3966, %v3978
        %v3980 = vpop.f32.mrf.mxu0
        %3981 = vdwg.mxu0
        %3982 = vmatpush.bf16.msra.mxu0 %v2908
        %3983 = vmatpush.bf16.msra.mxu0 %v2900
        %3984 = vmatpush.bf16.msra.mxu0 %v2892
        %3985 = vmatpush.bf16.msra.mxu0 %v2884
        %3986 = vmatpush.bf16.msra.mxu0 %v2876
        %3987 = vmatpush.bf16.msra.mxu0 %v2868
        %3988 = vmatpush.bf16.msra.mxu0 %v2860
        %3989 = vmatpush.bf16.msra.mxu0 %v2852
        %3990 = vmatmul.bf16.gmra.mxu0 %v396
        %v3991 = vpop.f32.mrf.mxu0
        %v3992 = vadd.f32 %v3979, %v3991
        %v3993 = vpop.f32.mrf.mxu0
        %3994 = vdwg.mxu0
        %3995 = vmatpush.bf16.msra.mxu0 %v2972
        %3996 = vmatpush.bf16.msra.mxu0 %v2964
        %3997 = vmatpush.bf16.msra.mxu0 %v2956
        %3998 = vmatpush.bf16.msra.mxu0 %v2948
        %3999 = vmatpush.bf16.msra.mxu0 %v2940
        %4000 = vmatpush.bf16.msra.mxu0 %v2932
        %4001 = vmatpush.bf16.msra.mxu0 %v2924
        %4002 = vmatpush.bf16.msra.mxu0 %v2916
        %4003 = vmatmul.bf16.gmra.mxu0 %v397
        %v4004 = vpop.f32.mrf.mxu0
        %v4005 = vadd.f32 %v3992, %v4004
        %v4006 = vpop.f32.mrf.mxu0
        %4007 = vdwg.mxu0
        %4008 = vmatpush.bf16.msra.mxu0 %v2525
        %4009 = vmatpush.bf16.msra.mxu0 %v2517
        %4010 = vmatpush.bf16.msra.mxu0 %v2509
        %4011 = vmatpush.bf16.msra.mxu0 %v2501
        %4012 = vmatpush.bf16.msra.mxu0 %v2493
        %4013 = vmatpush.bf16.msra.mxu0 %v2485
        %4014 = vmatpush.bf16.msra.mxu0 %v2477
        %4015 = vmatpush.bf16.msra.mxu0 %v2469
        %4016 = vmatmul.bf16.gmra.mxu0 %v390
        %v4017 = vpop.f32.mrf.mxu0
        %v4018 = vadd.f32 %v917, %v4017
        %v4019 = vpop.f32.mrf.mxu0
        %4020 = vdwg.mxu0
        %4021 = vmatpush.bf16.msra.mxu0 %v2589
        %4022 = vmatpush.bf16.msra.mxu0 %v2581
        %4023 = vmatpush.bf16.msra.mxu0 %v2573
        %4024 = vmatpush.bf16.msra.mxu0 %v2565
        %4025 = vmatpush.bf16.msra.mxu0 %v2557
        %4026 = vmatpush.bf16.msra.mxu0 %v2549
        %4027 = vmatpush.bf16.msra.mxu0 %v2541
        %4028 = vmatpush.bf16.msra.mxu0 %v2533
        %4029 = vmatmul.bf16.gmra.mxu0 %v391
        %v4030 = vpop.f32.mrf.mxu0
        %v4031 = vadd.f32 %v4018, %v4030
        %v4032 = vpop.f32.mrf.mxu0
        %4033 = vdwg.mxu0
        %4034 = vmatpush.bf16.msra.mxu0 %v2653
        %4035 = vmatpush.bf16.msra.mxu0 %v2645
        %4036 = vmatpush.bf16.msra.mxu0 %v2637
        %4037 = vmatpush.bf16.msra.mxu0 %v2629
        %4038 = vmatpush.bf16.msra.mxu0 %v2621
        %4039 = vmatpush.bf16.msra.mxu0 %v2613
        %4040 = vmatpush.bf16.msra.mxu0 %v2605
        %4041 = vmatpush.bf16.msra.mxu0 %v2597
        %4042 = vmatmul.bf16.gmra.mxu0 %v392
        %v4043 = vpop.f32.mrf.mxu0
        %v4044 = vadd.f32 %v4031, %v4043
        %v4045 = vpop.f32.mrf.mxu0
        %4046 = vdwg.mxu0
        %4047 = vmatpush.bf16.msra.mxu0 %v2717
        %4048 = vmatpush.bf16.msra.mxu0 %v2709
        %4049 = vmatpush.bf16.msra.mxu0 %v2701
        %4050 = vmatpush.bf16.msra.mxu0 %v2693
        %4051 = vmatpush.bf16.msra.mxu0 %v2685
        %4052 = vmatpush.bf16.msra.mxu0 %v2677
        %4053 = vmatpush.bf16.msra.mxu0 %v2669
        %4054 = vmatpush.bf16.msra.mxu0 %v2661
        %4055 = vmatmul.bf16.gmra.mxu0 %v393
        %v4056 = vpop.f32.mrf.mxu0
        %v4057 = vadd.f32 %v4044, %v4056
        %v4058 = vpop.f32.mrf.mxu0
        %4059 = vdwg.mxu0
        %4060 = vmatpush.bf16.msra.mxu0 %v2781
        %4061 = vmatpush.bf16.msra.mxu0 %v2773
        %4062 = vmatpush.bf16.msra.mxu0 %v2765
        %4063 = vmatpush.bf16.msra.mxu0 %v2757
        %4064 = vmatpush.bf16.msra.mxu0 %v2749
        %4065 = vmatpush.bf16.msra.mxu0 %v2741
        %4066 = vmatpush.bf16.msra.mxu0 %v2733
        %4067 = vmatpush.bf16.msra.mxu0 %v2725
        %4068 = vmatmul.bf16.gmra.mxu0 %v394
        %v4069 = vpop.f32.mrf.mxu0
        %v4070 = vadd.f32 %v4057, %v4069
        %v4071 = vpop.f32.mrf.mxu0
        %4072 = vdwg.mxu0
        %4073 = vmatpush.bf16.msra.mxu0 %v2845
        %4074 = vmatpush.bf16.msra.mxu0 %v2837
        %4075 = vmatpush.bf16.msra.mxu0 %v2829
        %4076 = vmatpush.bf16.msra.mxu0 %v2821
        %4077 = vmatpush.bf16.msra.mxu0 %v2813
        %4078 = vmatpush.bf16.msra.mxu0 %v2805
        %4079 = vmatpush.bf16.msra.mxu0 %v2797
        %4080 = vmatpush.bf16.msra.mxu0 %v2789
        %4081 = vmatmul.bf16.gmra.mxu0 %v395
        %v4082 = vpop.f32.mrf.mxu0
        %v4083 = vadd.f32 %v4070, %v4082
        %v4084 = vpop.f32.mrf.mxu0
        %4085 = vdwg.mxu0
        %4086 = vmatpush.bf16.msra.mxu0 %v2909
        %4087 = vmatpush.bf16.msra.mxu0 %v2901
        %4088 = vmatpush.bf16.msra.mxu0 %v2893
        %4089 = vmatpush.bf16.msra.mxu0 %v2885
        %4090 = vmatpush.bf16.msra.mxu0 %v2877
        %4091 = vmatpush.bf16.msra.mxu0 %v2869
        %4092 = vmatpush.bf16.msra.mxu0 %v2861
        %4093 = vmatpush.bf16.msra.mxu0 %v2853
        %4094 = vmatmul.bf16.gmra.mxu0 %v396
        %v4095 = vpop.f32.mrf.mxu0
        %v4096 = vadd.f32 %v4083, %v4095
        %v4097 = vpop.f32.mrf.mxu0
        %4098 = vdwg.mxu0
        %4099 = vmatpush.bf16.msra.mxu0 %v2973
        %4100 = vmatpush.bf16.msra.mxu0 %v2965
        %4101 = vmatpush.bf16.msra.mxu0 %v2957
        %4102 = vmatpush.bf16.msra.mxu0 %v2949
        %4103 = vmatpush.bf16.msra.mxu0 %v2941
        %4104 = vmatpush.bf16.msra.mxu0 %v2933
        %4105 = vmatpush.bf16.msra.mxu0 %v2925
        %4106 = vmatpush.bf16.msra.mxu0 %v2917
        %4107 = vmatmul.bf16.gmra.mxu0 %v397
        %v4108 = vpop.f32.mrf.mxu0
        %v4109 = vadd.f32 %v4096, %v4108
        %v4110 = vpop.f32.mrf.mxu0
        %4111 = vdwg.mxu0
        %4112 = vmatpush.bf16.msra.mxu0 %v2526
        %4113 = vmatpush.bf16.msra.mxu0 %v2518
        %4114 = vmatpush.bf16.msra.mxu0 %v2510
        %4115 = vmatpush.bf16.msra.mxu0 %v2502
        %4116 = vmatpush.bf16.msra.mxu0 %v2494
        %4117 = vmatpush.bf16.msra.mxu0 %v2486
        %4118 = vmatpush.bf16.msra.mxu0 %v2478
        %4119 = vmatpush.bf16.msra.mxu0 %v2470
        %4120 = vmatmul.bf16.gmra.mxu0 %v390
        %v4121 = vpop.f32.mrf.mxu0
        %v4122 = vadd.f32 %v918, %v4121
        %v4123 = vpop.f32.mrf.mxu0
        %4124 = vdwg.mxu0
        %4125 = vmatpush.bf16.msra.mxu0 %v2590
        %4126 = vmatpush.bf16.msra.mxu0 %v2582
        %4127 = vmatpush.bf16.msra.mxu0 %v2574
        %4128 = vmatpush.bf16.msra.mxu0 %v2566
        %4129 = vmatpush.bf16.msra.mxu0 %v2558
        %4130 = vmatpush.bf16.msra.mxu0 %v2550
        %4131 = vmatpush.bf16.msra.mxu0 %v2542
        %4132 = vmatpush.bf16.msra.mxu0 %v2534
        %4133 = vmatmul.bf16.gmra.mxu0 %v391
        %v4134 = vpop.f32.mrf.mxu0
        %v4135 = vadd.f32 %v4122, %v4134
        %v4136 = vpop.f32.mrf.mxu0
        %4137 = vdwg.mxu0
        %4138 = vmatpush.bf16.msra.mxu0 %v2654
        %4139 = vmatpush.bf16.msra.mxu0 %v2646
        %4140 = vmatpush.bf16.msra.mxu0 %v2638
        %4141 = vmatpush.bf16.msra.mxu0 %v2630
        %4142 = vmatpush.bf16.msra.mxu0 %v2622
        %4143 = vmatpush.bf16.msra.mxu0 %v2614
        %4144 = vmatpush.bf16.msra.mxu0 %v2606
        %4145 = vmatpush.bf16.msra.mxu0 %v2598
        %4146 = vmatmul.bf16.gmra.mxu0 %v392
        %v4147 = vpop.f32.mrf.mxu0
        %v4148 = vadd.f32 %v4135, %v4147
        %v4149 = vpop.f32.mrf.mxu0
        %4150 = vdwg.mxu0
        %4151 = vmatpush.bf16.msra.mxu0 %v2718
        %4152 = vmatpush.bf16.msra.mxu0 %v2710
        %4153 = vmatpush.bf16.msra.mxu0 %v2702
        %4154 = vmatpush.bf16.msra.mxu0 %v2694
        %4155 = vmatpush.bf16.msra.mxu0 %v2686
        %4156 = vmatpush.bf16.msra.mxu0 %v2678
        %4157 = vmatpush.bf16.msra.mxu0 %v2670
        %4158 = vmatpush.bf16.msra.mxu0 %v2662
        %4159 = vmatmul.bf16.gmra.mxu0 %v393
        %v4160 = vpop.f32.mrf.mxu0
        %v4161 = vadd.f32 %v4148, %v4160
        %v4162 = vpop.f32.mrf.mxu0
        %4163 = vdwg.mxu0
        %4164 = vmatpush.bf16.msra.mxu0 %v2782
        %4165 = vmatpush.bf16.msra.mxu0 %v2774
        %4166 = vmatpush.bf16.msra.mxu0 %v2766
        %4167 = vmatpush.bf16.msra.mxu0 %v2758
        %4168 = vmatpush.bf16.msra.mxu0 %v2750
        %4169 = vmatpush.bf16.msra.mxu0 %v2742
        %4170 = vmatpush.bf16.msra.mxu0 %v2734
        %4171 = vmatpush.bf16.msra.mxu0 %v2726
        %4172 = vmatmul.bf16.gmra.mxu0 %v394
        %v4173 = vpop.f32.mrf.mxu0
        %v4174 = vadd.f32 %v4161, %v4173
        %v4175 = vpop.f32.mrf.mxu0
        %4176 = vdwg.mxu0
        %4177 = vmatpush.bf16.msra.mxu0 %v2846
        %4178 = vmatpush.bf16.msra.mxu0 %v2838
        %4179 = vmatpush.bf16.msra.mxu0 %v2830
        %4180 = vmatpush.bf16.msra.mxu0 %v2822
        %4181 = vmatpush.bf16.msra.mxu0 %v2814
        %4182 = vmatpush.bf16.msra.mxu0 %v2806
        %4183 = vmatpush.bf16.msra.mxu0 %v2798
        %4184 = vmatpush.bf16.msra.mxu0 %v2790
        %4185 = vmatmul.bf16.gmra.mxu0 %v395
        %v4186 = vpop.f32.mrf.mxu0
        %v4187 = vadd.f32 %v4174, %v4186
        %v4188 = vpop.f32.mrf.mxu0
        %4189 = vdwg.mxu0
        %4190 = vmatpush.bf16.msra.mxu0 %v2910
        %4191 = vmatpush.bf16.msra.mxu0 %v2902
        %4192 = vmatpush.bf16.msra.mxu0 %v2894
        %4193 = vmatpush.bf16.msra.mxu0 %v2886
        %4194 = vmatpush.bf16.msra.mxu0 %v2878
        %4195 = vmatpush.bf16.msra.mxu0 %v2870
        %4196 = vmatpush.bf16.msra.mxu0 %v2862
        %4197 = vmatpush.bf16.msra.mxu0 %v2854
        %4198 = vmatmul.bf16.gmra.mxu0 %v396
        %v4199 = vpop.f32.mrf.mxu0
        %v4200 = vadd.f32 %v4187, %v4199
        %v4201 = vpop.f32.mrf.mxu0
        %4202 = vdwg.mxu0
        %4203 = vmatpush.bf16.msra.mxu0 %v2974
        %4204 = vmatpush.bf16.msra.mxu0 %v2966
        %4205 = vmatpush.bf16.msra.mxu0 %v2958
        %4206 = vmatpush.bf16.msra.mxu0 %v2950
        %4207 = vmatpush.bf16.msra.mxu0 %v2942
        %4208 = vmatpush.bf16.msra.mxu0 %v2934
        %4209 = vmatpush.bf16.msra.mxu0 %v2926
        %4210 = vmatpush.bf16.msra.mxu0 %v2918
        %4211 = vmatmul.bf16.gmra.mxu0 %v397
        %v4212 = vpop.f32.mrf.mxu0
        %v4213 = vadd.f32 %v4200, %v4212
        %v4214 = vpop.f32.mrf.mxu0
        %4215 = vdwg.mxu0
        %4216 = vmatpush.bf16.msra.mxu0 %v2527
        %4217 = vmatpush.bf16.msra.mxu0 %v2519
        %4218 = vmatpush.bf16.msra.mxu0 %v2511
        %4219 = vmatpush.bf16.msra.mxu0 %v2503
        %4220 = vmatpush.bf16.msra.mxu0 %v2495
        %4221 = vmatpush.bf16.msra.mxu0 %v2487
        %4222 = vmatpush.bf16.msra.mxu0 %v2479
        %4223 = vmatpush.bf16.msra.mxu0 %v2471
        %4224 = vmatmul.bf16.gmra.mxu0 %v390
        %v4225 = vpop.f32.mrf.mxu0
        %v4226 = vadd.f32 %v919, %v4225
        %v4227 = vpop.f32.mrf.mxu0
        %4228 = vdwg.mxu0
        %4229 = vmatpush.bf16.msra.mxu0 %v2591
        %4230 = vmatpush.bf16.msra.mxu0 %v2583
        %4231 = vmatpush.bf16.msra.mxu0 %v2575
        %4232 = vmatpush.bf16.msra.mxu0 %v2567
        %4233 = vmatpush.bf16.msra.mxu0 %v2559
        %4234 = vmatpush.bf16.msra.mxu0 %v2551
        %4235 = vmatpush.bf16.msra.mxu0 %v2543
        %4236 = vmatpush.bf16.msra.mxu0 %v2535
        %4237 = vmatmul.bf16.gmra.mxu0 %v391
        %v4238 = vpop.f32.mrf.mxu0
        %v4239 = vadd.f32 %v4226, %v4238
        %v4240 = vpop.f32.mrf.mxu0
        %4241 = vdwg.mxu0
        %4242 = vmatpush.bf16.msra.mxu0 %v2655
        %4243 = vmatpush.bf16.msra.mxu0 %v2647
        %4244 = vmatpush.bf16.msra.mxu0 %v2639
        %4245 = vmatpush.bf16.msra.mxu0 %v2631
        %4246 = vmatpush.bf16.msra.mxu0 %v2623
        %4247 = vmatpush.bf16.msra.mxu0 %v2615
        %4248 = vmatpush.bf16.msra.mxu0 %v2607
        %4249 = vmatpush.bf16.msra.mxu0 %v2599
        %4250 = vmatmul.bf16.gmra.mxu0 %v392
        %v4251 = vpop.f32.mrf.mxu0
        %v4252 = vadd.f32 %v4239, %v4251
        %v4253 = vpop.f32.mrf.mxu0
        %4254 = vdwg.mxu0
        %4255 = vmatpush.bf16.msra.mxu0 %v2719
        %4256 = vmatpush.bf16.msra.mxu0 %v2711
        %4257 = vmatpush.bf16.msra.mxu0 %v2703
        %4258 = vmatpush.bf16.msra.mxu0 %v2695
        %4259 = vmatpush.bf16.msra.mxu0 %v2687
        %4260 = vmatpush.bf16.msra.mxu0 %v2679
        %4261 = vmatpush.bf16.msra.mxu0 %v2671
        %4262 = vmatpush.bf16.msra.mxu0 %v2663
        %4263 = vmatmul.bf16.gmra.mxu0 %v393
        %v4264 = vpop.f32.mrf.mxu0
        %v4265 = vadd.f32 %v4252, %v4264
        %v4266 = vpop.f32.mrf.mxu0
        %4267 = vdwg.mxu0
        %4268 = vmatpush.bf16.msra.mxu0 %v2783
        %4269 = vmatpush.bf16.msra.mxu0 %v2775
        %4270 = vmatpush.bf16.msra.mxu0 %v2767
        %4271 = vmatpush.bf16.msra.mxu0 %v2759
        %4272 = vmatpush.bf16.msra.mxu0 %v2751
        %4273 = vmatpush.bf16.msra.mxu0 %v2743
        %4274 = vmatpush.bf16.msra.mxu0 %v2735
        %4275 = vmatpush.bf16.msra.mxu0 %v2727
        %4276 = vmatmul.bf16.gmra.mxu0 %v394
        %v4277 = vpop.f32.mrf.mxu0
        %v4278 = vadd.f32 %v4265, %v4277
        %v4279 = vpop.f32.mrf.mxu0
        %4280 = vdwg.mxu0
        %4281 = vmatpush.bf16.msra.mxu0 %v2847
        %4282 = vmatpush.bf16.msra.mxu0 %v2839
        %4283 = vmatpush.bf16.msra.mxu0 %v2831
        %4284 = vmatpush.bf16.msra.mxu0 %v2823
        %4285 = vmatpush.bf16.msra.mxu0 %v2815
        %4286 = vmatpush.bf16.msra.mxu0 %v2807
        %4287 = vmatpush.bf16.msra.mxu0 %v2799
        %4288 = vmatpush.bf16.msra.mxu0 %v2791
        %4289 = vmatmul.bf16.gmra.mxu0 %v395
        %v4290 = vpop.f32.mrf.mxu0
        %v4291 = vadd.f32 %v4278, %v4290
        %v4292 = vpop.f32.mrf.mxu0
        %4293 = vdwg.mxu0
        %4294 = vmatpush.bf16.msra.mxu0 %v2911
        %4295 = vmatpush.bf16.msra.mxu0 %v2903
        %4296 = vmatpush.bf16.msra.mxu0 %v2895
        %4297 = vmatpush.bf16.msra.mxu0 %v2887
        %4298 = vmatpush.bf16.msra.mxu0 %v2879
        %4299 = vmatpush.bf16.msra.mxu0 %v2871
        %4300 = vmatpush.bf16.msra.mxu0 %v2863
        %4301 = vmatpush.bf16.msra.mxu0 %v2855
        %4302 = vmatmul.bf16.gmra.mxu0 %v396
        %v4303 = vpop.f32.mrf.mxu0
        %v4304 = vadd.f32 %v4291, %v4303
        %v4305 = vpop.f32.mrf.mxu0
        %4306 = vdwg.mxu0
        %4307 = vmatpush.bf16.msra.mxu0 %v2975
        %4308 = vmatpush.bf16.msra.mxu0 %v2967
        %4309 = vmatpush.bf16.msra.mxu0 %v2959
        %4310 = vmatpush.bf16.msra.mxu0 %v2951
        %4311 = vmatpush.bf16.msra.mxu0 %v2943
        %4312 = vmatpush.bf16.msra.mxu0 %v2935
        %4313 = vmatpush.bf16.msra.mxu0 %v2927
        %4314 = vmatpush.bf16.msra.mxu0 %v2919
        %4315 = vmatmul.bf16.gmra.mxu0 %v397
        %v4316 = vpop.f32.mrf.mxu0
        %v4317 = vadd.f32 %v4304, %v4316
        %v4318 = vpop.f32.mrf.mxu0
        %4319 = vdwg.mxu0
        %v4320 = vmax.f32 %v3589, 0.0
        %v4321 = vmax.f32 %v3693, 0.0
        %v4322 = vmax.f32 %v3797, 0.0
        %v4323 = vmax.f32 %v3901, 0.0
        %v4324 = vmax.f32 %v4005, 0.0
        %v4325 = vmax.f32 %v4109, 0.0
        %v4326 = vmax.f32 %v4213, 0.0
        %v4327 = vmax.f32 %v4317, 0.0
        %v4328 = vld [vmem:[%s375] sm:$0xff]
        %v4329 = vld [vmem:[%s375 + $0x8] sm:$0xff]
        %v4330 = vpack.c.bf16 %v4320, %v4320
        %v4331 = vpack.c.bf16 %v4321, %v4321
        %v4332 = vpack.c.bf16 %v4322, %v4322
        %v4333 = vpack.c.bf16 %v4323, %v4323
        %v4334 = vpack.c.bf16 %v4324, %v4324
        %v4335 = vpack.c.bf16 %v4325, %v4325
        %v4336 = vpack.c.bf16 %v4326, %v4326
        %v4337 = vpack.c.bf16 %v4327, %v4327
        %v4338 = vld [vmem:[%s315] sm:$0xff]
        %v4339 = vld [vmem:[%s315 + $0x8] sm:$0xff]
        %v4340 = vld [vmem:[%s315 + $0x10] sm:$0xff]
        %v4341 = vld [vmem:[%s315 + $0x18] sm:$0xff]
        %v4342 = vld [vmem:[%s315 + $0x20] sm:$0xff]
        %v4343 = vld [vmem:[%s315 + $0x28] sm:$0xff]
        %v4344 = vld [vmem:[%s315 + $0x30] sm:$0xff]
        %v4345 = vld [vmem:[%s315 + $0x38] sm:$0xff]
        %v4346 = vld [vmem:[%s315 + $0x40] sm:$0xff]
        %v4347 = vld [vmem:[%s315 + $0x48] sm:$0xff]
        %v4348 = vld [vmem:[%s315 + $0x50] sm:$0xff]
        %v4349 = vld [vmem:[%s315 + $0x58] sm:$0xff]
        %v4350 = vld [vmem:[%s315 + $0x60] sm:$0xff]
        %v4351 = vld [vmem:[%s315 + $0x68] sm:$0xff]
        %v4352 = vld [vmem:[%s315 + $0x70] sm:$0xff]
        %v4353 = vld [vmem:[%s315 + $0x78] sm:$0xff]
        %v4354 = vld [vmem:[%s315 + $0x80] sm:$0xff]
        %v4355 = vld [vmem:[%s315 + $0x88] sm:$0xff]
        %v4356 = vld [vmem:[%s315 + $0x90] sm:$0xff]
        %v4357 = vld [vmem:[%s315 + $0x98] sm:$0xff]
        %v4358 = vld [vmem:[%s315 + $0xa0] sm:$0xff]
        %v4359 = vld [vmem:[%s315 + $0xa8] sm:$0xff]
        %v4360 = vld [vmem:[%s315 + $0xb0] sm:$0xff]
        %v4361 = vld [vmem:[%s315 + $0xb8] sm:$0xff]
        %v4362 = vld [vmem:[%s315 + $0xc0] sm:$0xff]
        %v4363 = vld [vmem:[%s315 + $0xc8] sm:$0xff]
        %v4364 = vld [vmem:[%s315 + $0xd0] sm:$0xff]
        %v4365 = vld [vmem:[%s315 + $0xd8] sm:$0xff]
        %v4366 = vld [vmem:[%s315 + $0xe0] sm:$0xff]
        %v4367 = vld [vmem:[%s315 + $0xe8] sm:$0xff]
        %v4368 = vld [vmem:[%s315 + $0xf0] sm:$0xff]
        %v4369 = vld [vmem:[%s315 + $0xf8] sm:$0xff]
        %v4370 = vld [vmem:[%s315 + $0x100] sm:$0xff]
        %v4371 = vld [vmem:[%s315 + $0x108] sm:$0xff]
        %v4372 = vld [vmem:[%s315 + $0x110] sm:$0xff]
        %v4373 = vld [vmem:[%s315 + $0x118] sm:$0xff]
        %v4374 = vld [vmem:[%s315 + $0x120] sm:$0xff]
        %v4375 = vld [vmem:[%s315 + $0x128] sm:$0xff]
        %v4376 = vld [vmem:[%s315 + $0x130] sm:$0xff]
        %v4377 = vld [vmem:[%s315 + $0x138] sm:$0xff]
        %v4378 = vld [vmem:[%s315 + $0x140] sm:$0xff]
        %v4379 = vld [vmem:[%s315 + $0x148] sm:$0xff]
        %v4380 = vld [vmem:[%s315 + $0x150] sm:$0xff]
        %v4381 = vld [vmem:[%s315 + $0x158] sm:$0xff]
        %v4382 = vld [vmem:[%s315 + $0x160] sm:$0xff]
        %v4383 = vld [vmem:[%s315 + $0x168] sm:$0xff]
        %v4384 = vld [vmem:[%s315 + $0x170] sm:$0xff]
        %v4385 = vld [vmem:[%s315 + $0x178] sm:$0xff]
        %v4386 = vld [vmem:[%s315 + $0x180] sm:$0xff]
        %v4387 = vld [vmem:[%s315 + $0x188] sm:$0xff]
        %v4388 = vld [vmem:[%s315 + $0x190] sm:$0xff]
        %v4389 = vld [vmem:[%s315 + $0x198] sm:$0xff]
        %v4390 = vld [vmem:[%s315 + $0x1a0] sm:$0xff]
        %v4391 = vld [vmem:[%s315 + $0x1a8] sm:$0xff]
        %v4392 = vld [vmem:[%s315 + $0x1b0] sm:$0xff]
        %v4393 = vld [vmem:[%s315 + $0x1b8] sm:$0xff]
        %v4394 = vld [vmem:[%s315 + $0x1c0] sm:$0xff]
        %v4395 = vld [vmem:[%s315 + $0x1c8] sm:$0xff]
        %v4396 = vld [vmem:[%s315 + $0x1d0] sm:$0xff]
        %v4397 = vld [vmem:[%s315 + $0x1d8] sm:$0xff]
        %v4398 = vld [vmem:[%s315 + $0x1e0] sm:$0xff]
        %v4399 = vld [vmem:[%s315 + $0x1e8] sm:$0xff]
        %v4400 = vld [vmem:[%s315 + $0x1f0] sm:$0xff]
        %v4401 = vld [vmem:[%s315 + $0x1f8] sm:$0xff]
        %v4402 = vld [vmem:[%s315 + $0x200] sm:$0xff]
        %v4403 = vld [vmem:[%s315 + $0x208] sm:$0xff]
        %v4404 = vld [vmem:[%s315 + $0x210] sm:$0xff]
        %v4405 = vld [vmem:[%s315 + $0x218] sm:$0xff]
        %v4406 = vld [vmem:[%s315 + $0x220] sm:$0xff]
        %v4407 = vld [vmem:[%s315 + $0x228] sm:$0xff]
        %v4408 = vld [vmem:[%s315 + $0x230] sm:$0xff]
        %v4409 = vld [vmem:[%s315 + $0x238] sm:$0xff]
        %v4410 = vld [vmem:[%s315 + $0x240] sm:$0xff]
        %v4411 = vld [vmem:[%s315 + $0x248] sm:$0xff]
        %v4412 = vld [vmem:[%s315 + $0x250] sm:$0xff]
        %v4413 = vld [vmem:[%s315 + $0x258] sm:$0xff]
        %v4414 = vld [vmem:[%s315 + $0x260] sm:$0xff]
        %v4415 = vld [vmem:[%s315 + $0x268] sm:$0xff]
        %v4416 = vld [vmem:[%s315 + $0x270] sm:$0xff]
        %v4417 = vld [vmem:[%s315 + $0x278] sm:$0xff]
        %v4418 = vld [vmem:[%s315 + $0x280] sm:$0xff]
        %v4419 = vld [vmem:[%s315 + $0x288] sm:$0xff]
        %v4420 = vld [vmem:[%s315 + $0x290] sm:$0xff]
        %v4421 = vld [vmem:[%s315 + $0x298] sm:$0xff]
        %v4422 = vld [vmem:[%s315 + $0x2a0] sm:$0xff]
        %v4423 = vld [vmem:[%s315 + $0x2a8] sm:$0xff]
        %v4424 = vld [vmem:[%s315 + $0x2b0] sm:$0xff]
        %v4425 = vld [vmem:[%s315 + $0x2b8] sm:$0xff]
        %v4426 = vld [vmem:[%s315 + $0x2c0] sm:$0xff]
        %v4427 = vld [vmem:[%s315 + $0x2c8] sm:$0xff]
        %v4428 = vld [vmem:[%s315 + $0x2d0] sm:$0xff]
        %v4429 = vld [vmem:[%s315 + $0x2d8] sm:$0xff]
        %v4430 = vld [vmem:[%s315 + $0x2e0] sm:$0xff]
        %v4431 = vld [vmem:[%s315 + $0x2e8] sm:$0xff]
        %v4432 = vld [vmem:[%s315 + $0x2f0] sm:$0xff]
        %v4433 = vld [vmem:[%s315 + $0x2f8] sm:$0xff]
        %v4434 = vld [vmem:[%s315 + $0x300] sm:$0xff]
        %v4435 = vld [vmem:[%s315 + $0x308] sm:$0xff]
        %v4436 = vld [vmem:[%s315 + $0x310] sm:$0xff]
        %v4437 = vld [vmem:[%s315 + $0x318] sm:$0xff]
        %v4438 = vld [vmem:[%s315 + $0x320] sm:$0xff]
        %v4439 = vld [vmem:[%s315 + $0x328] sm:$0xff]
        %v4440 = vld [vmem:[%s315 + $0x330] sm:$0xff]
        %v4441 = vld [vmem:[%s315 + $0x338] sm:$0xff]
        %v4442 = vld [vmem:[%s315 + $0x340] sm:$0xff]
        %v4443 = vld [vmem:[%s315 + $0x348] sm:$0xff]
        %v4444 = vld [vmem:[%s315 + $0x350] sm:$0xff]
        %v4445 = vld [vmem:[%s315 + $0x358] sm:$0xff]
        %v4446 = vld [vmem:[%s315 + $0x360] sm:$0xff]
        %v4447 = vld [vmem:[%s315 + $0x368] sm:$0xff]
        %v4448 = vld [vmem:[%s315 + $0x370] sm:$0xff]
        %v4449 = vld [vmem:[%s315 + $0x378] sm:$0xff]
        %v4450 = vld [vmem:[%s315 + $0x380] sm:$0xff]
        %v4451 = vld [vmem:[%s315 + $0x388] sm:$0xff]
        %v4452 = vld [vmem:[%s315 + $0x390] sm:$0xff]
        %v4453 = vld [vmem:[%s315 + $0x398] sm:$0xff]
        %v4454 = vld [vmem:[%s315 + $0x3a0] sm:$0xff]
        %v4455 = vld [vmem:[%s315 + $0x3a8] sm:$0xff]
        %v4456 = vld [vmem:[%s315 + $0x3b0] sm:$0xff]
        %v4457 = vld [vmem:[%s315 + $0x3b8] sm:$0xff]
        %v4458 = vld [vmem:[%s315 + $0x3c0] sm:$0xff]
        %v4459 = vld [vmem:[%s315 + $0x3c8] sm:$0xff]
        %v4460 = vld [vmem:[%s315 + $0x3d0] sm:$0xff]
        %v4461 = vld [vmem:[%s315 + $0x3d8] sm:$0xff]
        %v4462 = vld [vmem:[%s315 + $0x3e0] sm:$0xff]
        %v4463 = vld [vmem:[%s315 + $0x3e8] sm:$0xff]
        %v4464 = vld [vmem:[%s315 + $0x3f0] sm:$0xff]
        %v4465 = vld [vmem:[%s315 + $0x3f8] sm:$0xff]
        %v4594 = vunpack.c.l.b16 %v4338
        %v4595 = vunpack.c.h.b16 %v4338
        %v4596 = vunpack.c.l.b16 %v4339
        %v4597 = vunpack.c.h.b16 %v4339
        %v4598 = vunpack.c.l.b16 %v4340
        %v4599 = vunpack.c.h.b16 %v4340
        %v4600 = vunpack.c.l.b16 %v4341
        %v4601 = vunpack.c.h.b16 %v4341
        %v4602 = vunpack.c.l.b16 %v4342
        %v4603 = vunpack.c.h.b16 %v4342
        %v4604 = vunpack.c.l.b16 %v4343
        %v4605 = vunpack.c.h.b16 %v4343
        %v4606 = vunpack.c.l.b16 %v4344
        %v4607 = vunpack.c.h.b16 %v4344
        %v4608 = vunpack.c.l.b16 %v4345
        %v4609 = vunpack.c.h.b16 %v4345
        %v4610 = vunpack.c.l.b16 %v4346
        %v4611 = vunpack.c.h.b16 %v4346
        %v4612 = vunpack.c.l.b16 %v4347
        %v4613 = vunpack.c.h.b16 %v4347
        %v4614 = vunpack.c.l.b16 %v4348
        %v4615 = vunpack.c.h.b16 %v4348
        %v4616 = vunpack.c.l.b16 %v4349
        %v4617 = vunpack.c.h.b16 %v4349
        %v4618 = vunpack.c.l.b16 %v4350
        %v4619 = vunpack.c.h.b16 %v4350
        %v4620 = vunpack.c.l.b16 %v4351
        %v4621 = vunpack.c.h.b16 %v4351
        %v4622 = vunpack.c.l.b16 %v4352
        %v4623 = vunpack.c.h.b16 %v4352
        %v4624 = vunpack.c.l.b16 %v4353
        %v4625 = vunpack.c.h.b16 %v4353
        %v4626 = vunpack.c.l.b16 %v4354
        %v4627 = vunpack.c.h.b16 %v4354
        %v4628 = vunpack.c.l.b16 %v4355
        %v4629 = vunpack.c.h.b16 %v4355
        %v4630 = vunpack.c.l.b16 %v4356
        %v4631 = vunpack.c.h.b16 %v4356
        %v4632 = vunpack.c.l.b16 %v4357
        %v4633 = vunpack.c.h.b16 %v4357
        %v4634 = vunpack.c.l.b16 %v4358
        %v4635 = vunpack.c.h.b16 %v4358
        %v4636 = vunpack.c.l.b16 %v4359
        %v4637 = vunpack.c.h.b16 %v4359
        %v4638 = vunpack.c.l.b16 %v4360
        %v4639 = vunpack.c.h.b16 %v4360
        %v4640 = vunpack.c.l.b16 %v4361
        %v4641 = vunpack.c.h.b16 %v4361
        %v4642 = vunpack.c.l.b16 %v4362
        %v4643 = vunpack.c.h.b16 %v4362
        %v4644 = vunpack.c.l.b16 %v4363
        %v4645 = vunpack.c.h.b16 %v4363
        %v4646 = vunpack.c.l.b16 %v4364
        %v4647 = vunpack.c.h.b16 %v4364
        %v4648 = vunpack.c.l.b16 %v4365
        %v4649 = vunpack.c.h.b16 %v4365
        %v4650 = vunpack.c.l.b16 %v4366
        %v4651 = vunpack.c.h.b16 %v4366
        %v4652 = vunpack.c.l.b16 %v4367
        %v4653 = vunpack.c.h.b16 %v4367
        %v4654 = vunpack.c.l.b16 %v4368
        %v4655 = vunpack.c.h.b16 %v4368
        %v4656 = vunpack.c.l.b16 %v4369
        %v4657 = vunpack.c.h.b16 %v4369
        %v4658 = vunpack.c.l.b16 %v4370
        %v4659 = vunpack.c.h.b16 %v4370
        %v4660 = vunpack.c.l.b16 %v4371
        %v4661 = vunpack.c.h.b16 %v4371
        %v4662 = vunpack.c.l.b16 %v4372
        %v4663 = vunpack.c.h.b16 %v4372
        %v4664 = vunpack.c.l.b16 %v4373
        %v4665 = vunpack.c.h.b16 %v4373
        %v4666 = vunpack.c.l.b16 %v4374
        %v4667 = vunpack.c.h.b16 %v4374
        %v4668 = vunpack.c.l.b16 %v4375
        %v4669 = vunpack.c.h.b16 %v4375
        %v4670 = vunpack.c.l.b16 %v4376
        %v4671 = vunpack.c.h.b16 %v4376
        %v4672 = vunpack.c.l.b16 %v4377
        %v4673 = vunpack.c.h.b16 %v4377
        %v4674 = vunpack.c.l.b16 %v4378
        %v4675 = vunpack.c.h.b16 %v4378
        %v4676 = vunpack.c.l.b16 %v4379
        %v4677 = vunpack.c.h.b16 %v4379
        %v4678 = vunpack.c.l.b16 %v4380
        %v4679 = vunpack.c.h.b16 %v4380
        %v4680 = vunpack.c.l.b16 %v4381
        %v4681 = vunpack.c.h.b16 %v4381
        %v4682 = vunpack.c.l.b16 %v4382
        %v4683 = vunpack.c.h.b16 %v4382
        %v4684 = vunpack.c.l.b16 %v4383
        %v4685 = vunpack.c.h.b16 %v4383
        %v4686 = vunpack.c.l.b16 %v4384
        %v4687 = vunpack.c.h.b16 %v4384
        %v4688 = vunpack.c.l.b16 %v4385
        %v4689 = vunpack.c.h.b16 %v4385
        %v4690 = vunpack.c.l.b16 %v4386
        %v4691 = vunpack.c.h.b16 %v4386
        %v4692 = vunpack.c.l.b16 %v4387
        %v4693 = vunpack.c.h.b16 %v4387
        %v4694 = vunpack.c.l.b16 %v4388
        %v4695 = vunpack.c.h.b16 %v4388
        %v4696 = vunpack.c.l.b16 %v4389
        %v4697 = vunpack.c.h.b16 %v4389
        %v4698 = vunpack.c.l.b16 %v4390
        %v4699 = vunpack.c.h.b16 %v4390
        %v4700 = vunpack.c.l.b16 %v4391
        %v4701 = vunpack.c.h.b16 %v4391
        %v4702 = vunpack.c.l.b16 %v4392
        %v4703 = vunpack.c.h.b16 %v4392
        %v4704 = vunpack.c.l.b16 %v4393
        %v4705 = vunpack.c.h.b16 %v4393
        %v4706 = vunpack.c.l.b16 %v4394
        %v4707 = vunpack.c.h.b16 %v4394
        %v4708 = vunpack.c.l.b16 %v4395
        %v4709 = vunpack.c.h.b16 %v4395
        %v4710 = vunpack.c.l.b16 %v4396
        %v4711 = vunpack.c.h.b16 %v4396
        %v4712 = vunpack.c.l.b16 %v4397
        %v4713 = vunpack.c.h.b16 %v4397
        %v4714 = vunpack.c.l.b16 %v4398
        %v4715 = vunpack.c.h.b16 %v4398
        %v4716 = vunpack.c.l.b16 %v4399
        %v4717 = vunpack.c.h.b16 %v4399
        %v4718 = vunpack.c.l.b16 %v4400
        %v4719 = vunpack.c.h.b16 %v4400
        %v4720 = vunpack.c.l.b16 %v4401
        %v4721 = vunpack.c.h.b16 %v4401
        %v4722 = vunpack.c.l.b16 %v4402
        %v4723 = vunpack.c.h.b16 %v4402
        %v4724 = vunpack.c.l.b16 %v4403
        %v4725 = vunpack.c.h.b16 %v4403
        %v4726 = vunpack.c.l.b16 %v4404
        %v4727 = vunpack.c.h.b16 %v4404
        %v4728 = vunpack.c.l.b16 %v4405
        %v4729 = vunpack.c.h.b16 %v4405
        %v4730 = vunpack.c.l.b16 %v4406
        %v4731 = vunpack.c.h.b16 %v4406
        %v4732 = vunpack.c.l.b16 %v4407
        %v4733 = vunpack.c.h.b16 %v4407
        %v4734 = vunpack.c.l.b16 %v4408
        %v4735 = vunpack.c.h.b16 %v4408
        %v4736 = vunpack.c.l.b16 %v4409
        %v4737 = vunpack.c.h.b16 %v4409
        %v4738 = vunpack.c.l.b16 %v4410
        %v4739 = vunpack.c.h.b16 %v4410
        %v4740 = vunpack.c.l.b16 %v4411
        %v4741 = vunpack.c.h.b16 %v4411
        %v4742 = vunpack.c.l.b16 %v4412
        %v4743 = vunpack.c.h.b16 %v4412
        %v4744 = vunpack.c.l.b16 %v4413
        %v4745 = vunpack.c.h.b16 %v4413
        %v4746 = vunpack.c.l.b16 %v4414
        %v4747 = vunpack.c.h.b16 %v4414
        %v4748 = vunpack.c.l.b16 %v4415
        %v4749 = vunpack.c.h.b16 %v4415
        %v4750 = vunpack.c.l.b16 %v4416
        %v4751 = vunpack.c.h.b16 %v4416
        %v4752 = vunpack.c.l.b16 %v4417
        %v4753 = vunpack.c.h.b16 %v4417
        %v4754 = vunpack.c.l.b16 %v4418
        %v4755 = vunpack.c.h.b16 %v4418
        %v4756 = vunpack.c.l.b16 %v4419
        %v4757 = vunpack.c.h.b16 %v4419
        %v4758 = vunpack.c.l.b16 %v4420
        %v4759 = vunpack.c.h.b16 %v4420
        %v4760 = vunpack.c.l.b16 %v4421
        %v4761 = vunpack.c.h.b16 %v4421
        %v4762 = vunpack.c.l.b16 %v4422
        %v4763 = vunpack.c.h.b16 %v4422
        %v4764 = vunpack.c.l.b16 %v4423
        %v4765 = vunpack.c.h.b16 %v4423
        %v4766 = vunpack.c.l.b16 %v4424
        %v4767 = vunpack.c.h.b16 %v4424
        %v4768 = vunpack.c.l.b16 %v4425
        %v4769 = vunpack.c.h.b16 %v4425
        %v4770 = vunpack.c.l.b16 %v4426
        %v4771 = vunpack.c.h.b16 %v4426
        %v4772 = vunpack.c.l.b16 %v4427
        %v4773 = vunpack.c.h.b16 %v4427
        %v4774 = vunpack.c.l.b16 %v4428
        %v4775 = vunpack.c.h.b16 %v4428
        %v4776 = vunpack.c.l.b16 %v4429
        %v4777 = vunpack.c.h.b16 %v4429
        %v4778 = vunpack.c.l.b16 %v4430
        %v4779 = vunpack.c.h.b16 %v4430
        %v4780 = vunpack.c.l.b16 %v4431
        %v4781 = vunpack.c.h.b16 %v4431
        %v4782 = vunpack.c.l.b16 %v4432
        %v4783 = vunpack.c.h.b16 %v4432
        %v4784 = vunpack.c.l.b16 %v4433
        %v4785 = vunpack.c.h.b16 %v4433
        %v4786 = vunpack.c.l.b16 %v4434
        %v4787 = vunpack.c.h.b16 %v4434
        %v4788 = vunpack.c.l.b16 %v4435
        %v4789 = vunpack.c.h.b16 %v4435
        %v4790 = vunpack.c.l.b16 %v4436
        %v4791 = vunpack.c.h.b16 %v4436
        %v4792 = vunpack.c.l.b16 %v4437
        %v4793 = vunpack.c.h.b16 %v4437
        %v4794 = vunpack.c.l.b16 %v4438
        %v4795 = vunpack.c.h.b16 %v4438
        %v4796 = vunpack.c.l.b16 %v4439
        %v4797 = vunpack.c.h.b16 %v4439
        %v4798 = vunpack.c.l.b16 %v4440
        %v4799 = vunpack.c.h.b16 %v4440
        %v4800 = vunpack.c.l.b16 %v4441
        %v4801 = vunpack.c.h.b16 %v4441
        %v4802 = vunpack.c.l.b16 %v4442
        %v4803 = vunpack.c.h.b16 %v4442
        %v4804 = vunpack.c.l.b16 %v4443
        %v4805 = vunpack.c.h.b16 %v4443
        %v4806 = vunpack.c.l.b16 %v4444
        %v4807 = vunpack.c.h.b16 %v4444
        %v4808 = vunpack.c.l.b16 %v4445
        %v4809 = vunpack.c.h.b16 %v4445
        %v4810 = vunpack.c.l.b16 %v4446
        %v4811 = vunpack.c.h.b16 %v4446
        %v4812 = vunpack.c.l.b16 %v4447
        %v4813 = vunpack.c.h.b16 %v4447
        %v4814 = vunpack.c.l.b16 %v4448
        %v4815 = vunpack.c.h.b16 %v4448
        %v4816 = vunpack.c.l.b16 %v4449
        %v4817 = vunpack.c.h.b16 %v4449
        %v4818 = vunpack.c.l.b16 %v4450
        %v4819 = vunpack.c.h.b16 %v4450
        %v4820 = vunpack.c.l.b16 %v4451
        %v4821 = vunpack.c.h.b16 %v4451
        %v4822 = vunpack.c.l.b16 %v4452
        %v4823 = vunpack.c.h.b16 %v4452
        %v4824 = vunpack.c.l.b16 %v4453
        %v4825 = vunpack.c.h.b16 %v4453
        %v4826 = vunpack.c.l.b16 %v4454
        %v4827 = vunpack.c.h.b16 %v4454
        %v4828 = vunpack.c.l.b16 %v4455
        %v4829 = vunpack.c.h.b16 %v4455
        %v4830 = vunpack.c.l.b16 %v4456
        %v4831 = vunpack.c.h.b16 %v4456
        %v4832 = vunpack.c.l.b16 %v4457
        %v4833 = vunpack.c.h.b16 %v4457
        %v4834 = vunpack.c.l.b16 %v4458
        %v4835 = vunpack.c.h.b16 %v4458
        %v4836 = vunpack.c.l.b16 %v4459
        %v4837 = vunpack.c.h.b16 %v4459
        %v4838 = vunpack.c.l.b16 %v4460
        %v4839 = vunpack.c.h.b16 %v4460
        %v4840 = vunpack.c.l.b16 %v4461
        %v4841 = vunpack.c.h.b16 %v4461
        %v4842 = vunpack.c.l.b16 %v4462
        %v4843 = vunpack.c.h.b16 %v4462
        %v4844 = vunpack.c.l.b16 %v4463
        %v4845 = vunpack.c.h.b16 %v4463
        %v4846 = vunpack.c.l.b16 %v4464
        %v4847 = vunpack.c.h.b16 %v4464
        %v4848 = vunpack.c.l.b16 %v4465
        %v4849 = vunpack.c.h.b16 %v4465
        %v4850 = vpack.c.b16 %v4596, %v4594
        %v4851 = vpack.c.b16 %v4597, %v4595
        %v4852 = vpack.c.b16 %v4600, %v4598
        %v4853 = vpack.c.b16 %v4601, %v4599
        %v4854 = vpack.c.b16 %v4604, %v4602
        %v4855 = vpack.c.b16 %v4605, %v4603
        %v4856 = vpack.c.b16 %v4608, %v4606
        %v4857 = vpack.c.b16 %v4609, %v4607
        %v4858 = vpack.c.b16 %v4612, %v4610
        %v4859 = vpack.c.b16 %v4613, %v4611
        %v4860 = vpack.c.b16 %v4616, %v4614
        %v4861 = vpack.c.b16 %v4617, %v4615
        %v4862 = vpack.c.b16 %v4620, %v4618
        %v4863 = vpack.c.b16 %v4621, %v4619
        %v4864 = vpack.c.b16 %v4624, %v4622
        %v4865 = vpack.c.b16 %v4625, %v4623
        %v4866 = vpack.c.b16 %v4628, %v4626
        %v4867 = vpack.c.b16 %v4629, %v4627
        %v4868 = vpack.c.b16 %v4632, %v4630
        %v4869 = vpack.c.b16 %v4633, %v4631
        %v4870 = vpack.c.b16 %v4636, %v4634
        %v4871 = vpack.c.b16 %v4637, %v4635
        %v4872 = vpack.c.b16 %v4640, %v4638
        %v4873 = vpack.c.b16 %v4641, %v4639
        %v4874 = vpack.c.b16 %v4644, %v4642
        %v4875 = vpack.c.b16 %v4645, %v4643
        %v4876 = vpack.c.b16 %v4648, %v4646
        %v4877 = vpack.c.b16 %v4649, %v4647
        %v4878 = vpack.c.b16 %v4652, %v4650
        %v4879 = vpack.c.b16 %v4653, %v4651
        %v4880 = vpack.c.b16 %v4656, %v4654
        %v4881 = vpack.c.b16 %v4657, %v4655
        %v4882 = vpack.c.b16 %v4660, %v4658
        %v4883 = vpack.c.b16 %v4661, %v4659
        %v4884 = vpack.c.b16 %v4664, %v4662
        %v4885 = vpack.c.b16 %v4665, %v4663
        %v4886 = vpack.c.b16 %v4668, %v4666
        %v4887 = vpack.c.b16 %v4669, %v4667
        %v4888 = vpack.c.b16 %v4672, %v4670
        %v4889 = vpack.c.b16 %v4673, %v4671
        %v4890 = vpack.c.b16 %v4676, %v4674
        %v4891 = vpack.c.b16 %v4677, %v4675
        %v4892 = vpack.c.b16 %v4680, %v4678
        %v4893 = vpack.c.b16 %v4681, %v4679
        %v4894 = vpack.c.b16 %v4684, %v4682
        %v4895 = vpack.c.b16 %v4685, %v4683
        %v4896 = vpack.c.b16 %v4688, %v4686
        %v4897 = vpack.c.b16 %v4689, %v4687
        %v4898 = vpack.c.b16 %v4692, %v4690
        %v4899 = vpack.c.b16 %v4693, %v4691
        %v4900 = vpack.c.b16 %v4696, %v4694
        %v4901 = vpack.c.b16 %v4697, %v4695
        %v4902 = vpack.c.b16 %v4700, %v4698
        %v4903 = vpack.c.b16 %v4701, %v4699
        %v4904 = vpack.c.b16 %v4704, %v4702
        %v4905 = vpack.c.b16 %v4705, %v4703
        %v4906 = vpack.c.b16 %v4708, %v4706
        %v4907 = vpack.c.b16 %v4709, %v4707
        %v4908 = vpack.c.b16 %v4712, %v4710
        %v4909 = vpack.c.b16 %v4713, %v4711
        %v4910 = vpack.c.b16 %v4716, %v4714
        %v4911 = vpack.c.b16 %v4717, %v4715
        %v4912 = vpack.c.b16 %v4720, %v4718
        %v4913 = vpack.c.b16 %v4721, %v4719
        %v4914 = vpack.c.b16 %v4724, %v4722
        %v4915 = vpack.c.b16 %v4725, %v4723
        %v4916 = vpack.c.b16 %v4728, %v4726
        %v4917 = vpack.c.b16 %v4729, %v4727
        %v4918 = vpack.c.b16 %v4732, %v4730
        %v4919 = vpack.c.b16 %v4733, %v4731
        %v4920 = vpack.c.b16 %v4736, %v4734
        %v4921 = vpack.c.b16 %v4737, %v4735
        %v4922 = vpack.c.b16 %v4740, %v4738
        %v4923 = vpack.c.b16 %v4741, %v4739
        %v4924 = vpack.c.b16 %v4744, %v4742
        %v4925 = vpack.c.b16 %v4745, %v4743
        %v4926 = vpack.c.b16 %v4748, %v4746
        %v4927 = vpack.c.b16 %v4749, %v4747
        %v4928 = vpack.c.b16 %v4752, %v4750
        %v4929 = vpack.c.b16 %v4753, %v4751
        %v4930 = vpack.c.b16 %v4756, %v4754
        %v4931 = vpack.c.b16 %v4757, %v4755
        %v4932 = vpack.c.b16 %v4760, %v4758
        %v4933 = vpack.c.b16 %v4761, %v4759
        %v4934 = vpack.c.b16 %v4764, %v4762
        %v4935 = vpack.c.b16 %v4765, %v4763
        %v4936 = vpack.c.b16 %v4768, %v4766
        %v4937 = vpack.c.b16 %v4769, %v4767
        %v4938 = vpack.c.b16 %v4772, %v4770
        %v4939 = vpack.c.b16 %v4773, %v4771
        %v4940 = vpack.c.b16 %v4776, %v4774
        %v4941 = vpack.c.b16 %v4777, %v4775
        %v4942 = vpack.c.b16 %v4780, %v4778
        %v4943 = vpack.c.b16 %v4781, %v4779
        %v4944 = vpack.c.b16 %v4784, %v4782
        %v4945 = vpack.c.b16 %v4785, %v4783
        %v4946 = vpack.c.b16 %v4788, %v4786
        %v4947 = vpack.c.b16 %v4789, %v4787
        %v4948 = vpack.c.b16 %v4792, %v4790
        %v4949 = vpack.c.b16 %v4793, %v4791
        %v4950 = vpack.c.b16 %v4796, %v4794
        %v4951 = vpack.c.b16 %v4797, %v4795
        %v4952 = vpack.c.b16 %v4800, %v4798
        %v4953 = vpack.c.b16 %v4801, %v4799
        %v4954 = vpack.c.b16 %v4804, %v4802
        %v4955 = vpack.c.b16 %v4805, %v4803
        %v4956 = vpack.c.b16 %v4808, %v4806
        %v4957 = vpack.c.b16 %v4809, %v4807
        %v4958 = vpack.c.b16 %v4812, %v4810
        %v4959 = vpack.c.b16 %v4813, %v4811
        %v4960 = vpack.c.b16 %v4816, %v4814
        %v4961 = vpack.c.b16 %v4817, %v4815
        %v4962 = vpack.c.b16 %v4820, %v4818
        %v4963 = vpack.c.b16 %v4821, %v4819
        %v4964 = vpack.c.b16 %v4824, %v4822
        %v4965 = vpack.c.b16 %v4825, %v4823
        %v4966 = vpack.c.b16 %v4828, %v4826
        %v4967 = vpack.c.b16 %v4829, %v4827
        %v4968 = vpack.c.b16 %v4832, %v4830
        %v4969 = vpack.c.b16 %v4833, %v4831
        %v4970 = vpack.c.b16 %v4836, %v4834
        %v4971 = vpack.c.b16 %v4837, %v4835
        %v4972 = vpack.c.b16 %v4840, %v4838
        %v4973 = vpack.c.b16 %v4841, %v4839
        %v4974 = vpack.c.b16 %v4844, %v4842
        %v4975 = vpack.c.b16 %v4845, %v4843
        %v4976 = vpack.c.b16 %v4848, %v4846
        %v4977 = vpack.c.b16 %v4849, %v4847
        %5106 = vmatpush.bf16.msra.mxu0 %v4864
        %5107 = vmatpush.bf16.msra.mxu0 %v4862
        %5108 = vmatpush.bf16.msra.mxu0 %v4860
        %5109 = vmatpush.bf16.msra.mxu0 %v4858
        %5110 = vmatpush.bf16.msra.mxu0 %v4856
        %5111 = vmatpush.bf16.msra.mxu0 %v4854
        %5112 = vmatpush.bf16.msra.mxu0 %v4852
        %5113 = vmatpush.bf16.msra.mxu0 %v4850
        %5114 = vmatmul.bf16.gmra.mxu0 %v4330
        %v5115 = vpop.f32.mrf.mxu0
        %v5116 = vadd.f32 0.0, %v5115
        %v5117 = vpop.f32.mrf.mxu0
        %5118 = vdwg.mxu0
        %5119 = vmatpush.bf16.msra.mxu0 %v4880
        %5120 = vmatpush.bf16.msra.mxu0 %v4878
        %5121 = vmatpush.bf16.msra.mxu0 %v4876
        %5122 = vmatpush.bf16.msra.mxu0 %v4874
        %5123 = vmatpush.bf16.msra.mxu0 %v4872
        %5124 = vmatpush.bf16.msra.mxu0 %v4870
        %5125 = vmatpush.bf16.msra.mxu0 %v4868
        %5126 = vmatpush.bf16.msra.mxu0 %v4866
        %5127 = vmatmul.bf16.gmra.mxu0 %v4331
        %v5128 = vpop.f32.mrf.mxu0
        %v5129 = vadd.f32 %v5116, %v5128
        %v5130 = vpop.f32.mrf.mxu0
        %5131 = vdwg.mxu0
        %5132 = vmatpush.bf16.msra.mxu0 %v4896
        %5133 = vmatpush.bf16.msra.mxu0 %v4894
        %5134 = vmatpush.bf16.msra.mxu0 %v4892
        %5135 = vmatpush.bf16.msra.mxu0 %v4890
        %5136 = vmatpush.bf16.msra.mxu0 %v4888
        %5137 = vmatpush.bf16.msra.mxu0 %v4886
        %5138 = vmatpush.bf16.msra.mxu0 %v4884
        %5139 = vmatpush.bf16.msra.mxu0 %v4882
        %5140 = vmatmul.bf16.gmra.mxu0 %v4332
        %v5141 = vpop.f32.mrf.mxu0
        %v5142 = vadd.f32 %v5129, %v5141
        %v5143 = vpop.f32.mrf.mxu0
        %5144 = vdwg.mxu0
        %5145 = vmatpush.bf16.msra.mxu0 %v4912
        %5146 = vmatpush.bf16.msra.mxu0 %v4910
        %5147 = vmatpush.bf16.msra.mxu0 %v4908
        %5148 = vmatpush.bf16.msra.mxu0 %v4906
        %5149 = vmatpush.bf16.msra.mxu0 %v4904
        %5150 = vmatpush.bf16.msra.mxu0 %v4902
        %5151 = vmatpush.bf16.msra.mxu0 %v4900
        %5152 = vmatpush.bf16.msra.mxu0 %v4898
        %5153 = vmatmul.bf16.gmra.mxu0 %v4333
        %v5154 = vpop.f32.mrf.mxu0
        %v5155 = vadd.f32 %v5142, %v5154
        %v5156 = vpop.f32.mrf.mxu0
        %5157 = vdwg.mxu0
        %5158 = vmatpush.bf16.msra.mxu0 %v4928
        %5159 = vmatpush.bf16.msra.mxu0 %v4926
        %5160 = vmatpush.bf16.msra.mxu0 %v4924
        %5161 = vmatpush.bf16.msra.mxu0 %v4922
        %5162 = vmatpush.bf16.msra.mxu0 %v4920
        %5163 = vmatpush.bf16.msra.mxu0 %v4918
        %5164 = vmatpush.bf16.msra.mxu0 %v4916
        %5165 = vmatpush.bf16.msra.mxu0 %v4914
        %5166 = vmatmul.bf16.gmra.mxu0 %v4334
        %v5167 = vpop.f32.mrf.mxu0
        %v5168 = vadd.f32 %v5155, %v5167
        %v5169 = vpop.f32.mrf.mxu0
        %5170 = vdwg.mxu0
        %5171 = vmatpush.bf16.msra.mxu0 %v4944
        %5172 = vmatpush.bf16.msra.mxu0 %v4942
        %5173 = vmatpush.bf16.msra.mxu0 %v4940
        %5174 = vmatpush.bf16.msra.mxu0 %v4938
        %5175 = vmatpush.bf16.msra.mxu0 %v4936
        %5176 = vmatpush.bf16.msra.mxu0 %v4934
        %5177 = vmatpush.bf16.msra.mxu0 %v4932
        %5178 = vmatpush.bf16.msra.mxu0 %v4930
        %5179 = vmatmul.bf16.gmra.mxu0 %v4335
        %v5180 = vpop.f32.mrf.mxu0
        %v5181 = vadd.f32 %v5168, %v5180
        %v5182 = vpop.f32.mrf.mxu0
        %5183 = vdwg.mxu0
        %5184 = vmatpush.bf16.msra.mxu0 %v4960
        %5185 = vmatpush.bf16.msra.mxu0 %v4958
        %5186 = vmatpush.bf16.msra.mxu0 %v4956
        %5187 = vmatpush.bf16.msra.mxu0 %v4954
        %5188 = vmatpush.bf16.msra.mxu0 %v4952
        %5189 = vmatpush.bf16.msra.mxu0 %v4950
        %5190 = vmatpush.bf16.msra.mxu0 %v4948
        %5191 = vmatpush.bf16.msra.mxu0 %v4946
        %5192 = vmatmul.bf16.gmra.mxu0 %v4336
        %v5193 = vpop.f32.mrf.mxu0
        %v5194 = vadd.f32 %v5181, %v5193
        %v5195 = vpop.f32.mrf.mxu0
        %5196 = vdwg.mxu0
        %5197 = vmatpush.bf16.msra.mxu0 %v4976
        %5198 = vmatpush.bf16.msra.mxu0 %v4974
        %5199 = vmatpush.bf16.msra.mxu0 %v4972
        %5200 = vmatpush.bf16.msra.mxu0 %v4970
        %5201 = vmatpush.bf16.msra.mxu0 %v4968
        %5202 = vmatpush.bf16.msra.mxu0 %v4966
        %5203 = vmatpush.bf16.msra.mxu0 %v4964
        %5204 = vmatpush.bf16.msra.mxu0 %v4962
        %5205 = vmatmul.bf16.gmra.mxu0 %v4337
        %v5206 = vpop.f32.mrf.mxu0
        %v5207 = vadd.f32 %v5194, %v5206
        %v5208 = vpop.f32.mrf.mxu0
        %5209 = vdwg.mxu0
        %5210 = vmatpush.bf16.msra.mxu0 %v4865
        %5211 = vmatpush.bf16.msra.mxu0 %v4863
        %5212 = vmatpush.bf16.msra.mxu0 %v4861
        %5213 = vmatpush.bf16.msra.mxu0 %v4859
        %5214 = vmatpush.bf16.msra.mxu0 %v4857
        %5215 = vmatpush.bf16.msra.mxu0 %v4855
        %5216 = vmatpush.bf16.msra.mxu0 %v4853
        %5217 = vmatpush.bf16.msra.mxu0 %v4851
        %5218 = vmatmul.bf16.gmra.mxu0 %v4330
        %v5219 = vpop.f32.mrf.mxu0
        %v5220 = vadd.f32 0.0, %v5219
        %v5221 = vpop.f32.mrf.mxu0
        %5222 = vdwg.mxu0
        %5223 = vmatpush.bf16.msra.mxu0 %v4881
        %5224 = vmatpush.bf16.msra.mxu0 %v4879
        %5225 = vmatpush.bf16.msra.mxu0 %v4877
        %5226 = vmatpush.bf16.msra.mxu0 %v4875
        %5227 = vmatpush.bf16.msra.mxu0 %v4873
        %5228 = vmatpush.bf16.msra.mxu0 %v4871
        %5229 = vmatpush.bf16.msra.mxu0 %v4869
        %5230 = vmatpush.bf16.msra.mxu0 %v4867
        %5231 = vmatmul.bf16.gmra.mxu0 %v4331
        %v5232 = vpop.f32.mrf.mxu0
        %v5233 = vadd.f32 %v5220, %v5232
        %v5234 = vpop.f32.mrf.mxu0
        %5235 = vdwg.mxu0
        %5236 = vmatpush.bf16.msra.mxu0 %v4897
        %5237 = vmatpush.bf16.msra.mxu0 %v4895
        %5238 = vmatpush.bf16.msra.mxu0 %v4893
        %5239 = vmatpush.bf16.msra.mxu0 %v4891
        %5240 = vmatpush.bf16.msra.mxu0 %v4889
        %5241 = vmatpush.bf16.msra.mxu0 %v4887
        %5242 = vmatpush.bf16.msra.mxu0 %v4885
        %5243 = vmatpush.bf16.msra.mxu0 %v4883
        %5244 = vmatmul.bf16.gmra.mxu0 %v4332
        %v5245 = vpop.f32.mrf.mxu0
        %v5246 = vadd.f32 %v5233, %v5245
        %v5247 = vpop.f32.mrf.mxu0
        %5248 = vdwg.mxu0
        %5249 = vmatpush.bf16.msra.mxu0 %v4913
        %5250 = vmatpush.bf16.msra.mxu0 %v4911
        %5251 = vmatpush.bf16.msra.mxu0 %v4909
        %5252 = vmatpush.bf16.msra.mxu0 %v4907
        %5253 = vmatpush.bf16.msra.mxu0 %v4905
        %5254 = vmatpush.bf16.msra.mxu0 %v4903
        %5255 = vmatpush.bf16.msra.mxu0 %v4901
        %5256 = vmatpush.bf16.msra.mxu0 %v4899
        %5257 = vmatmul.bf16.gmra.mxu0 %v4333
        %v5258 = vpop.f32.mrf.mxu0
        %v5259 = vadd.f32 %v5246, %v5258
        %v5260 = vpop.f32.mrf.mxu0
        %5261 = vdwg.mxu0
        %5262 = vmatpush.bf16.msra.mxu0 %v4929
        %5263 = vmatpush.bf16.msra.mxu0 %v4927
        %5264 = vmatpush.bf16.msra.mxu0 %v4925
        %5265 = vmatpush.bf16.msra.mxu0 %v4923
        %5266 = vmatpush.bf16.msra.mxu0 %v4921
        %5267 = vmatpush.bf16.msra.mxu0 %v4919
        %5268 = vmatpush.bf16.msra.mxu0 %v4917
        %5269 = vmatpush.bf16.msra.mxu0 %v4915
        %5270 = vmatmul.bf16.gmra.mxu0 %v4334
        %v5271 = vpop.f32.mrf.mxu0
        %v5272 = vadd.f32 %v5259, %v5271
        %v5273 = vpop.f32.mrf.mxu0
        %5274 = vdwg.mxu0
        %5275 = vmatpush.bf16.msra.mxu0 %v4945
        %5276 = vmatpush.bf16.msra.mxu0 %v4943
        %5277 = vmatpush.bf16.msra.mxu0 %v4941
        %5278 = vmatpush.bf16.msra.mxu0 %v4939
        %5279 = vmatpush.bf16.msra.mxu0 %v4937
        %5280 = vmatpush.bf16.msra.mxu0 %v4935
        %5281 = vmatpush.bf16.msra.mxu0 %v4933
        %5282 = vmatpush.bf16.msra.mxu0 %v4931
        %5283 = vmatmul.bf16.gmra.mxu0 %v4335
        %v5284 = vpop.f32.mrf.mxu0
        %v5285 = vadd.f32 %v5272, %v5284
        %v5286 = vpop.f32.mrf.mxu0
        %5287 = vdwg.mxu0
        %5288 = vmatpush.bf16.msra.mxu0 %v4961
        %5289 = vmatpush.bf16.msra.mxu0 %v4959
        %5290 = vmatpush.bf16.msra.mxu0 %v4957
        %5291 = vmatpush.bf16.msra.mxu0 %v4955
        %5292 = vmatpush.bf16.msra.mxu0 %v4953
        %5293 = vmatpush.bf16.msra.mxu0 %v4951
        %5294 = vmatpush.bf16.msra.mxu0 %v4949
        %5295 = vmatpush.bf16.msra.mxu0 %v4947
        %5296 = vmatmul.bf16.gmra.mxu0 %v4336
        %v5297 = vpop.f32.mrf.mxu0
        %v5298 = vadd.f32 %v5285, %v5297
        %v5299 = vpop.f32.mrf.mxu0
        %5300 = vdwg.mxu0
        %5301 = vmatpush.bf16.msra.mxu0 %v4977
        %5302 = vmatpush.bf16.msra.mxu0 %v4975
        %5303 = vmatpush.bf16.msra.mxu0 %v4973
        %5304 = vmatpush.bf16.msra.mxu0 %v4971
        %5305 = vmatpush.bf16.msra.mxu0 %v4969
        %5306 = vmatpush.bf16.msra.mxu0 %v4967
        %5307 = vmatpush.bf16.msra.mxu0 %v4965
        %5308 = vmatpush.bf16.msra.mxu0 %v4963
        %5309 = vmatmul.bf16.gmra.mxu0 %v4337
        %v5310 = vpop.f32.mrf.mxu0
        %v5311 = vadd.f32 %v5298, %v5310
        %v5312 = vpop.f32.mrf.mxu0
        %5313 = vdwg.mxu0
        %v5314 = vadd.f32 %v4328, %v5207
        %v5315 = vadd.f32 %v4329, %v5311
        %5316 = vst [vmem:[%s375] sm:$0xff] %v5314
        %5317 = vst [vmem:[%s375 + $0x8] sm:$0xff] %v5315
        %p5318 = scmp.eq.s32.totalorder %s28, 3
        // Predicated region
        $region61: #{netd2_forward.1} parent=39 // pred_check
          %p5319 = pneg %p5318
        $region62: #{netd2_forward.1} parent=39 // pred_check_branch
          %5321 = sbr.rel (%p5319) target = $region64
        $region63: #{netd2_forward.1} parent=39 // pred_region
          %v5322 = vld [vmem:[%s375] sm:$0xff]
          %v5323 = vld [vmem:[%s375 + $0x8] sm:$0xff]
          %v5324 = vld [vmem:[#allocation7] sm:$0x3]
          %v5326 = vperm.slane %v5324, 0
          %v5327 = vperm.slane %v5324, 1
          %v5330 = vadd.f32 %v5322, %v5326
          %v5331 = vadd.f32 %v5323, %v5327
          %5332 = vst [vmem:[%s375] sm:$0xff] %v5330
          %5333 = vst [vmem:[%s375 + $0x8] sm:$0xff] %v5331
        $region64: #{netd2_forward.1} parent=39 // pred_fallthru
          _
        %p5334 = scmp.lt.s32.totalorder %s27, 0
        %s5335 = scalar_select %p5334, %s27, 0
        %s5336 = smul.addr %s5335, 2
        %s5337 = smul.addr %s5336, 8
        %s5338 = scalar_lea.vmem %s5, %s5337
        // Predicated region
        $region65: #{netd2_forward.1} parent=39 // pred_check
          %p5339 = pneg %p178
        $region66: #{netd2_forward.1} parent=39 // pred_check_branch
          %5341 = sbr.rel (%p5339) target = $region68
        $region67: #{netd2_forward.1} parent=39 // pred_region
          _
        $region68: #{netd2_forward.1} parent=39 // pred_fallthru
          _
        // Predicated region
        $region69: #{netd2_forward.1} parent=39 // pred_check
          %p5342 = pneg %p178
        $region70: #{netd2_forward.1} parent=39 // pred_check_branch
          %5344 = sbr.rel (%p5342) target = $region72
        $region71: #{netd2_forward.1} parent=39 // pred_region
          %p5345 = scmp.lt.s32.totalorder %s27, 0
          %s5346 = scalar_select %p5345, %s27, 0
          %s5347 = smul.addr %s5346, 2
          %s5348 = smul.addr %s5347, 8
          %s5349 = scalar_lea.vmem %s5, %s5348
        $region72: #{netd2_forward.1} parent=39 // pred_fallthru
          _
      $region40: #{netd2_forward.1} parent=5 // pred_fallthru
        _
      %p5350 = scmp.le.s32.totalorder 2, %s18
      // Predicated region
      $region73: #{netd2_forward.1} parent=5 // pred_check
        %p5351 = pneg %p5350
      $region74: #{netd2_forward.1} parent=5 // pred_check_branch
        %5353 = sbr.rel (%p5351) target = $region76
      $region75: #{netd2_forward.1} parent=5 // pred_region
        %s5354 = ssub.s32 %s18, 2
      $region76: #{netd2_forward.1} parent=5 // pred_fallthru
        _
    $region6: #{netd2_forward.1} parent=1 // loop_footer
      %s22 = sadd.s32 1, %s18
    $region7: #{netd2_forward.1} parent=1 // loop_footer_branch
      %17 = sbr.rel target = $region3
    $region8: #{netd2_forward.1} parent=1 // loop_exit
      _
    %5355 = vsyncpa [#allocation3], 1
    %s5356 = scalar_lea.sflag [#allocation3], 1
    %5357 = vsyncpa %s5356, 1
    %5358 = vsyncpa [#allocation5], 1
    %s5359 = scalar_lea.sflag [#allocation5], 1
    %5360 = vsyncpa %s5359, 1
    %5361 = vsyncpa [#allocation8], 1

</llo_original>
